<compile_context>
chip_gen: v5e
topology: v5e:2x2
jax: 0.10.0
libtpu: 0.0.40
codegen_flags: <defaults>
</compile_context>

<pallas_src>
import jax
import jax.numpy as jnp
from jax.experimental import pallas as pl
from jax.experimental.pallas import tpu as pltpu

_INV_SQRT2 = 0.7071067811865476


def ffn_kernel(x_ref, w1_ref, b1_ref, w2_ref, b2_ref, o_ref, acc_ref):
    """One (row-tile i, d_ff-chunk k) step of gelu(x @ W1 + b1) @ W2 + b2."""
    k = pl.program_id(1)
    tk = w1_ref.shape[1]
    d_ff = b1_ref.shape[1]

    @pl.when(k == 0)
    def _init():
        # Fold b2 into the accumulator init instead of adding it in the
        # epilogue: saves one full (tm, d_model) f32 VALU pass per row tile.
        acc_ref[...] = jnp.broadcast_to(
            b2_ref[...].astype(jnp.float32), acc_ref.shape)

    # First matmul for this d_ff chunk (f32 accumulation on the MXU).
    h = jnp.dot(x_ref[...], w1_ref[...], preferred_element_type=jnp.float32)

    # b1 is resident (constant index map); slice the current chunk in-kernel
    # instead of issuing a tiny per-step DMA.
    if tk == d_ff:
        b1c = b1_ref[...]
    else:
        start = pl.multiple_of(k * tk, 128)  # tk is 128-aligned whenever nk > 1
        b1c = b1_ref[:, pl.ds(start, tk)]
    h = h + b1c.astype(jnp.float32)

    # Exact erf GELU (torch.nn.functional.gelu default), in f32.
    h = 0.5 * h * (1.0 + jax.lax.erf(h * _INV_SQRT2))

    # Second matmul: accumulate this chunk's contribution into the f32 scratch.
    acc_ref[...] += jnp.dot(h.astype(w2_ref.dtype), w2_ref[...],
                            preferred_element_type=jnp.float32)

    @pl.when(k == pl.num_programs(1) - 1)
    def _finalize():
        o_ref[...] = acc_ref[...].astype(o_ref.dtype)


def _round_up(a, b):
    return (a + b - 1) // b * b


def _vmem_capacity_bytes():
    try:
        return int(pltpu.get_tpu_info().vmem_capacity_bytes)
    except Exception:
        return 64 << 20  # conservative fallback (v7x per-TC)


def _chip_defaults():
    """(tm_target, tile_align, vmem_capacity) per TPU generation.

    Arithmetic intensity vs the weight stream is ~2*tm/itemsize flops/byte, so
    the row tile must reach the chip's compute:HBM ratio:
      v5e ~240 -> tm~384 (128-granular MXU), v6e ~650 -> tm~1024,
      v7x ~310 -> tm~512 (but only 64 MiB VMEM/TC).
    """
    kind = ""
    try:
        kind = jax.devices()[0].device_kind.lower()
    except Exception:
        pass
    cap = _vmem_capacity_bytes()
    if "v5" in kind:
        return 384, 128, cap
    if "7" in kind:
        return 512, 256, cap
    # v6e (and unknown): worst compute:bandwidth ratio -> biggest row tile,
    # provided VMEM allows it.
    return (1024 if cap >= (96 << 20) else 512), 256, cap


def _block_vmem_bytes(tm, tk, d_model, d_ff, x_it, w_it):
    """Double-buffered pipelined blocks + single-buffered f32 accumulator."""
    return (2 * tm * d_model * x_it        # x row tiles
            + 2 * tm * d_model * x_it      # out row tiles
            + 2 * d_model * tk * w_it      # W1 chunk
            + 2 * tk * d_model * w_it      # W2 chunk
            + 2 * 8 * d_ff * w_it          # b1 (resident, sublane-padded)
            + 2 * 8 * d_model * w_it       # b2 (resident, sublane-padded)
            + tm * d_model * 4)            # f32 accumulator


def _select_tiles(N, d_model, d_ff, x_it, w_it, tm_target, align, budget):
    # Row-tile candidates: chip target first (never larger than the row count),
    # then halvings down to 8 (always a multiple of 8 sublanes).
    tm0 = max(8, min(_round_up(tm_target, align), _round_up(N, 8)))
    tms = [tm0]
    while tms[-1] > 8:
        tms.append(max(8, _round_up(tms[-1] // 2, 8)))

    # 1) Preferred: weights fully VMEM-resident (tk = d_ff, nk = 1). W1/W2 are
    #    then DMA'd from HBM exactly once, independent of the number of row tiles.
    for tm in tms:
        if _block_vmem_bytes(tm, d_ff, d_model, d_ff, x_it, w_it) <= budget:
            return tm, d_ff

    # 2) Fallback: stream d_ff in 128-aligned chunks (weights re-read per row tile).
    if d_ff % 128 == 0:
        for tm in tms:
            for tk in range(d_ff - 128, 0, -128):
                if d_ff % tk == 0 and \
                        _block_vmem_bytes(tm, tk, d_model, d_ff, x_it, w_it) <= budget:
                    return tm, tk

    # 3) Last resort: smallest tiles.
    return tms[-1], (128 if d_ff % 128 == 0 else d_ff)


def positionwise_feed_forward(x, w1, b1, w2, b2, *, tm=None, tk=None):
    """x: (B, S, d_model) -> (B, S, d_model). Weights [in, out], biases 1-D."""
    B, S, d_model = x.shape
    d_ff = w1.shape[1]
    assert w1.shape == (d_model, d_ff) and w2.shape == (d_ff, d_model)
    assert b1.shape == (d_ff,) and b2.shape == (d_model,)

    b1 = b1.reshape(1, d_ff)
    b2 = b2.reshape(1, d_model)

    N = B * S
    xf = x.reshape(N, d_model)

    x_it = jnp.dtype(x.dtype).itemsize
    w_it = jnp.dtype(w1.dtype).itemsize

    tm_target, align, vmem_cap = _chip_defaults()
    budget = int(0.72 * vmem_cap)  # leave headroom for Mosaic internal scratch

    if tm is None or tk is None:
        tm_auto, tk_auto = _select_tiles(N, d_model, d_ff, x_it, w_it,
                                         tm_target, align, budget)
        tm = tm if tm is not None else tm_auto
        tk = tk if tk is not None else tk_auto

    # Sanitize user overrides.
    tm = max(8, _round_up(min(tm, _round_up(N, 8)), 8))
    if d_ff % tk != 0 or (tk != d_ff and tk % 128 != 0):
        tk = d_ff
    nk = d_ff // tk

    Np = _round_up(N, tm)
    if Np != N:
        xf = jnp.pad(xf, ((0, Np - N), (0, 0)))
    grid = (Np // tm, nk)

    # Generation-aware VMEM limit derived from the actual block budget.
    blk = _block_vmem_bytes(tm, tk, d_model, d_ff, x_it, w_it)
    vmem_limit = int(min(max(blk + (8 << 20), 32 << 20), int(0.75 * vmem_cap)))

    # Weights are re-streamed once per row tile only when nk > 1.
    weight_passes = 1 if nk == 1 else (Np // tm)
    cost = pl.CostEstimate(
        flops=int(4 * Np * d_model * d_ff),
        transcendentals=int(Np * d_ff),  # approx: erf is not a single EUP op
        bytes_accessed=int(2 * Np * d_model * x_it
                           + weight_passes * 2 * d_model * d_ff * w_it
                           + (d_ff + d_model) * w_it),
    )

    out = pl.pallas_call(
        ffn_kernel,
        out_shape=jax.ShapeDtypeStruct((Np, d_model), x.dtype),
        grid_spec=pltpu.PrefetchScalarGridSpec(
            num_scalar_prefetch=0,
            grid=grid,
            in_specs=[
                pl.BlockSpec((tm, d_model), lambda i, k: (i, 0)),   # x row tile
                pl.BlockSpec((d_model, tk), lambda i, k: (0, k)),   # W1 chunk
                pl.BlockSpec((1, d_ff),     lambda i, k: (0, 0)),   # b1 (resident)
                pl.BlockSpec((tk, d_model), lambda i, k: (k, 0)),   # W2 chunk
                pl.BlockSpec((1, d_model),  lambda i, k: (0, 0)),   # b2 (resident)
            ],
            out_specs=pl.BlockSpec((tm, d_model), lambda i, k: (i, 0)),
            scratch_shapes=[pltpu.VMEM((tm, d_model), jnp.float32)],
        ),
        compiler_params=pltpu.CompilerParams(
            dimension_semantics=("parallel", "arbitrary"),
            vmem_limit_bytes=vmem_limit,
        ),
        cost_estimate=cost,
    )(xf, w1, b1, w2, b2)

    return out[:N].reshape(B, S, d_model)


def _reference(x, w1, b1, w2, b2):
    hp = jax.lax.Precision.HIGHEST
    h = jnp.dot(x, w1, precision=hp) + b1
    h = 0.5 * h * (1.0 + jax.lax.erf(h * _INV_SQRT2))
    return jnp.dot(h, w2, precision=hp) + b2


if __name__ == "__main__":
    # Small but non-trivial shapes: N = 2*200 = 400 rows, d_model=128, d_ff=256.
    B, S, d_model, d_ff = 2, 200, 128, 256

    key = jax.random.PRNGKey(0)
    kx, k1, kb1, k2, kb2 = jax.random.split(key, 5)

    lim1 = 1.0 / (d_model ** 0.5)
    lim2 = 1.0 / (d_ff ** 0.5)
    x = jax.random.normal(kx, (B, S, d_model), dtype=jnp.float32)
    w1 = jax.random.uniform(k1, (d_model, d_ff), jnp.float32, -lim1, lim1)
    b1 = jax.random.uniform(kb1, (d_ff,), jnp.float32, -lim1, lim1)
    w2 = jax.random.uniform(k2, (d_ff, d_model), jnp.float32, -lim2, lim2)
    b2 = jax.random.uniform(kb2, (d_model,), jnp.float32, -lim2, lim2)

    ref = _reference(x, w1, b1, w2, b2)

    # 1) Auto (chip-aware) tiling: weights resident, tk = d_ff, single row tile.
    out = jax.block_until_ready(positionwise_feed_forward(x, w1, b1, w2, b2))
    assert out.shape == (B, S, d_model)
    err = float(jnp.max(jnp.abs(out - ref)))
    # Tolerance covers MXU reduced-precision f32 matmul passes vs HIGHEST ref.
    assert jnp.allclose(out, ref, atol=2e-2, rtol=2e-2), f"auto max abs err {err}"

    # 2) Forced small tiles: exercises row padding (400 -> 512) and the nk=2
    #    d_ff-chunk accumulation / in-kernel b1 slicing path.
    out2 = jax.block_until_ready(
        positionwise_feed_forward(x, w1, b1, w2, b2, tm=128, tk=128))
    err2 = float(jnp.max(jnp.abs(out2 - ref)))
    assert jnp.allclose(out2, ref, atol=2e-2, rtol=2e-2), f"tiled max abs err {err2}"

    print("KERNEL_OK")
</pallas_src>

<mosaic_0001>
module attributes {stable_mosaic.version = 11 : i64} {
  func.func @ffn_kernel(%arg0: i32, %arg1: i32, %arg2: memref<400x128xf32, #tpu.memory_space<vmem>>, %arg3: memref<128x256xf32, #tpu.memory_space<vmem>>, %arg4: memref<1x256xf32, #tpu.memory_space<vmem>>, %arg5: memref<256x128xf32, #tpu.memory_space<vmem>>, %arg6: memref<1x128xf32, #tpu.memory_space<vmem>>, %arg7: memref<400x128xf32, #tpu.memory_space<vmem>>, %arg8: memref<400x128xf32, #tpu.memory_space<vmem>>) attributes {dimension_semantics = [#tpu.dimension_semantics<parallel>, #tpu.dimension_semantics<arbitrary>], iteration_bounds = array<i64: 1, 1>, scalar_prefetch = 0 : i64, scratch_operands = 1 : i64, tpu.core_type = #tpu.core_type<tc>, window_params = [{transform_indices = @transform_0, window_bounds = array<i64: 400, 128>}, {transform_indices = @transform_1, window_bounds = array<i64: 128, 256>}, {pipeline_mode = #tpu.pipeline_mode<synchronous>, transform_indices = @transform_2, window_bounds = array<i64: 1, 256>}, {transform_indices = @transform_3, window_bounds = array<i64: 256, 128>}, {pipeline_mode = #tpu.pipeline_mode<synchronous>, transform_indices = @transform_4, window_bounds = array<i64: 1, 128>}, {transform_indices = @transform_5, window_bounds = array<i64: 400, 128>}]} {
    %c0_i32 = arith.constant 0 : i32
    %0 = arith.cmpi eq, %arg1, %c0_i32 : i32
    %1 = arith.extui %0 : i1 to i32
    %c0_i32_0 = arith.constant 0 : i32
    %2 = arith.cmpi ne, %1, %c0_i32_0 : i32
    scf.if %2 {
      %c0_18 = arith.constant 0 : index
      %c0_19 = arith.constant 0 : index
      %25 = vector.load %arg6[%c0_18, %c0_19] : memref<1x128xf32, #tpu.memory_space<vmem>>, vector<1x128xf32>
      %26 = vector.shape_cast %25 : vector<1x128xf32> to vector<1x128xf32>
      %27 = vector.broadcast %26 : vector<1x128xf32> to vector<400x128xf32>
      %c0_20 = arith.constant 0 : index
      %c0_21 = arith.constant 0 : index
      %28 = vector.load %arg8[%c0_20, %c0_21] : memref<400x128xf32, #tpu.memory_space<vmem>>, vector<400x128xf32>
      tpu.vector_store %arg8[%c0_20, %c0_21], %27 {strides = array<i32>} : memref<400x128xf32, #tpu.memory_space<vmem>>, vector<400x128xf32>,
    } else {
    }
    %c0 = arith.constant 0 : index
    %c0_1 = arith.constant 0 : index
    %3 = vector.load %arg2[%c0, %c0_1] : memref<400x128xf32, #tpu.memory_space<vmem>>, vector<400x128xf32>
    %c0_2 = arith.constant 0 : index
    %c0_3 = arith.constant 0 : index
    %4 = vector.load %arg3[%c0_2, %c0_3] : memref<128x256xf32, #tpu.memory_space<vmem>>, vector<128x256xf32>
    %cst = arith.constant dense<0.000000e+00> : vector<400x256xf32>
    %5 = tpu.matmul %3, %4, %cst {dimension_numbers = #tpu.dot_dimension_numbers<[1], [0], [0], [1], [0, 0, 1, 1], [], []>} : vector<400x128xf32>, vector<128x256xf32>, vector<400x256xf32> -> vector<400x256xf32>
    %c0_4 = arith.constant 0 : index
    %c0_5 = arith.constant 0 : index
    %6 = vector.load %arg4[%c0_4, %c0_5] : memref<1x256xf32, #tpu.memory_space<vmem>>, vector<1x256xf32>
    %7 = vector.broadcast %6 : vector<1x256xf32> to vector<400x256xf32>
    %8 = arith.addf %5, %7 : vector<400x256xf32>
    %cst_6 = arith.constant 5.000000e-01 : f32
    %9 = vector.broadcast %cst_6 : f32 to vector<400x256xf32>
    %10 = arith.mulf %9, %8 : vector<400x256xf32>
    %cst_7 = arith.constant 0.707106769 : f32
    %11 = vector.broadcast %cst_7 : f32 to vector<400x256xf32>
    %12 = arith.mulf %8, %11 : vector<400x256xf32>
    %13 = math.erf %12 : vector<400x256xf32>
    %cst_8 = arith.constant 1.000000e+00 : f32
    %14 = vector.broadcast %cst_8 : f32 to vector<400x256xf32>
    %15 = arith.addf %14, %13 : vector<400x256xf32>
    %16 = arith.mulf %10, %15 : vector<400x256xf32>
    %c0_9 = arith.constant 0 : index
    %c0_10 = arith.constant 0 : index
    %17 = vector.load %arg8[%c0_9, %c0_10] : memref<400x128xf32, #tpu.memory_space<vmem>>, vector<400x128xf32>
    %c0_11 = arith.constant 0 : index
    %c0_12 = arith.constant 0 : index
    %18 = vector.load %arg5[%c0_11, %c0_12] : memref<256x128xf32, #tpu.memory_space<vmem>>, vector<256x128xf32>
    %cst_13 = arith.constant dense<0.000000e+00> : vector<400x128xf32>
    %19 = tpu.matmul %16, %18, %cst_13 {dimension_numbers = #tpu.dot_dimension_numbers<[1], [0], [0], [1], [0, 0, 1, 1], [], []>} : vector<400x256xf32>, vector<256x128xf32>, vector<400x128xf32> -> vector<400x128xf32>
    %20 = arith.addf %17, %19 : vector<400x128xf32>
    %c0_14 = arith.constant 0 : index
    %c0_15 = arith.constant 0 : index
    %21 = vector.load %arg8[%c0_14, %c0_15] : memref<400x128xf32, #tpu.memory_space<vmem>>, vector<400x128xf32>
    tpu.vector_store %arg8[%c0_14, %c0_15], %20 {strides = array<i32>} : memref<400x128xf32, #tpu.memory_space<vmem>>, vector<400x128xf32>,
    %c0_i32_16 = arith.constant 0 : i32
    %22 = arith.cmpi eq, %arg1, %c0_i32_16 : i32
    %23 = arith.extui %22 : i1 to i32
    %c0_i32_17 = arith.constant 0 : i32
    %24 = arith.cmpi ne, %23, %c0_i32_17 : i32
    scf.if %24 {
      %c0_18 = arith.constant 0 : index
      %c0_19 = arith.constant 0 : index
      %25 = vector.load %arg8[%c0_18, %c0_19] : memref<400x128xf32, #tpu.memory_space<vmem>>, vector<400x128xf32>
      %c0_20 = arith.constant 0 : index
      %c0_21 = arith.constant 0 : index
      %26 = vector.load %arg7[%c0_20, %c0_21] : memref<400x128xf32, #tpu.memory_space<vmem>>, vector<400x128xf32>
      tpu.vector_store %arg7[%c0_20, %c0_21], %25 {strides = array<i32>} : memref<400x128xf32, #tpu.memory_space<vmem>>, vector<400x128xf32>,
    } else {
    }
    return
  }
  func.func @transform_0(%arg0: i32, %arg1: i32) -> (i32, i32) {
    %c0_i32 = arith.constant 0 : i32
    %c0_i32_0 = arith.constant 0 : i32
    return %arg0, %c0_i32 : i32, i32
  }
  func.func @transform_1(%arg0: i32, %arg1: i32) -> (i32, i32) {
    %c0_i32 = arith.constant 0 : i32
    %c0_i32_0 = arith.constant 0 : i32
    return %c0_i32, %arg1 : i32, i32
  }
  func.func @transform_2(%arg0: i32, %arg1: i32) -> (i32, i32) {
    %c0_i32 = arith.constant 0 : i32
    %c0_i32_0 = arith.constant 0 : i32
    %c0_i32_1 = arith.constant 0 : i32
    return %c0_i32, %c0_i32_0 : i32, i32
  }
  func.func @transform_3(%arg0: i32, %arg1: i32) -> (i32, i32) {
    %c0_i32 = arith.constant 0 : i32
    %c0_i32_0 = arith.constant 0 : i32
    return %arg1, %c0_i32 : i32, i32
  }
  func.func @transform_4(%arg0: i32, %arg1: i32) -> (i32, i32) {
    %c0_i32 = arith.constant 0 : i32
    %c0_i32_0 = arith.constant 0 : i32
    %c0_i32_1 = arith.constant 0 : i32
    return %c0_i32, %c0_i32_0 : i32, i32
  }
  func.func @transform_5(%arg0: i32, %arg1: i32) -> (i32, i32) {
    %c0_i32 = arith.constant 0 : i32
    %c0_i32_0 = arith.constant 0 : i32
    return %arg0, %c0_i32 : i32, i32
  }
}

</mosaic_0001>

<llo_original>
// kernel: tpu_custom_call.1
$region0: #{tpu_custom_call.1}
  #allocation0 [shape = 'u32[]', space=smem, size = 0x4, offset = 0x4, fixed_abs, tag = 'smem constant byte address 0x4 - core index']
  #allocation1 [shape = 'u32[72,128]{1,0:T(1,128)}', space=vmem, size = 0x9000, scoped, tag = 'internal scratch']
  #allocation2 [shape = 'f32[400,128]{1,0:T(8,128)}', space=vmem, size = 0x32000, scoped, tag = 'scratch operand']
  %s0 = inlined_call_operand.hbm [shape: f32[400,128], index: 0, kind: input, shape index: {}]
  %s1 = inlined_call_operand.hbm [shape: f32[128,256], index: 1, kind: input, shape index: {}]
  %s2 = inlined_call_operand.hbm [shape: f32[1,256], index: 2, kind: input, shape index: {}]
  %s3 = inlined_call_operand.hbm [shape: f32[256,128], index: 3, kind: input, shape index: {}]
  %s4 = inlined_call_operand.vmem [shape: f32[1,128], index: 4, kind: input, shape index: {}]
  %s5 = inlined_call_operand.hbm [shape: f32[400,128], index: 5, kind: output, shape index: {}]
  %s6 = sld [smem:[#allocation0]]
  $region54: #{tpu_custom_call.1} parent=0
    _
  %s8 = ssub.s32 1, %s6
  %s9 = scalar_select 0, %s8, %s6
  $region1: #{tpu_custom_call.1} parent=0
    #allocation3 [shape = 'u8[204800]{0}', space=vmem, size = 0x32000, scoped, tag = 'input window, operand 0, single buffered']
    #allocation4 [shape = 's32[1]{0}', space=sflag, size = 0x4, scoped, tag = 'scoped memory for tpu_custom_call.1']
    #allocation5 [shape = 's32[1]{0}', space=sflag, size = 0x4, scoped, tag = 'scoped memory for tpu_custom_call.1']
    #allocation6 [shape = 'u8[131072]{0}', space=vmem, size = 0x20000, scoped, tag = 'input window, operand 1, single buffered']
    #allocation7 [shape = 's32[1]{0}', space=sflag, size = 0x4, scoped, tag = 'scoped memory for tpu_custom_call.1']
    #allocation8 [shape = 'u8[1024]{0}', space=vmem, size = 0x400, scoped, tag = 'input window, operand 2, single buffered']
    #allocation9 [shape = 'u8[131072]{0}', space=vmem, size = 0x20000, scoped, tag = 'input window, operand 3, single buffered']
    #allocation10 [shape = 's32[1]{0}', space=sflag, size = 0x4, scoped, tag = 'scoped memory for tpu_custom_call.1']
    #allocation11 [shape = 'u8[204800]{0}', space=vmem, size = 0x32000, scoped, tag = 'output window, operand 0, single buffered']
    %10 = vsyncpa [#allocation4], 0
    %11 = vsyncpa [#allocation7], 0
    %12 = vsyncpa [#allocation10], 0
    %13 = vsyncpa [#allocation5], 0
    // Predicated region
    $region2: #{tpu_custom_call.1} parent=1 // pred_check
      _
    $region3: #{tpu_custom_call.1} parent=1 // pred_check_branch
      %15 = sbr.rel (0) target = $region5
    $region4: #{tpu_custom_call.1} parent=1 // pred_region
      %17 = vsyncadd [#allocation4], 0
      %s18 = sshll.u32 %s0, 4
      %s19 = int_to_ptr.hbm [resolvable:$true] %s18
      %s20 = sshll.u32 [#allocation3], 4
      %s21 = int_to_ptr.vmem [resolvable:$true] %s20
      %26 = dma.hbm_to_vmem [thread:$0]  %s19, 6400, %s21, [#allocation4], 128, 128, 8
    $region5: #{tpu_custom_call.1} parent=1 // pred_fallthru
      _
    // Predicated region
    $region6: #{tpu_custom_call.1} parent=1 // pred_check
      _
    $region7: #{tpu_custom_call.1} parent=1 // pred_check_branch
      %28 = sbr.rel (0) target = $region9
    $region8: #{tpu_custom_call.1} parent=1 // pred_region
      %30 = vsyncadd [#allocation7], 0
      %s31 = sshll.u32 %s1, 4
      %s32 = int_to_ptr.hbm [resolvable:$true] %s31
      %s33 = sshll.u32 [#allocation6], 4
      %s34 = int_to_ptr.vmem [resolvable:$true] %s33
      %39 = dma.hbm_to_vmem [thread:$0]  %s32, 4096, %s34, [#allocation7], 256, 256, 16
    $region9: #{tpu_custom_call.1} parent=1 // pred_fallthru
      _
    // Predicated region
    $region10: #{tpu_custom_call.1} parent=1 // pred_check
      _
    $region11: #{tpu_custom_call.1} parent=1 // pred_check_branch
      %41 = sbr.rel (0) target = $region13
    $region12: #{tpu_custom_call.1} parent=1 // pred_region
      %43 = vsyncadd [#allocation7], 0
      %s45 = sshll.u32 %s2, 4
      %s46 = int_to_ptr.hbm [resolvable:$true] %s45
      %s47 = sshll.u32 [#allocation8], 4
      %s48 = int_to_ptr.vmem [resolvable:$true] %s47
      %50 = dma.hbm_to_vmem [thread:$0]  %s46, 32, %s48, [#allocation7]
    $region13: #{tpu_custom_call.1} parent=1 // pred_fallthru
      _
    // Predicated region
    $region14: #{tpu_custom_call.1} parent=1 // pred_check
      _
    $region15: #{tpu_custom_call.1} parent=1 // pred_check_branch
      %52 = sbr.rel (0) target = $region17
    $region16: #{tpu_custom_call.1} parent=1 // pred_region
      %54 = vsyncadd [#allocation10], 0
      %s55 = sshll.u32 %s3, 4
      %s56 = int_to_ptr.hbm [resolvable:$true] %s55
      %s57 = sshll.u32 [#allocation9], 4
      %s58 = int_to_ptr.vmem [resolvable:$true] %s57
      %63 = dma.hbm_to_vmem [thread:$0]  %s56, 4096, %s58, [#allocation10], 128, 128, 8
    $region17: #{tpu_custom_call.1} parent=1 // pred_fallthru
      _
    // Predicated region
    $region18: #{tpu_custom_call.1} parent=1 // pred_check
      _
    $region19: #{tpu_custom_call.1} parent=1 // pred_check_branch
      %65 = sbr.rel (0) target = $region21
    $region20: #{tpu_custom_call.1} parent=1 // pred_region
      _
    $region21: #{tpu_custom_call.1} parent=1 // pred_fallthru
      _
    // Predicated region
    $region22: #{tpu_custom_call.1} parent=1 // pred_check
      _
    $region23: #{tpu_custom_call.1} parent=1 // pred_check_branch
      %67 = sbr.rel (0) target = $region25
    $region24: #{tpu_custom_call.1} parent=1 // pred_region
      %69 = dma.done [#allocation4], 6400
    $region25: #{tpu_custom_call.1} parent=1 // pred_fallthru
      _
    // Predicated region
    $region26: #{tpu_custom_call.1} parent=1 // pred_check
      _
    $region27: #{tpu_custom_call.1} parent=1 // pred_check_branch
      %71 = sbr.rel (0) target = $region29
    $region28: #{tpu_custom_call.1} parent=1 // pred_region
      %73 = dma.done [#allocation7], 4096
    $region29: #{tpu_custom_call.1} parent=1 // pred_fallthru
      _
    // Predicated region
    $region30: #{tpu_custom_call.1} parent=1 // pred_check
      _
    $region31: #{tpu_custom_call.1} parent=1 // pred_check_branch
      %75 = sbr.rel (0) target = $region33
    $region32: #{tpu_custom_call.1} parent=1 // pred_region
      %77 = dma.done [#allocation7], 32
    $region33: #{tpu_custom_call.1} parent=1 // pred_fallthru
      _
    // Predicated region
    $region34: #{tpu_custom_call.1} parent=1 // pred_check
      _
    $region35: #{tpu_custom_call.1} parent=1 // pred_check_branch
      %79 = sbr.rel (0) target = $region37
    $region36: #{tpu_custom_call.1} parent=1 // pred_region
      %81 = dma.done [#allocation10], 4096
    $region37: #{tpu_custom_call.1} parent=1 // pred_fallthru
      _
    %p82 = scmp.eq.s32.totalorder 0, 0
    // Predicated region
    $region38: #{tpu_custom_call.1} parent=1 // pred_check
      %p83 = pneg %p82
    $region39: #{tpu_custom_call.1} parent=1 // pred_check_branch
      %85 = sbr.rel (%p83) target = $region41
    $region40: #{tpu_custom_call.1} parent=1 // pred_region
      %v86 = vld [vmem:[%s4] sm:$0x1]
      %v88 = vperm.slane %v86, 0
      %90 = vst [vmem:[#allocation2] sm:$0xff] %v88
      %91 = vst [vmem:[#allocation2 + $0x8] sm:$0xff] %v88
      %92 = vst [vmem:[#allocation2 + $0x10] sm:$0xff] %v88
      %93 = vst [vmem:[#allocation2 + $0x18] sm:$0xff] %v88
      %94 = vst [vmem:[#allocation2 + $0x20] sm:$0xff] %v88
      %95 = vst [vmem:[#allocation2 + $0x28] sm:$0xff] %v88
      %96 = vst [vmem:[#allocation2 + $0x30] sm:$0xff] %v88
      %97 = vst [vmem:[#allocation2 + $0x38] sm:$0xff] %v88
      %98 = vst [vmem:[#allocation2 + $0x40] sm:$0xff] %v88
      %99 = vst [vmem:[#allocation2 + $0x48] sm:$0xff] %v88
      %100 = vst [vmem:[#allocation2 + $0x50] sm:$0xff] %v88
      %101 = vst [vmem:[#allocation2 + $0x58] sm:$0xff] %v88
      %102 = vst [vmem:[#allocation2 + $0x60] sm:$0xff] %v88
      %103 = vst [vmem:[#allocation2 + $0x68] sm:$0xff] %v88
      %104 = vst [vmem:[#allocation2 + $0x70] sm:$0xff] %v88
      %105 = vst [vmem:[#allocation2 + $0x78] sm:$0xff] %v88
      %106 = vst [vmem:[#allocation2 + $0x80] sm:$0xff] %v88
      %107 = vst [vmem:[#allocation2 + $0x88] sm:$0xff] %v88
      %108 = vst [vmem:[#allocation2 + $0x90] sm:$0xff] %v88
      %109 = vst [vmem:[#allocation2 + $0x98] sm:$0xff] %v88
      %110 = vst [vmem:[#allocation2 + $0xa0] sm:$0xff] %v88
      %111 = vst [vmem:[#allocation2 + $0xa8] sm:$0xff] %v88
      %112 = vst [vmem:[#allocation2 + $0xb0] sm:$0xff] %v88
      %113 = vst [vmem:[#allocation2 + $0xb8] sm:$0xff] %v88
      %114 = vst [vmem:[#allocation2 + $0xc0] sm:$0xff] %v88
      %115 = vst [vmem:[#allocation2 + $0xc8] sm:$0xff] %v88
      %116 = vst [vmem:[#allocation2 + $0xd0] sm:$0xff] %v88
      %117 = vst [vmem:[#allocation2 + $0xd8] sm:$0xff] %v88
      %118 = vst [vmem:[#allocation2 + $0xe0] sm:$0xff] %v88
      %119 = vst [vmem:[#allocation2 + $0xe8] sm:$0xff] %v88
      %120 = vst [vmem:[#allocation2 + $0xf0] sm:$0xff] %v88
      %121 = vst [vmem:[#allocation2 + $0xf8] sm:$0xff] %v88
      %122 = vst [vmem:[#allocation2 + $0x100] sm:$0xff] %v88
      %123 = vst [vmem:[#allocation2 + $0x108] sm:$0xff] %v88
      %124 = vst [vmem:[#allocation2 + $0x110] sm:$0xff] %v88
      %125 = vst [vmem:[#allocation2 + $0x118] sm:$0xff] %v88
      %126 = vst [vmem:[#allocation2 + $0x120] sm:$0xff] %v88
      %127 = vst [vmem:[#allocation2 + $0x128] sm:$0xff] %v88
      %128 = vst [vmem:[#allocation2 + $0x130] sm:$0xff] %v88
      %129 = vst [vmem:[#allocation2 + $0x138] sm:$0xff] %v88
      %130 = vst [vmem:[#allocation2 + $0x140] sm:$0xff] %v88
      %131 = vst [vmem:[#allocation2 + $0x148] sm:$0xff] %v88
      %132 = vst [vmem:[#allocation2 + $0x150] sm:$0xff] %v88
      %133 = vst [vmem:[#allocation2 + $0x158] sm:$0xff] %v88
      %134 = vst [vmem:[#allocation2 + $0x160] sm:$0xff] %v88
      %135 = vst [vmem:[#allocation2 + $0x168] sm:$0xff] %v88
      %136 = vst [vmem:[#allocation2 + $0x170] sm:$0xff] %v88
      %137 = vst [vmem:[#allocation2 + $0x178] sm:$0xff] %v88
      %138 = vst [vmem:[#allocation2 + $0x180] sm:$0xff] %v88
      %139 = vst [vmem:[#allocation2 + $0x188] sm:$0xff] %v88
    $region41: #{tpu_custom_call.1} parent=1 // pred_fallthru
      _
    %v140 = vld [vmem:[#allocation3] sm:$0xff]
    %v141 = vld [vmem:[#allocation3 + $0x8] sm:$0xff]
    %v142 = vld [vmem:[#allocation3 + $0x10] sm:$0xff]
    %v143 = vld [vmem:[#allocation3 + $0x18] sm:$0xff]
    %v144 = vld [vmem:[#allocation3 + $0x20] sm:$0xff]
    %v145 = vld [vmem:[#allocation3 + $0x28] sm:$0xff]
    %v146 = vld [vmem:[#allocation3 + $0x30] sm:$0xff]
    %v147 = vld [vmem:[#allocation3 + $0x38] sm:$0xff]
    %v148 = vld [vmem:[#allocation3 + $0x40] sm:$0xff]
    %v149 = vld [vmem:[#allocation3 + $0x48] sm:$0xff]
    %v150 = vld [vmem:[#allocation3 + $0x50] sm:$0xff]
    %v151 = vld [vmem:[#allocation3 + $0x58] sm:$0xff]
    %v152 = vld [vmem:[#allocation3 + $0x60] sm:$0xff]
    %v153 = vld [vmem:[#allocation3 + $0x68] sm:$0xff]
    %v154 = vld [vmem:[#allocation3 + $0x70] sm:$0xff]
    %v155 = vld [vmem:[#allocation3 + $0x78] sm:$0xff]
    %v156 = vld [vmem:[#allocation3 + $0x80] sm:$0xff]
    %v157 = vld [vmem:[#allocation3 + $0x88] sm:$0xff]
    %v158 = vld [vmem:[#allocation3 + $0x90] sm:$0xff]
    %v159 = vld [vmem:[#allocation3 + $0x98] sm:$0xff]
    %v160 = vld [vmem:[#allocation3 + $0xa0] sm:$0xff]
    %v161 = vld [vmem:[#allocation3 + $0xa8] sm:$0xff]
    %v162 = vld [vmem:[#allocation3 + $0xb0] sm:$0xff]
    %v163 = vld [vmem:[#allocation3 + $0xb8] sm:$0xff]
    %v164 = vld [vmem:[#allocation3 + $0xc0] sm:$0xff]
    %v165 = vld [vmem:[#allocation3 + $0xc8] sm:$0xff]
    %v166 = vld [vmem:[#allocation3 + $0xd0] sm:$0xff]
    %v167 = vld [vmem:[#allocation3 + $0xd8] sm:$0xff]
    %v168 = vld [vmem:[#allocation3 + $0xe0] sm:$0xff]
    %v169 = vld [vmem:[#allocation3 + $0xe8] sm:$0xff]
    %v170 = vld [vmem:[#allocation3 + $0xf0] sm:$0xff]
    %v171 = vld [vmem:[#allocation3 + $0xf8] sm:$0xff]
    %v172 = vld [vmem:[#allocation3 + $0x100] sm:$0xff]
    %v173 = vld [vmem:[#allocation3 + $0x108] sm:$0xff]
    %v174 = vld [vmem:[#allocation3 + $0x110] sm:$0xff]
    %v175 = vld [vmem:[#allocation3 + $0x118] sm:$0xff]
    %v176 = vld [vmem:[#allocation3 + $0x120] sm:$0xff]
    %v177 = vld [vmem:[#allocation3 + $0x128] sm:$0xff]
    %v178 = vld [vmem:[#allocation3 + $0x130] sm:$0xff]
    %v179 = vld [vmem:[#allocation3 + $0x138] sm:$0xff]
    %v180 = vld [vmem:[#allocation3 + $0x140] sm:$0xff]
    %v181 = vld [vmem:[#allocation3 + $0x148] sm:$0xff]
    %v182 = vld [vmem:[#allocation3 + $0x150] sm:$0xff]
    %v183 = vld [vmem:[#allocation3 + $0x158] sm:$0xff]
    %v184 = vld [vmem:[#allocation3 + $0x160] sm:$0xff]
    %v185 = vld [vmem:[#allocation3 + $0x168] sm:$0xff]
    %v186 = vld [vmem:[#allocation3 + $0x170] sm:$0xff]
    %v187 = vld [vmem:[#allocation3 + $0x178] sm:$0xff]
    %v188 = vld [vmem:[#allocation3 + $0x180] sm:$0xff]
    %v189 = vld [vmem:[#allocation3 + $0x188] sm:$0xff]
    %v190 = vld [vmem:[#allocation6] sm:$0xff]
    %v191 = vld [vmem:[#allocation6 + $0x8] sm:$0xff]
    %v192 = vld [vmem:[#allocation6 + $0x10] sm:$0xff]
    %v193 = vld [vmem:[#allocation6 + $0x18] sm:$0xff]
    %v194 = vld [vmem:[#allocation6 + $0x20] sm:$0xff]
    %v195 = vld [vmem:[#allocation6 + $0x28] sm:$0xff]
    %v196 = vld [vmem:[#allocation6 + $0x30] sm:$0xff]
    %v197 = vld [vmem:[#allocation6 + $0x38] sm:$0xff]
    %v198 = vld [vmem:[#allocation6 + $0x40] sm:$0xff]
    %v199 = vld [vmem:[#allocation6 + $0x48] sm:$0xff]
    %v200 = vld [vmem:[#allocation6 + $0x50] sm:$0xff]
    %v201 = vld [vmem:[#allocation6 + $0x58] sm:$0xff]
    %v202 = vld [vmem:[#allocation6 + $0x60] sm:$0xff]
    %v203 = vld [vmem:[#allocation6 + $0x68] sm:$0xff]
    %v204 = vld [vmem:[#allocation6 + $0x70] sm:$0xff]
    %v205 = vld [vmem:[#allocation6 + $0x78] sm:$0xff]
    %v206 = vld [vmem:[#allocation6 + $0x80] sm:$0xff]
    %v207 = vld [vmem:[#allocation6 + $0x88] sm:$0xff]
    %v208 = vld [vmem:[#allocation6 + $0x90] sm:$0xff]
    %v209 = vld [vmem:[#allocation6 + $0x98] sm:$0xff]
    %v210 = vld [vmem:[#allocation6 + $0xa0] sm:$0xff]
    %v211 = vld [vmem:[#allocation6 + $0xa8] sm:$0xff]
    %v212 = vld [vmem:[#allocation6 + $0xb0] sm:$0xff]
    %v213 = vld [vmem:[#allocation6 + $0xb8] sm:$0xff]
    %v214 = vld [vmem:[#allocation6 + $0xc0] sm:$0xff]
    %v215 = vld [vmem:[#allocation6 + $0xc8] sm:$0xff]
    %v216 = vld [vmem:[#allocation6 + $0xd0] sm:$0xff]
    %v217 = vld [vmem:[#allocation6 + $0xd8] sm:$0xff]
    %v218 = vld [vmem:[#allocation6 + $0xe0] sm:$0xff]
    %v219 = vld [vmem:[#allocation6 + $0xe8] sm:$0xff]
    %v220 = vld [vmem:[#allocation6 + $0xf0] sm:$0xff]
    %v221 = vld [vmem:[#allocation6 + $0xf8] sm:$0xff]
    %v222 = vld [vmem:[#allocation8] sm:$0x3]
    %v224 = vperm.slane %v222, 0
    %v225 = vperm.slane %v222, 1
    %228 = vmatpush.msra.mxu0 %v220
    %229 = vmatpush.msra.mxu0 %v218
    %230 = vmatpush.msra.mxu0 %v216
    %231 = vmatpush.msra.mxu0 %v214
    %232 = vmatpush.msra.mxu0 %v212
    %233 = vmatpush.msra.mxu0 %v210
    %234 = vmatpush.msra.mxu0 %v208
    %235 = vmatpush.msra.mxu0 %v206
    %236 = vmatpush.msra.mxu0 %v204
    %237 = vmatpush.msra.mxu0 %v202
    %238 = vmatpush.msra.mxu0 %v200
    %239 = vmatpush.msra.mxu0 %v198
    %240 = vmatpush.msra.mxu0 %v196
    %241 = vmatpush.msra.mxu0 %v194
    %242 = vmatpush.msra.mxu0 %v192
    %243 = vmatpush.msra.mxu0 %v190
    %244 = vmatmul.f32.gmra.mxu0 %v140
    %v245 = vpop.f32.mrf.mxu0
    %v246 = vadd.f32 %v224, %v245
    %247 = vmatmul.f32.gmra.mxu0 %v141
    %v248 = vpop.f32.mrf.mxu0
    %v249 = vadd.f32 %v224, %v248
    %250 = vmatmul.f32.gmra.mxu0 %v142
    %v251 = vpop.f32.mrf.mxu0
    %v252 = vadd.f32 %v224, %v251
    %253 = vmatmul.f32.gmra.mxu0 %v143
    %v254 = vpop.f32.mrf.mxu0
    %v255 = vadd.f32 %v224, %v254
    %256 = vmatmul.f32.gmra.mxu0 %v144
    %v257 = vpop.f32.mrf.mxu0
    %v258 = vadd.f32 %v224, %v257
    %259 = vmatmul.f32.gmra.mxu0 %v145
    %v260 = vpop.f32.mrf.mxu0
    %v261 = vadd.f32 %v224, %v260
    %262 = vmatmul.f32.gmra.mxu0 %v146
    %v263 = vpop.f32.mrf.mxu0
    %v264 = vadd.f32 %v224, %v263
    %265 = vmatmul.f32.gmra.mxu0 %v147
    %v266 = vpop.f32.mrf.mxu0
    %v267 = vadd.f32 %v224, %v266
    %268 = vmatmul.f32.gmra.mxu0 %v148
    %v269 = vpop.f32.mrf.mxu0
    %v270 = vadd.f32 %v224, %v269
    %271 = vmatmul.f32.gmra.mxu0 %v149
    %v272 = vpop.f32.mrf.mxu0
    %v273 = vadd.f32 %v224, %v272
    %274 = vmatmul.f32.gmra.mxu0 %v150
    %v275 = vpop.f32.mrf.mxu0
    %v276 = vadd.f32 %v224, %v275
    %277 = vmatmul.f32.gmra.mxu0 %v151
    %v278 = vpop.f32.mrf.mxu0
    %v279 = vadd.f32 %v224, %v278
    %280 = vmatmul.f32.gmra.mxu0 %v152
    %v281 = vpop.f32.mrf.mxu0
    %v282 = vadd.f32 %v224, %v281
    %283 = vmatmul.f32.gmra.mxu0 %v153
    %v284 = vpop.f32.mrf.mxu0
    %v285 = vadd.f32 %v224, %v284
    %286 = vmatmul.f32.gmra.mxu0 %v154
    %v287 = vpop.f32.mrf.mxu0
    %v288 = vadd.f32 %v224, %v287
    %289 = vmatmul.f32.gmra.mxu0 %v155
    %v290 = vpop.f32.mrf.mxu0
    %v291 = vadd.f32 %v224, %v290
    %292 = vmatmul.f32.gmra.mxu0 %v156
    %v293 = vpop.f32.mrf.mxu0
    %v294 = vadd.f32 %v224, %v293
    %295 = vmatmul.f32.gmra.mxu0 %v157
    %v296 = vpop.f32.mrf.mxu0
    %v297 = vadd.f32 %v224, %v296
    %298 = vmatmul.f32.gmra.mxu0 %v158
    %v299 = vpop.f32.mrf.mxu0
    %v300 = vadd.f32 %v224, %v299
    %301 = vmatmul.f32.gmra.mxu0 %v159
    %v302 = vpop.f32.mrf.mxu0
    %v303 = vadd.f32 %v224, %v302
    %304 = vmatmul.f32.gmra.mxu0 %v160
    %v305 = vpop.f32.mrf.mxu0
    %v306 = vadd.f32 %v224, %v305
    %307 = vmatmul.f32.gmra.mxu0 %v161
    %v308 = vpop.f32.mrf.mxu0
    %v309 = vadd.f32 %v224, %v308
    %310 = vmatmul.f32.gmra.mxu0 %v162
    %v311 = vpop.f32.mrf.mxu0
    %v312 = vadd.f32 %v224, %v311
    %313 = vmatmul.f32.gmra.mxu0 %v163
    %v314 = vpop.f32.mrf.mxu0
    %v315 = vadd.f32 %v224, %v314
    %316 = vmatmul.f32.gmra.mxu0 %v164
    %v317 = vpop.f32.mrf.mxu0
    %v318 = vadd.f32 %v224, %v317
    %319 = vmatmul.f32.gmra.mxu0 %v165
    %v320 = vpop.f32.mrf.mxu0
    %v321 = vadd.f32 %v224, %v320
    %322 = vmatmul.f32.gmra.mxu0 %v166
    %v323 = vpop.f32.mrf.mxu0
    %v324 = vadd.f32 %v224, %v323
    %325 = vmatmul.f32.gmra.mxu0 %v167
    %v326 = vpop.f32.mrf.mxu0
    %v327 = vadd.f32 %v224, %v326
    %328 = vmatmul.f32.gmra.mxu0 %v168
    %v329 = vpop.f32.mrf.mxu0
    %v330 = vadd.f32 %v224, %v329
    %331 = vmatmul.f32.gmra.mxu0 %v169
    %v332 = vpop.f32.mrf.mxu0
    %v333 = vadd.f32 %v224, %v332
    %334 = vmatmul.f32.gmra.mxu0 %v170
    %v335 = vpop.f32.mrf.mxu0
    %v336 = vadd.f32 %v224, %v335
    %337 = vmatmul.f32.gmra.mxu0 %v171
    %v338 = vpop.f32.mrf.mxu0
    %v339 = vadd.f32 %v224, %v338
    %340 = vmatmul.f32.gmra.mxu0 %v172
    %v341 = vpop.f32.mrf.mxu0
    %v342 = vadd.f32 %v224, %v341
    %343 = vmatmul.f32.gmra.mxu0 %v173
    %v344 = vpop.f32.mrf.mxu0
    %v345 = vadd.f32 %v224, %v344
    %346 = vmatmul.f32.gmra.mxu0 %v174
    %v347 = vpop.f32.mrf.mxu0
    %v348 = vadd.f32 %v224, %v347
    %349 = vmatmul.f32.gmra.mxu0 %v175
    %v350 = vpop.f32.mrf.mxu0
    %v351 = vadd.f32 %v224, %v350
    %352 = vmatmul.f32.gmra.mxu0 %v176
    %v353 = vpop.f32.mrf.mxu0
    %v354 = vadd.f32 %v224, %v353
    %355 = vmatmul.f32.gmra.mxu0 %v177
    %v356 = vpop.f32.mrf.mxu0
    %v357 = vadd.f32 %v224, %v356
    %358 = vmatmul.f32.gmra.mxu0 %v178
    %v359 = vpop.f32.mrf.mxu0
    %v360 = vadd.f32 %v224, %v359
    %361 = vmatmul.f32.gmra.mxu0 %v179
    %v362 = vpop.f32.mrf.mxu0
    %v363 = vadd.f32 %v224, %v362
    %364 = vmatmul.f32.gmra.mxu0 %v180
    %v365 = vpop.f32.mrf.mxu0
    %v366 = vadd.f32 %v224, %v365
    %367 = vmatmul.f32.gmra.mxu0 %v181
    %v368 = vpop.f32.mrf.mxu0
    %v369 = vadd.f32 %v224, %v368
    %370 = vmatmul.f32.gmra.mxu0 %v182
    %v371 = vpop.f32.mrf.mxu0
    %v372 = vadd.f32 %v224, %v371
    %373 = vmatmul.f32.gmra.mxu0 %v183
    %v374 = vpop.f32.mrf.mxu0
    %v375 = vadd.f32 %v224, %v374
    %376 = vmatmul.f32.gmra.mxu0 %v184
    %v377 = vpop.f32.mrf.mxu0
    %v378 = vadd.f32 %v224, %v377
    %379 = vmatmul.f32.gmra.mxu0 %v185
    %v380 = vpop.f32.mrf.mxu0
    %v381 = vadd.f32 %v224, %v380
    %382 = vmatmul.f32.gmra.mxu0 %v186
    %v383 = vpop.f32.mrf.mxu0
    %v384 = vadd.f32 %v224, %v383
    %385 = vmatmul.f32.gmra.mxu0 %v187
    %v386 = vpop.f32.mrf.mxu0
    %v387 = vadd.f32 %v224, %v386
    %388 = vmatmul.f32.gmra.mxu0 %v188
    %v389 = vpop.f32.mrf.mxu0
    %v390 = vadd.f32 %v224, %v389
    %391 = vmatmul.f32.gmra.mxu0 %v189
    %v392 = vpop.f32.mrf.mxu0
    %v393 = vadd.f32 %v224, %v392
    %394 = vdwg.mxu0
    %395 = vmatpush.msra.mxu0 %v221
    %396 = vmatpush.msra.mxu0 %v219
    %397 = vmatpush.msra.mxu0 %v217
    %398 = vmatpush.msra.mxu0 %v215
    %399 = vmatpush.msra.mxu0 %v213
    %400 = vmatpush.msra.mxu0 %v211
    %401 = vmatpush.msra.mxu0 %v209
    %402 = vmatpush.msra.mxu0 %v207
    %403 = vmatpush.msra.mxu0 %v205
    %404 = vmatpush.msra.mxu0 %v203
    %405 = vmatpush.msra.mxu0 %v201
    %406 = vmatpush.msra.mxu0 %v199
    %407 = vmatpush.msra.mxu0 %v197
    %408 = vmatpush.msra.mxu0 %v195
    %409 = vmatpush.msra.mxu0 %v193
    %410 = vmatpush.msra.mxu0 %v191
    %411 = vmatmul.f32.gmra.mxu0 %v140
    %v412 = vpop.f32.mrf.mxu0
    %v413 = vadd.f32 %v225, %v412
    %414 = vmatmul.f32.gmra.mxu0 %v141
    %v415 = vpop.f32.mrf.mxu0
    %v416 = vadd.f32 %v225, %v415
    %417 = vmatmul.f32.gmra.mxu0 %v142
    %v418 = vpop.f32.mrf.mxu0
    %v419 = vadd.f32 %v225, %v418
    %420 = vmatmul.f32.gmra.mxu0 %v143
    %v421 = vpop.f32.mrf.mxu0
    %v422 = vadd.f32 %v225, %v421
    %423 = vmatmul.f32.gmra.mxu0 %v144
    %v424 = vpop.f32.mrf.mxu0
    %v425 = vadd.f32 %v225, %v424
    %426 = vmatmul.f32.gmra.mxu0 %v145
    %v427 = vpop.f32.mrf.mxu0
    %v428 = vadd.f32 %v225, %v427
    %429 = vmatmul.f32.gmra.mxu0 %v146
    %v430 = vpop.f32.mrf.mxu0
    %v431 = vadd.f32 %v225, %v430
    %432 = vmatmul.f32.gmra.mxu0 %v147
    %v433 = vpop.f32.mrf.mxu0
    %v434 = vadd.f32 %v225, %v433
    %435 = vmatmul.f32.gmra.mxu0 %v148
    %v436 = vpop.f32.mrf.mxu0
    %v437 = vadd.f32 %v225, %v436
    %438 = vmatmul.f32.gmra.mxu0 %v149
    %v439 = vpop.f32.mrf.mxu0
    %v440 = vadd.f32 %v225, %v439
    %441 = vmatmul.f32.gmra.mxu0 %v150
    %v442 = vpop.f32.mrf.mxu0
    %v443 = vadd.f32 %v225, %v442
    %444 = vmatmul.f32.gmra.mxu0 %v151
    %v445 = vpop.f32.mrf.mxu0
    %v446 = vadd.f32 %v225, %v445
    %447 = vmatmul.f32.gmra.mxu0 %v152
    %v448 = vpop.f32.mrf.mxu0
    %v449 = vadd.f32 %v225, %v448
    %450 = vmatmul.f32.gmra.mxu0 %v153
    %v451 = vpop.f32.mrf.mxu0
    %v452 = vadd.f32 %v225, %v451
    %453 = vmatmul.f32.gmra.mxu0 %v154
    %v454 = vpop.f32.mrf.mxu0
    %v455 = vadd.f32 %v225, %v454
    %456 = vmatmul.f32.gmra.mxu0 %v155
    %v457 = vpop.f32.mrf.mxu0
    %v458 = vadd.f32 %v225, %v457
    %459 = vmatmul.f32.gmra.mxu0 %v156
    %v460 = vpop.f32.mrf.mxu0
    %v461 = vadd.f32 %v225, %v460
    %462 = vmatmul.f32.gmra.mxu0 %v157
    %v463 = vpop.f32.mrf.mxu0
    %v464 = vadd.f32 %v225, %v463
    %465 = vmatmul.f32.gmra.mxu0 %v158
    %v466 = vpop.f32.mrf.mxu0
    %v467 = vadd.f32 %v225, %v466
    %468 = vmatmul.f32.gmra.mxu0 %v159
    %v469 = vpop.f32.mrf.mxu0
    %v470 = vadd.f32 %v225, %v469
    %471 = vmatmul.f32.gmra.mxu0 %v160
    %v472 = vpop.f32.mrf.mxu0
    %v473 = vadd.f32 %v225, %v472
    %474 = vmatmul.f32.gmra.mxu0 %v161
    %v475 = vpop.f32.mrf.mxu0
    %v476 = vadd.f32 %v225, %v475
    %477 = vmatmul.f32.gmra.mxu0 %v162
    %v478 = vpop.f32.mrf.mxu0
    %v479 = vadd.f32 %v225, %v478
    %480 = vmatmul.f32.gmra.mxu0 %v163
    %v481 = vpop.f32.mrf.mxu0
    %v482 = vadd.f32 %v225, %v481
    %483 = vmatmul.f32.gmra.mxu0 %v164
    %v484 = vpop.f32.mrf.mxu0
    %v485 = vadd.f32 %v225, %v484
    %486 = vmatmul.f32.gmra.mxu0 %v165
    %v487 = vpop.f32.mrf.mxu0
    %v488 = vadd.f32 %v225, %v487
    %489 = vmatmul.f32.gmra.mxu0 %v166
    %v490 = vpop.f32.mrf.mxu0
    %v491 = vadd.f32 %v225, %v490
    %492 = vmatmul.f32.gmra.mxu0 %v167
    %v493 = vpop.f32.mrf.mxu0
    %v494 = vadd.f32 %v225, %v493
    %495 = vmatmul.f32.gmra.mxu0 %v168
    %v496 = vpop.f32.mrf.mxu0
    %v497 = vadd.f32 %v225, %v496
    %498 = vmatmul.f32.gmra.mxu0 %v169
    %v499 = vpop.f32.mrf.mxu0
    %v500 = vadd.f32 %v225, %v499
    %501 = vmatmul.f32.gmra.mxu0 %v170
    %v502 = vpop.f32.mrf.mxu0
    %v503 = vadd.f32 %v225, %v502
    %504 = vmatmul.f32.gmra.mxu0 %v171
    %v505 = vpop.f32.mrf.mxu0
    %v506 = vadd.f32 %v225, %v505
    %507 = vmatmul.f32.gmra.mxu0 %v172
    %v508 = vpop.f32.mrf.mxu0
    %v509 = vadd.f32 %v225, %v508
    %510 = vmatmul.f32.gmra.mxu0 %v173
    %v511 = vpop.f32.mrf.mxu0
    %v512 = vadd.f32 %v225, %v511
    %513 = vmatmul.f32.gmra.mxu0 %v174
    %v514 = vpop.f32.mrf.mxu0
    %v515 = vadd.f32 %v225, %v514
    %516 = vmatmul.f32.gmra.mxu0 %v175
    %v517 = vpop.f32.mrf.mxu0
    %v518 = vadd.f32 %v225, %v517
    %519 = vmatmul.f32.gmra.mxu0 %v176
    %v520 = vpop.f32.mrf.mxu0
    %v521 = vadd.f32 %v225, %v520
    %522 = vmatmul.f32.gmra.mxu0 %v177
    %v523 = vpop.f32.mrf.mxu0
    %v524 = vadd.f32 %v225, %v523
    %525 = vmatmul.f32.gmra.mxu0 %v178
    %v526 = vpop.f32.mrf.mxu0
    %v527 = vadd.f32 %v225, %v526
    %528 = vmatmul.f32.gmra.mxu0 %v179
    %v529 = vpop.f32.mrf.mxu0
    %v530 = vadd.f32 %v225, %v529
    %531 = vmatmul.f32.gmra.mxu0 %v180
    %v532 = vpop.f32.mrf.mxu0
    %v533 = vadd.f32 %v225, %v532
    %534 = vmatmul.f32.gmra.mxu0 %v181
    %v535 = vpop.f32.mrf.mxu0
    %v536 = vadd.f32 %v225, %v535
    %537 = vmatmul.f32.gmra.mxu0 %v182
    %v538 = vpop.f32.mrf.mxu0
    %v539 = vadd.f32 %v225, %v538
    %540 = vmatmul.f32.gmra.mxu0 %v183
    %v541 = vpop.f32.mrf.mxu0
    %v542 = vadd.f32 %v225, %v541
    %543 = vmatmul.f32.gmra.mxu0 %v184
    %v544 = vpop.f32.mrf.mxu0
    %v545 = vadd.f32 %v225, %v544
    %546 = vmatmul.f32.gmra.mxu0 %v185
    %v547 = vpop.f32.mrf.mxu0
    %v548 = vadd.f32 %v225, %v547
    %549 = vmatmul.f32.gmra.mxu0 %v186
    %v550 = vpop.f32.mrf.mxu0
    %v551 = vadd.f32 %v225, %v550
    %552 = vmatmul.f32.gmra.mxu0 %v187
    %v553 = vpop.f32.mrf.mxu0
    %v554 = vadd.f32 %v225, %v553
    %555 = vmatmul.f32.gmra.mxu0 %v188
    %v556 = vpop.f32.mrf.mxu0
    %v557 = vadd.f32 %v225, %v556
    %558 = vmatmul.f32.gmra.mxu0 %v189
    %v559 = vpop.f32.mrf.mxu0
    %v560 = vadd.f32 %v225, %v559
    %561 = vdwg.mxu0
    %v562 = vmul.f32 %v246, 0.5
    %v563 = vmul.f32 %v413, 0.5
    %v564 = vmul.f32 %v249, 0.5
    %v565 = vmul.f32 %v416, 0.5
    %v566 = vmul.f32 %v252, 0.5
    %v567 = vmul.f32 %v419, 0.5
    %v568 = vmul.f32 %v255, 0.5
    %v569 = vmul.f32 %v422, 0.5
    %v570 = vmul.f32 %v258, 0.5
    %v571 = vmul.f32 %v425, 0.5
    %v572 = vmul.f32 %v261, 0.5
    %v573 = vmul.f32 %v428, 0.5
    %v574 = vmul.f32 %v264, 0.5
    %v575 = vmul.f32 %v431, 0.5
    %v576 = vmul.f32 %v267, 0.5
    %v577 = vmul.f32 %v434, 0.5
    %v578 = vmul.f32 %v270, 0.5
    %v579 = vmul.f32 %v437, 0.5
    %v580 = vmul.f32 %v273, 0.5
    %v581 = vmul.f32 %v440, 0.5
    %v582 = vmul.f32 %v276, 0.5
    %v583 = vmul.f32 %v443, 0.5
    %v584 = vmul.f32 %v279, 0.5
    %v585 = vmul.f32 %v446, 0.5
    %v586 = vmul.f32 %v282, 0.5
    %v587 = vmul.f32 %v449, 0.5
    %v588 = vmul.f32 %v285, 0.5
    %v589 = vmul.f32 %v452, 0.5
    %v590 = vmul.f32 %v288, 0.5
    %v591 = vmul.f32 %v455, 0.5
    %v592 = vmul.f32 %v291, 0.5
    %v593 = vmul.f32 %v458, 0.5
    %v594 = vmul.f32 %v294, 0.5
    %v595 = vmul.f32 %v461, 0.5
    %v596 = vmul.f32 %v297, 0.5
    %v597 = vmul.f32 %v464, 0.5
    %v598 = vmul.f32 %v300, 0.5
    %v599 = vmul.f32 %v467, 0.5
    %v600 = vmul.f32 %v303, 0.5
    %v601 = vmul.f32 %v470, 0.5
    %v602 = vmul.f32 %v306, 0.5
    %v603 = vmul.f32 %v473, 0.5
    %v604 = vmul.f32 %v309, 0.5
    %v605 = vmul.f32 %v476, 0.5
    %v606 = vmul.f32 %v312, 0.5
    %v607 = vmul.f32 %v479, 0.5
    %v608 = vmul.f32 %v315, 0.5
    %v609 = vmul.f32 %v482, 0.5
    %v610 = vmul.f32 %v318, 0.5
    %v611 = vmul.f32 %v485, 0.5
    %v612 = vmul.f32 %v321, 0.5
    %v613 = vmul.f32 %v488, 0.5
    %v614 = vmul.f32 %v324, 0.5
    %v615 = vmul.f32 %v491, 0.5
    %v616 = vmul.f32 %v327, 0.5
    %v617 = vmul.f32 %v494, 0.5
    %v618 = vmul.f32 %v330, 0.5
    %v619 = vmul.f32 %v497, 0.5
    %v620 = vmul.f32 %v333, 0.5
    %v621 = vmul.f32 %v500, 0.5
    %v622 = vmul.f32 %v336, 0.5
    %v623 = vmul.f32 %v503, 0.5
    %v624 = vmul.f32 %v339, 0.5
    %v625 = vmul.f32 %v506, 0.5
    %v626 = vmul.f32 %v342, 0.5
    %v627 = vmul.f32 %v509, 0.5
    %v628 = vmul.f32 %v345, 0.5
    %v629 = vmul.f32 %v512, 0.5
    %v630 = vmul.f32 %v348, 0.5
    %v631 = vmul.f32 %v515, 0.5
    %v632 = vmul.f32 %v351, 0.5
    %v633 = vmul.f32 %v518, 0.5
    %v634 = vmul.f32 %v354, 0.5
    %v635 = vmul.f32 %v521, 0.5
    %v636 = vmul.f32 %v357, 0.5
    %v637 = vmul.f32 %v524, 0.5
    %v638 = vmul.f32 %v360, 0.5
    %v639 = vmul.f32 %v527, 0.5
    %v640 = vmul.f32 %v363, 0.5
    %v641 = vmul.f32 %v530, 0.5
    %v642 = vmul.f32 %v366, 0.5
    %v643 = vmul.f32 %v533, 0.5
    %v644 = vmul.f32 %v369, 0.5
    %v645 = vmul.f32 %v536, 0.5
    %v646 = vmul.f32 %v372, 0.5
    %v647 = vmul.f32 %v539, 0.5
    %v648 = vmul.f32 %v375, 0.5
    %v649 = vmul.f32 %v542, 0.5
    %v650 = vmul.f32 %v378, 0.5
    %v651 = vmul.f32 %v545, 0.5
    %v652 = vmul.f32 %v381, 0.5
    %v653 = vmul.f32 %v548, 0.5
    %v654 = vmul.f32 %v384, 0.5
    %v655 = vmul.f32 %v551, 0.5
    %v656 = vmul.f32 %v387, 0.5
    %v657 = vmul.f32 %v554, 0.5
    %v658 = vmul.f32 %v390, 0.5
    %v659 = vmul.f32 %v557, 0.5
    %v660 = vmul.f32 %v393, 0.5
    %v661 = vmul.f32 %v560, 0.5
    %v662 = vmul.f32 %v246, 0.70710677
    %v663 = vmul.f32 %v413, 0.70710677
    %v664 = vmul.f32 %v249, 0.70710677
    %v665 = vmul.f32 %v416, 0.70710677
    %v666 = vmul.f32 %v252, 0.70710677
    %v667 = vmul.f32 %v419, 0.70710677
    %v668 = vmul.f32 %v255, 0.70710677
    %v669 = vmul.f32 %v422, 0.70710677
    %v670 = vmul.f32 %v258, 0.70710677
    %v671 = vmul.f32 %v425, 0.70710677
    %v672 = vmul.f32 %v261, 0.70710677
    %v673 = vmul.f32 %v428, 0.70710677
    %v674 = vmul.f32 %v264, 0.70710677
    %v675 = vmul.f32 %v431, 0.70710677
    %v676 = vmul.f32 %v267, 0.70710677
    %v677 = vmul.f32 %v434, 0.70710677
    %v678 = vmul.f32 %v270, 0.70710677
    %v679 = vmul.f32 %v437, 0.70710677
    %v680 = vmul.f32 %v273, 0.70710677
    %v681 = vmul.f32 %v440, 0.70710677
    %v682 = vmul.f32 %v276, 0.70710677
    %v683 = vmul.f32 %v443, 0.70710677
    %v684 = vmul.f32 %v279, 0.70710677
    %v685 = vmul.f32 %v446, 0.70710677
    %v686 = vmul.f32 %v282, 0.70710677
    %v687 = vmul.f32 %v449, 0.70710677
    %v688 = vmul.f32 %v285, 0.70710677
    %v689 = vmul.f32 %v452, 0.70710677
    %v690 = vmul.f32 %v288, 0.70710677
    %v691 = vmul.f32 %v455, 0.70710677
    %v692 = vmul.f32 %v291, 0.70710677
    %v693 = vmul.f32 %v458, 0.70710677
    %v694 = vmul.f32 %v294, 0.70710677
    %v695 = vmul.f32 %v461, 0.70710677
    %v696 = vmul.f32 %v297, 0.70710677
    %v697 = vmul.f32 %v464, 0.70710677
    %v698 = vmul.f32 %v300, 0.70710677
    %v699 = vmul.f32 %v467, 0.70710677
    %v700 = vmul.f32 %v303, 0.70710677
    %v701 = vmul.f32 %v470, 0.70710677
    %v702 = vmul.f32 %v306, 0.70710677
    %v703 = vmul.f32 %v473, 0.70710677
    %v704 = vmul.f32 %v309, 0.70710677
    %v705 = vmul.f32 %v476, 0.70710677
    %v706 = vmul.f32 %v312, 0.70710677
    %v707 = vmul.f32 %v479, 0.70710677
    %v708 = vmul.f32 %v315, 0.70710677
    %v709 = vmul.f32 %v482, 0.70710677
    %v710 = vmul.f32 %v318, 0.70710677
    %v711 = vmul.f32 %v485, 0.70710677
    %v712 = vmul.f32 %v321, 0.70710677
    %v713 = vmul.f32 %v488, 0.70710677
    %v714 = vmul.f32 %v324, 0.70710677
    %v715 = vmul.f32 %v491, 0.70710677
    %v716 = vmul.f32 %v327, 0.70710677
    %v717 = vmul.f32 %v494, 0.70710677
    %v718 = vmul.f32 %v330, 0.70710677
    %v719 = vmul.f32 %v497, 0.70710677
    %v720 = vmul.f32 %v333, 0.70710677
    %v721 = vmul.f32 %v500, 0.70710677
    %v722 = vmul.f32 %v336, 0.70710677
    %v723 = vmul.f32 %v503, 0.70710677
    %v724 = vmul.f32 %v339, 0.70710677
    %v725 = vmul.f32 %v506, 0.70710677
    %v726 = vmul.f32 %v342, 0.70710677
    %v727 = vmul.f32 %v509, 0.70710677
    %v728 = vmul.f32 %v345, 0.70710677
    %v729 = vmul.f32 %v512, 0.70710677
    %v730 = vmul.f32 %v348, 0.70710677
    %v731 = vmul.f32 %v515, 0.70710677
    %v732 = vmul.f32 %v351, 0.70710677
    %v733 = vmul.f32 %v518, 0.70710677
    %v734 = vmul.f32 %v354, 0.70710677
    %v735 = vmul.f32 %v521, 0.70710677
    %v736 = vmul.f32 %v357, 0.70710677
    %v737 = vmul.f32 %v524, 0.70710677
    %v738 = vmul.f32 %v360, 0.70710677
    %v739 = vmul.f32 %v527, 0.70710677
    %v740 = vmul.f32 %v363, 0.70710677
    %v741 = vmul.f32 %v530, 0.70710677
    %v742 = vmul.f32 %v366, 0.70710677
    %v743 = vmul.f32 %v533, 0.70710677
    %v744 = vmul.f32 %v369, 0.70710677
    %v745 = vmul.f32 %v536, 0.70710677
    %v746 = vmul.f32 %v372, 0.70710677
    %v747 = vmul.f32 %v539, 0.70710677
    %v748 = vmul.f32 %v375, 0.70710677
    %v749 = vmul.f32 %v542, 0.70710677
    %v750 = vmul.f32 %v378, 0.70710677
    %v751 = vmul.f32 %v545, 0.70710677
    %v752 = vmul.f32 %v381, 0.70710677
    %v753 = vmul.f32 %v548, 0.70710677
    %v754 = vmul.f32 %v384, 0.70710677
    %v755 = vmul.f32 %v551, 0.70710677
    %v756 = vmul.f32 %v387, 0.70710677
    %v757 = vmul.f32 %v554, 0.70710677
    %v758 = vmul.f32 %v390, 0.70710677
    %v759 = vmul.f32 %v557, 0.70710677
    %v760 = vmul.f32 %v393, 0.70710677
    %v761 = vmul.f32 %v560, 0.70710677
    %v762 = vmul.f32 %v662, %v662
    %v763 = vmin.f32 16.0, %v762
    %v764 = vmul.f32 %v763, 2.1237322e-06
    %v765 = vadd.f32 %v764, 0.00028619796
    %v766 = vmul.f32 %v763, %v765
    %v767 = vadd.f32 %v766, 0.0036580483
    %v768 = vmul.f32 %v763, %v767
    %v769 = vadd.f32 %v768, 0.05243302
    %v770 = vmul.f32 %v763, %v769
    %v771 = vadd.f32 %v770, 0.18741608
    %v772 = vmul.f32 %v763, %v771
    %v773 = vadd.f32 %v772, 1.1283791
    %v774 = vmul.f32 %v662, %v773
    %v775 = vmul.f32 %v763, 3.8918573e-05
    %v776 = vadd.f32 %v775, 0.001143296
    %v777 = vmul.f32 %v763, %v776
    %v778 = vadd.f32 %v777, 0.014752088
    %v779 = vmul.f32 %v763, %v778
    %v780 = vadd.f32 %v779, 0.112945676
    %v781 = vmul.f32 %v763, %v780
    %v782 = vadd.f32 %v781, 0.4994258
    %v783 = vmul.f32 %v763, %v782
    %v784 = vadd.f32 %v783, 1.0
    %v785 = vrcp.pop %v784
    %v786 = vmul.f32 %v784, %v785
    %v787 = vsub.f32 1.0, %v786
    %v788 = vmul.f32 %v785, %v787
    %v789 = vadd.f32 %v785, %v788
    %vm790 = vweird.f32 %v784
    %vm791 = vweird.f32 %v785
    %vm792 = vmor %vm790, %vm791
    %v793 = vsel %vm792, %v785, %v789
    %v794 = vand.u32 2147483647, %v784
    %vm795 = vcmp.eq.f32.partialorder %v794, 8.507059e+37
    %v796 = vand.u32 %v784, 2147483648
    %v797 = vor.u32 1.1754944e-38, %v796
    %v798 = vsel %vm795, %v797, %v793
    %v799 = vmul.f32 %v774, %v798
    %v800 = vmin.f32 %v799, 1.0
    %v801 = vmax.f32 %v800, -1.0
    %v802 = vmul.f32 %v663, %v663
    %v803 = vmin.f32 16.0, %v802
    %v804 = vmul.f32 %v803, 2.1237322e-06
    %v805 = vadd.f32 %v804, 0.00028619796
    %v806 = vmul.f32 %v803, %v805
    %v807 = vadd.f32 %v806, 0.0036580483
    %v808 = vmul.f32 %v803, %v807
    %v809 = vadd.f32 %v808, 0.05243302
    %v810 = vmul.f32 %v803, %v809
    %v811 = vadd.f32 %v810, 0.18741608
    %v812 = vmul.f32 %v803, %v811
    %v813 = vadd.f32 %v812, 1.1283791
    %v814 = vmul.f32 %v663, %v813
    %v815 = vmul.f32 %v803, 3.8918573e-05
    %v816 = vadd.f32 %v815, 0.001143296
    %v817 = vmul.f32 %v803, %v816
    %v818 = vadd.f32 %v817, 0.014752088
    %v819 = vmul.f32 %v803, %v818
    %v820 = vadd.f32 %v819, 0.112945676
    %v821 = vmul.f32 %v803, %v820
    %v822 = vadd.f32 %v821, 0.4994258
    %v823 = vmul.f32 %v803, %v822
    %v824 = vadd.f32 %v823, 1.0
    %v825 = vrcp.pop %v824
    %v826 = vmul.f32 %v824, %v825
    %v827 = vsub.f32 1.0, %v826
    %v828 = vmul.f32 %v825, %v827
    %v829 = vadd.f32 %v825, %v828
    %vm830 = vweird.f32 %v824
    %vm831 = vweird.f32 %v825
    %vm832 = vmor %vm830, %vm831
    %v833 = vsel %vm832, %v825, %v829
    %v834 = vand.u32 2147483647, %v824
    %vm835 = vcmp.eq.f32.partialorder %v834, 8.507059e+37
    %v836 = vand.u32 %v824, 2147483648
    %v837 = vor.u32 1.1754944e-38, %v836
    %v838 = vsel %vm835, %v837, %v833
    %v839 = vmul.f32 %v814, %v838
    %v840 = vmin.f32 %v839, 1.0
    %v841 = vmax.f32 %v840, -1.0
    %v842 = vmul.f32 %v664, %v664
    %v843 = vmin.f32 16.0, %v842
    %v844 = vmul.f32 %v843, 2.1237322e-06
    %v845 = vadd.f32 %v844, 0.00028619796
    %v846 = vmul.f32 %v843, %v845
    %v847 = vadd.f32 %v846, 0.0036580483
    %v848 = vmul.f32 %v843, %v847
    %v849 = vadd.f32 %v848, 0.05243302
    %v850 = vmul.f32 %v843, %v849
    %v851 = vadd.f32 %v850, 0.18741608
    %v852 = vmul.f32 %v843, %v851
    %v853 = vadd.f32 %v852, 1.1283791
    %v854 = vmul.f32 %v664, %v853
    %v855 = vmul.f32 %v843, 3.8918573e-05
    %v856 = vadd.f32 %v855, 0.001143296
    %v857 = vmul.f32 %v843, %v856
    %v858 = vadd.f32 %v857, 0.014752088
    %v859 = vmul.f32 %v843, %v858
    %v860 = vadd.f32 %v859, 0.112945676
    %v861 = vmul.f32 %v843, %v860
    %v862 = vadd.f32 %v861, 0.4994258
    %v863 = vmul.f32 %v843, %v862
    %v864 = vadd.f32 %v863, 1.0
    %v865 = vrcp.pop %v864
    %v866 = vmul.f32 %v864, %v865
    %v867 = vsub.f32 1.0, %v866
    %v868 = vmul.f32 %v865, %v867
    %v869 = vadd.f32 %v865, %v868
    %vm870 = vweird.f32 %v864
    %vm871 = vweird.f32 %v865
    %vm872 = vmor %vm870, %vm871
    %v873 = vsel %vm872, %v865, %v869
    %v874 = vand.u32 2147483647, %v864
    %vm875 = vcmp.eq.f32.partialorder %v874, 8.507059e+37
    %v876 = vand.u32 %v864, 2147483648
    %v877 = vor.u32 1.1754944e-38, %v876
    %v878 = vsel %vm875, %v877, %v873
    %v879 = vmul.f32 %v854, %v878
    %v880 = vmin.f32 %v879, 1.0
    %v881 = vmax.f32 %v880, -1.0
    %v882 = vmul.f32 %v665, %v665
    %v883 = vmin.f32 16.0, %v882
    %v884 = vmul.f32 %v883, 2.1237322e-06
    %v885 = vadd.f32 %v884, 0.00028619796
    %v886 = vmul.f32 %v883, %v885
    %v887 = vadd.f32 %v886, 0.0036580483
    %v888 = vmul.f32 %v883, %v887
    %v889 = vadd.f32 %v888, 0.05243302
    %v890 = vmul.f32 %v883, %v889
    %v891 = vadd.f32 %v890, 0.18741608
    %v892 = vmul.f32 %v883, %v891
    %v893 = vadd.f32 %v892, 1.1283791
    %v894 = vmul.f32 %v665, %v893
    %v895 = vmul.f32 %v883, 3.8918573e-05
    %v896 = vadd.f32 %v895, 0.001143296
    %v897 = vmul.f32 %v883, %v896
    %v898 = vadd.f32 %v897, 0.014752088
    %v899 = vmul.f32 %v883, %v898
    %v900 = vadd.f32 %v899, 0.112945676
    %v901 = vmul.f32 %v883, %v900
    %v902 = vadd.f32 %v901, 0.4994258
    %v903 = vmul.f32 %v883, %v902
    %v904 = vadd.f32 %v903, 1.0
    %v905 = vrcp.pop %v904
    %v906 = vmul.f32 %v904, %v905
    %v907 = vsub.f32 1.0, %v906
    %v908 = vmul.f32 %v905, %v907
    %v909 = vadd.f32 %v905, %v908
    %vm910 = vweird.f32 %v904
    %vm911 = vweird.f32 %v905
    %vm912 = vmor %vm910, %vm911
    %v913 = vsel %vm912, %v905, %v909
    %v914 = vand.u32 2147483647, %v904
    %vm915 = vcmp.eq.f32.partialorder %v914, 8.507059e+37
    %v916 = vand.u32 %v904, 2147483648
    %v917 = vor.u32 1.1754944e-38, %v916
    %v918 = vsel %vm915, %v917, %v913
    %v919 = vmul.f32 %v894, %v918
    %v920 = vmin.f32 %v919, 1.0
    %v921 = vmax.f32 %v920, -1.0
    %v922 = vmul.f32 %v666, %v666
    %v923 = vmin.f32 16.0, %v922
    %v924 = vmul.f32 %v923, 2.1237322e-06
    %v925 = vadd.f32 %v924, 0.00028619796
    %v926 = vmul.f32 %v923, %v925
    %v927 = vadd.f32 %v926, 0.0036580483
    %v928 = vmul.f32 %v923, %v927
    %v929 = vadd.f32 %v928, 0.05243302
    %v930 = vmul.f32 %v923, %v929
    %v931 = vadd.f32 %v930, 0.18741608
    %v932 = vmul.f32 %v923, %v931
    %v933 = vadd.f32 %v932, 1.1283791
    %v934 = vmul.f32 %v666, %v933
    %v935 = vmul.f32 %v923, 3.8918573e-05
    %v936 = vadd.f32 %v935, 0.001143296
    %v937 = vmul.f32 %v923, %v936
    %v938 = vadd.f32 %v937, 0.014752088
    %v939 = vmul.f32 %v923, %v938
    %v940 = vadd.f32 %v939, 0.112945676
    %v941 = vmul.f32 %v923, %v940
    %v942 = vadd.f32 %v941, 0.4994258
    %v943 = vmul.f32 %v923, %v942
    %v944 = vadd.f32 %v943, 1.0
    %v945 = vrcp.pop %v944
    %v946 = vmul.f32 %v944, %v945
    %v947 = vsub.f32 1.0, %v946
    %v948 = vmul.f32 %v945, %v947
    %v949 = vadd.f32 %v945, %v948
    %vm950 = vweird.f32 %v944
    %vm951 = vweird.f32 %v945
    %vm952 = vmor %vm950, %vm951
    %v953 = vsel %vm952, %v945, %v949
    %v954 = vand.u32 2147483647, %v944
    %vm955 = vcmp.eq.f32.partialorder %v954, 8.507059e+37
    %v956 = vand.u32 %v944, 2147483648
    %v957 = vor.u32 1.1754944e-38, %v956
    %v958 = vsel %vm955, %v957, %v953
    %v959 = vmul.f32 %v934, %v958
    %v960 = vmin.f32 %v959, 1.0
    %v961 = vmax.f32 %v960, -1.0
    %v962 = vmul.f32 %v667, %v667
    %v963 = vmin.f32 16.0, %v962
    %v964 = vmul.f32 %v963, 2.1237322e-06
    %v965 = vadd.f32 %v964, 0.00028619796
    %v966 = vmul.f32 %v963, %v965
    %v967 = vadd.f32 %v966, 0.0036580483
    %v968 = vmul.f32 %v963, %v967
    %v969 = vadd.f32 %v968, 0.05243302
    %v970 = vmul.f32 %v963, %v969
    %v971 = vadd.f32 %v970, 0.18741608
    %v972 = vmul.f32 %v963, %v971
    %v973 = vadd.f32 %v972, 1.1283791
    %v974 = vmul.f32 %v667, %v973
    %v975 = vmul.f32 %v963, 3.8918573e-05
    %v976 = vadd.f32 %v975, 0.001143296
    %v977 = vmul.f32 %v963, %v976
    %v978 = vadd.f32 %v977, 0.014752088
    %v979 = vmul.f32 %v963, %v978
    %v980 = vadd.f32 %v979, 0.112945676
    %v981 = vmul.f32 %v963, %v980
    %v982 = vadd.f32 %v981, 0.4994258
    %v983 = vmul.f32 %v963, %v982
    %v984 = vadd.f32 %v983, 1.0
    %v985 = vrcp.pop %v984
    %v986 = vmul.f32 %v984, %v985
    %v987 = vsub.f32 1.0, %v986
    %v988 = vmul.f32 %v985, %v987
    %v989 = vadd.f32 %v985, %v988
    %vm990 = vweird.f32 %v984
    %vm991 = vweird.f32 %v985
    %vm992 = vmor %vm990, %vm991
    %v993 = vsel %vm992, %v985, %v989
    %v994 = vand.u32 2147483647, %v984
    %vm995 = vcmp.eq.f32.partialorder %v994, 8.507059e+37
    %v996 = vand.u32 %v984, 2147483648
    %v997 = vor.u32 1.1754944e-38, %v996
    %v998 = vsel %vm995, %v997, %v993
    %v999 = vmul.f32 %v974, %v998
    %v1000 = vmin.f32 %v999, 1.0
    %v1001 = vmax.f32 %v1000, -1.0
    %v1002 = vmul.f32 %v668, %v668
    %v1003 = vmin.f32 16.0, %v1002
    %v1004 = vmul.f32 %v1003, 2.1237322e-06
    %v1005 = vadd.f32 %v1004, 0.00028619796
    %v1006 = vmul.f32 %v1003, %v1005
    %v1007 = vadd.f32 %v1006, 0.0036580483
    %v1008 = vmul.f32 %v1003, %v1007
    %v1009 = vadd.f32 %v1008, 0.05243302
    %v1010 = vmul.f32 %v1003, %v1009
    %v1011 = vadd.f32 %v1010, 0.18741608
    %v1012 = vmul.f32 %v1003, %v1011
    %v1013 = vadd.f32 %v1012, 1.1283791
    %v1014 = vmul.f32 %v668, %v1013
    %v1015 = vmul.f32 %v1003, 3.8918573e-05
    %v1016 = vadd.f32 %v1015, 0.001143296
    %v1017 = vmul.f32 %v1003, %v1016
    %v1018 = vadd.f32 %v1017, 0.014752088
    %v1019 = vmul.f32 %v1003, %v1018
    %v1020 = vadd.f32 %v1019, 0.112945676
    %v1021 = vmul.f32 %v1003, %v1020
    %v1022 = vadd.f32 %v1021, 0.4994258
    %v1023 = vmul.f32 %v1003, %v1022
    %v1024 = vadd.f32 %v1023, 1.0
    %v1025 = vrcp.pop %v1024
    %v1026 = vmul.f32 %v1024, %v1025
    %v1027 = vsub.f32 1.0, %v1026
    %v1028 = vmul.f32 %v1025, %v1027
    %v1029 = vadd.f32 %v1025, %v1028
    %vm1030 = vweird.f32 %v1024
    %vm1031 = vweird.f32 %v1025
    %vm1032 = vmor %vm1030, %vm1031
    %v1033 = vsel %vm1032, %v1025, %v1029
    %v1034 = vand.u32 2147483647, %v1024
    %vm1035 = vcmp.eq.f32.partialorder %v1034, 8.507059e+37
    %v1036 = vand.u32 %v1024, 2147483648
    %v1037 = vor.u32 1.1754944e-38, %v1036
    %v1038 = vsel %vm1035, %v1037, %v1033
    %v1039 = vmul.f32 %v1014, %v1038
    %v1040 = vmin.f32 %v1039, 1.0
    %v1041 = vmax.f32 %v1040, -1.0
    %v1042 = vmul.f32 %v669, %v669
    %v1043 = vmin.f32 16.0, %v1042
    %v1044 = vmul.f32 %v1043, 2.1237322e-06
    %v1045 = vadd.f32 %v1044, 0.00028619796
    %v1046 = vmul.f32 %v1043, %v1045
    %v1047 = vadd.f32 %v1046, 0.0036580483
    %v1048 = vmul.f32 %v1043, %v1047
    %v1049 = vadd.f32 %v1048, 0.05243302
    %v1050 = vmul.f32 %v1043, %v1049
    %v1051 = vadd.f32 %v1050, 0.18741608
    %v1052 = vmul.f32 %v1043, %v1051
    %v1053 = vadd.f32 %v1052, 1.1283791
    %v1054 = vmul.f32 %v669, %v1053
    %v1055 = vmul.f32 %v1043, 3.8918573e-05
    %v1056 = vadd.f32 %v1055, 0.001143296
    %v1057 = vmul.f32 %v1043, %v1056
    %v1058 = vadd.f32 %v1057, 0.014752088
    %v1059 = vmul.f32 %v1043, %v1058
    %v1060 = vadd.f32 %v1059, 0.112945676
    %v1061 = vmul.f32 %v1043, %v1060
    %v1062 = vadd.f32 %v1061, 0.4994258
    %v1063 = vmul.f32 %v1043, %v1062
    %v1064 = vadd.f32 %v1063, 1.0
    %v1065 = vrcp.pop %v1064
    %v1066 = vmul.f32 %v1064, %v1065
    %v1067 = vsub.f32 1.0, %v1066
    %v1068 = vmul.f32 %v1065, %v1067
    %v1069 = vadd.f32 %v1065, %v1068
    %vm1070 = vweird.f32 %v1064
    %vm1071 = vweird.f32 %v1065
    %vm1072 = vmor %vm1070, %vm1071
    %v1073 = vsel %vm1072, %v1065, %v1069
    %v1074 = vand.u32 2147483647, %v1064
    %vm1075 = vcmp.eq.f32.partialorder %v1074, 8.507059e+37
    %v1076 = vand.u32 %v1064, 2147483648
    %v1077 = vor.u32 1.1754944e-38, %v1076
    %v1078 = vsel %vm1075, %v1077, %v1073
    %v1079 = vmul.f32 %v1054, %v1078
    %v1080 = vmin.f32 %v1079, 1.0
    %v1081 = vmax.f32 %v1080, -1.0
    %v1082 = vmul.f32 %v670, %v670
    %v1083 = vmin.f32 16.0, %v1082
    %v1084 = vmul.f32 %v1083, 2.1237322e-06
    %v1085 = vadd.f32 %v1084, 0.00028619796
    %v1086 = vmul.f32 %v1083, %v1085
    %v1087 = vadd.f32 %v1086, 0.0036580483
    %v1088 = vmul.f32 %v1083, %v1087
    %v1089 = vadd.f32 %v1088, 0.05243302
    %v1090 = vmul.f32 %v1083, %v1089
    %v1091 = vadd.f32 %v1090, 0.18741608
    %v1092 = vmul.f32 %v1083, %v1091
    %v1093 = vadd.f32 %v1092, 1.1283791
    %v1094 = vmul.f32 %v670, %v1093
    %v1095 = vmul.f32 %v1083, 3.8918573e-05
    %v1096 = vadd.f32 %v1095, 0.001143296
    %v1097 = vmul.f32 %v1083, %v1096
    %v1098 = vadd.f32 %v1097, 0.014752088
    %v1099 = vmul.f32 %v1083, %v1098
    %v1100 = vadd.f32 %v1099, 0.112945676
    %v1101 = vmul.f32 %v1083, %v1100
    %v1102 = vadd.f32 %v1101, 0.4994258
    %v1103 = vmul.f32 %v1083, %v1102
    %v1104 = vadd.f32 %v1103, 1.0
    %v1105 = vrcp.pop %v1104
    %v1106 = vmul.f32 %v1104, %v1105
    %v1107 = vsub.f32 1.0, %v1106
    %v1108 = vmul.f32 %v1105, %v1107
    %v1109 = vadd.f32 %v1105, %v1108
    %vm1110 = vweird.f32 %v1104
    %vm1111 = vweird.f32 %v1105
    %vm1112 = vmor %vm1110, %vm1111
    %v1113 = vsel %vm1112, %v1105, %v1109
    %v1114 = vand.u32 2147483647, %v1104
    %vm1115 = vcmp.eq.f32.partialorder %v1114, 8.507059e+37
    %v1116 = vand.u32 %v1104, 2147483648
    %v1117 = vor.u32 1.1754944e-38, %v1116
    %v1118 = vsel %vm1115, %v1117, %v1113
    %v1119 = vmul.f32 %v1094, %v1118
    %v1120 = vmin.f32 %v1119, 1.0
    %v1121 = vmax.f32 %v1120, -1.0
    %v1122 = vmul.f32 %v671, %v671
    %v1123 = vmin.f32 16.0, %v1122
    %v1124 = vmul.f32 %v1123, 2.1237322e-06
    %v1125 = vadd.f32 %v1124, 0.00028619796
    %v1126 = vmul.f32 %v1123, %v1125
    %v1127 = vadd.f32 %v1126, 0.0036580483
    %v1128 = vmul.f32 %v1123, %v1127
    %v1129 = vadd.f32 %v1128, 0.05243302
    %v1130 = vmul.f32 %v1123, %v1129
    %v1131 = vadd.f32 %v1130, 0.18741608
    %v1132 = vmul.f32 %v1123, %v1131
    %v1133 = vadd.f32 %v1132, 1.1283791
    %v1134 = vmul.f32 %v671, %v1133
    %v1135 = vmul.f32 %v1123, 3.8918573e-05
    %v1136 = vadd.f32 %v1135, 0.001143296
    %v1137 = vmul.f32 %v1123, %v1136
    %v1138 = vadd.f32 %v1137, 0.014752088
    %v1139 = vmul.f32 %v1123, %v1138
    %v1140 = vadd.f32 %v1139, 0.112945676
    %v1141 = vmul.f32 %v1123, %v1140
    %v1142 = vadd.f32 %v1141, 0.4994258
    %v1143 = vmul.f32 %v1123, %v1142
    %v1144 = vadd.f32 %v1143, 1.0
    %v1145 = vrcp.pop %v1144
    %v1146 = vmul.f32 %v1144, %v1145
    %v1147 = vsub.f32 1.0, %v1146
    %v1148 = vmul.f32 %v1145, %v1147
    %v1149 = vadd.f32 %v1145, %v1148
    %vm1150 = vweird.f32 %v1144
    %vm1151 = vweird.f32 %v1145
    %vm1152 = vmor %vm1150, %vm1151
    %v1153 = vsel %vm1152, %v1145, %v1149
    %v1154 = vand.u32 2147483647, %v1144
    %vm1155 = vcmp.eq.f32.partialorder %v1154, 8.507059e+37
    %v1156 = vand.u32 %v1144, 2147483648
    %v1157 = vor.u32 1.1754944e-38, %v1156
    %v1158 = vsel %vm1155, %v1157, %v1153
    %v1159 = vmul.f32 %v1134, %v1158
    %v1160 = vmin.f32 %v1159, 1.0
    %v1161 = vmax.f32 %v1160, -1.0
    %v1162 = vmul.f32 %v672, %v672
    %v1163 = vmin.f32 16.0, %v1162
    %v1164 = vmul.f32 %v1163, 2.1237322e-06
    %v1165 = vadd.f32 %v1164, 0.00028619796
    %v1166 = vmul.f32 %v1163, %v1165
    %v1167 = vadd.f32 %v1166, 0.0036580483
    %v1168 = vmul.f32 %v1163, %v1167
    %v1169 = vadd.f32 %v1168, 0.05243302
    %v1170 = vmul.f32 %v1163, %v1169
    %v1171 = vadd.f32 %v1170, 0.18741608
    %v1172 = vmul.f32 %v1163, %v1171
    %v1173 = vadd.f32 %v1172, 1.1283791
    %v1174 = vmul.f32 %v672, %v1173
    %v1175 = vmul.f32 %v1163, 3.8918573e-05
    %v1176 = vadd.f32 %v1175, 0.001143296
    %v1177 = vmul.f32 %v1163, %v1176
    %v1178 = vadd.f32 %v1177, 0.014752088
    %v1179 = vmul.f32 %v1163, %v1178
    %v1180 = vadd.f32 %v1179, 0.112945676
    %v1181 = vmul.f32 %v1163, %v1180
    %v1182 = vadd.f32 %v1181, 0.4994258
    %v1183 = vmul.f32 %v1163, %v1182
    %v1184 = vadd.f32 %v1183, 1.0
    %v1185 = vrcp.pop %v1184
    %v1186 = vmul.f32 %v1184, %v1185
    %v1187 = vsub.f32 1.0, %v1186
    %v1188 = vmul.f32 %v1185, %v1187
    %v1189 = vadd.f32 %v1185, %v1188
    %vm1190 = vweird.f32 %v1184
    %vm1191 = vweird.f32 %v1185
    %vm1192 = vmor %vm1190, %vm1191
    %v1193 = vsel %vm1192, %v1185, %v1189
    %v1194 = vand.u32 2147483647, %v1184
    %vm1195 = vcmp.eq.f32.partialorder %v1194, 8.507059e+37
    %v1196 = vand.u32 %v1184, 2147483648
    %v1197 = vor.u32 1.1754944e-38, %v1196
    %v1198 = vsel %vm1195, %v1197, %v1193
    %v1199 = vmul.f32 %v1174, %v1198
    %v1200 = vmin.f32 %v1199, 1.0
    %v1201 = vmax.f32 %v1200, -1.0
    %v1202 = vmul.f32 %v673, %v673
    %v1203 = vmin.f32 16.0, %v1202
    %v1204 = vmul.f32 %v1203, 2.1237322e-06
    %v1205 = vadd.f32 %v1204, 0.00028619796
    %v1206 = vmul.f32 %v1203, %v1205
    %v1207 = vadd.f32 %v1206, 0.0036580483
    %v1208 = vmul.f32 %v1203, %v1207
    %v1209 = vadd.f32 %v1208, 0.05243302
    %v1210 = vmul.f32 %v1203, %v1209
    %v1211 = vadd.f32 %v1210, 0.18741608
    %v1212 = vmul.f32 %v1203, %v1211
    %v1213 = vadd.f32 %v1212, 1.1283791
    %v1214 = vmul.f32 %v673, %v1213
    %v1215 = vmul.f32 %v1203, 3.8918573e-05
    %v1216 = vadd.f32 %v1215, 0.001143296
    %v1217 = vmul.f32 %v1203, %v1216
    %v1218 = vadd.f32 %v1217, 0.014752088
    %v1219 = vmul.f32 %v1203, %v1218
    %v1220 = vadd.f32 %v1219, 0.112945676
    %v1221 = vmul.f32 %v1203, %v1220
    %v1222 = vadd.f32 %v1221, 0.4994258
    %v1223 = vmul.f32 %v1203, %v1222
    %v1224 = vadd.f32 %v1223, 1.0
    %v1225 = vrcp.pop %v1224
    %v1226 = vmul.f32 %v1224, %v1225
    %v1227 = vsub.f32 1.0, %v1226
    %v1228 = vmul.f32 %v1225, %v1227
    %v1229 = vadd.f32 %v1225, %v1228
    %vm1230 = vweird.f32 %v1224
    %vm1231 = vweird.f32 %v1225
    %vm1232 = vmor %vm1230, %vm1231
    %v1233 = vsel %vm1232, %v1225, %v1229
    %v1234 = vand.u32 2147483647, %v1224
    %vm1235 = vcmp.eq.f32.partialorder %v1234, 8.507059e+37
    %v1236 = vand.u32 %v1224, 2147483648
    %v1237 = vor.u32 1.1754944e-38, %v1236
    %v1238 = vsel %vm1235, %v1237, %v1233
    %v1239 = vmul.f32 %v1214, %v1238
    %v1240 = vmin.f32 %v1239, 1.0
    %v1241 = vmax.f32 %v1240, -1.0
    %v1242 = vmul.f32 %v674, %v674
    %v1243 = vmin.f32 16.0, %v1242
    %v1244 = vmul.f32 %v1243, 2.1237322e-06
    %v1245 = vadd.f32 %v1244, 0.00028619796
    %v1246 = vmul.f32 %v1243, %v1245
    %v1247 = vadd.f32 %v1246, 0.0036580483
    %v1248 = vmul.f32 %v1243, %v1247
    %v1249 = vadd.f32 %v1248, 0.05243302
    %v1250 = vmul.f32 %v1243, %v1249
    %v1251 = vadd.f32 %v1250, 0.18741608
    %v1252 = vmul.f32 %v1243, %v1251
    %v1253 = vadd.f32 %v1252, 1.1283791
    %v1254 = vmul.f32 %v674, %v1253
    %v1255 = vmul.f32 %v1243, 3.8918573e-05
    %v1256 = vadd.f32 %v1255, 0.001143296
    %v1257 = vmul.f32 %v1243, %v1256
    %v1258 = vadd.f32 %v1257, 0.014752088
    %v1259 = vmul.f32 %v1243, %v1258
    %v1260 = vadd.f32 %v1259, 0.112945676
    %v1261 = vmul.f32 %v1243, %v1260
    %v1262 = vadd.f32 %v1261, 0.4994258
    %v1263 = vmul.f32 %v1243, %v1262
    %v1264 = vadd.f32 %v1263, 1.0
    %v1265 = vrcp.pop %v1264
    %v1266 = vmul.f32 %v1264, %v1265
    %v1267 = vsub.f32 1.0, %v1266
    %v1268 = vmul.f32 %v1265, %v1267
    %v1269 = vadd.f32 %v1265, %v1268
    %vm1270 = vweird.f32 %v1264
    %vm1271 = vweird.f32 %v1265
    %vm1272 = vmor %vm1270, %vm1271
    %v1273 = vsel %vm1272, %v1265, %v1269
    %v1274 = vand.u32 2147483647, %v1264
    %vm1275 = vcmp.eq.f32.partialorder %v1274, 8.507059e+37
    %v1276 = vand.u32 %v1264, 2147483648
    %v1277 = vor.u32 1.1754944e-38, %v1276
    %v1278 = vsel %vm1275, %v1277, %v1273
    %v1279 = vmul.f32 %v1254, %v1278
    %v1280 = vmin.f32 %v1279, 1.0
    %v1281 = vmax.f32 %v1280, -1.0
    %v1282 = vmul.f32 %v675, %v675
    %v1283 = vmin.f32 16.0, %v1282
    %v1284 = vmul.f32 %v1283, 2.1237322e-06
    %v1285 = vadd.f32 %v1284, 0.00028619796
    %v1286 = vmul.f32 %v1283, %v1285
    %v1287 = vadd.f32 %v1286, 0.0036580483
    %v1288 = vmul.f32 %v1283, %v1287
    %v1289 = vadd.f32 %v1288, 0.05243302
    %v1290 = vmul.f32 %v1283, %v1289
    %v1291 = vadd.f32 %v1290, 0.18741608
    %v1292 = vmul.f32 %v1283, %v1291
    %v1293 = vadd.f32 %v1292, 1.1283791
    %v1294 = vmul.f32 %v675, %v1293
    %v1295 = vmul.f32 %v1283, 3.8918573e-05
    %v1296 = vadd.f32 %v1295, 0.001143296
    %v1297 = vmul.f32 %v1283, %v1296
    %v1298 = vadd.f32 %v1297, 0.014752088
    %v1299 = vmul.f32 %v1283, %v1298
    %v1300 = vadd.f32 %v1299, 0.112945676
    %v1301 = vmul.f32 %v1283, %v1300
    %v1302 = vadd.f32 %v1301, 0.4994258
    %v1303 = vmul.f32 %v1283, %v1302
    %v1304 = vadd.f32 %v1303, 1.0
    %v1305 = vrcp.pop %v1304
    %v1306 = vmul.f32 %v1304, %v1305
    %v1307 = vsub.f32 1.0, %v1306
    %v1308 = vmul.f32 %v1305, %v1307
    %v1309 = vadd.f32 %v1305, %v1308
    %vm1310 = vweird.f32 %v1304
    %vm1311 = vweird.f32 %v1305
    %vm1312 = vmor %vm1310, %vm1311
    %v1313 = vsel %vm1312, %v1305, %v1309
    %v1314 = vand.u32 2147483647, %v1304
    %vm1315 = vcmp.eq.f32.partialorder %v1314, 8.507059e+37
    %v1316 = vand.u32 %v1304, 2147483648
    %v1317 = vor.u32 1.1754944e-38, %v1316
    %v1318 = vsel %vm1315, %v1317, %v1313
    %v1319 = vmul.f32 %v1294, %v1318
    %v1320 = vmin.f32 %v1319, 1.0
    %v1321 = vmax.f32 %v1320, -1.0
    %v1322 = vmul.f32 %v676, %v676
    %v1323 = vmin.f32 16.0, %v1322
    %v1324 = vmul.f32 %v1323, 2.1237322e-06
    %v1325 = vadd.f32 %v1324, 0.00028619796
    %v1326 = vmul.f32 %v1323, %v1325
    %v1327 = vadd.f32 %v1326, 0.0036580483
    %v1328 = vmul.f32 %v1323, %v1327
    %v1329 = vadd.f32 %v1328, 0.05243302
    %v1330 = vmul.f32 %v1323, %v1329
    %v1331 = vadd.f32 %v1330, 0.18741608
    %v1332 = vmul.f32 %v1323, %v1331
    %v1333 = vadd.f32 %v1332, 1.1283791
    %v1334 = vmul.f32 %v676, %v1333
    %v1335 = vmul.f32 %v1323, 3.8918573e-05
    %v1336 = vadd.f32 %v1335, 0.001143296
    %v1337 = vmul.f32 %v1323, %v1336
    %v1338 = vadd.f32 %v1337, 0.014752088
    %v1339 = vmul.f32 %v1323, %v1338
    %v1340 = vadd.f32 %v1339, 0.112945676
    %v1341 = vmul.f32 %v1323, %v1340
    %v1342 = vadd.f32 %v1341, 0.4994258
    %v1343 = vmul.f32 %v1323, %v1342
    %v1344 = vadd.f32 %v1343, 1.0
    %v1345 = vrcp.pop %v1344
    %v1346 = vmul.f32 %v1344, %v1345
    %v1347 = vsub.f32 1.0, %v1346
    %v1348 = vmul.f32 %v1345, %v1347
    %v1349 = vadd.f32 %v1345, %v1348
    %vm1350 = vweird.f32 %v1344
    %vm1351 = vweird.f32 %v1345
    %vm1352 = vmor %vm1350, %vm1351
    %v1353 = vsel %vm1352, %v1345, %v1349
    %v1354 = vand.u32 2147483647, %v1344
    %vm1355 = vcmp.eq.f32.partialorder %v1354, 8.507059e+37
    %v1356 = vand.u32 %v1344, 2147483648
    %v1357 = vor.u32 1.1754944e-38, %v1356
    %v1358 = vsel %vm1355, %v1357, %v1353
    %v1359 = vmul.f32 %v1334, %v1358
    %v1360 = vmin.f32 %v1359, 1.0
    %v1361 = vmax.f32 %v1360, -1.0
    %v1362 = vmul.f32 %v677, %v677
    %v1363 = vmin.f32 16.0, %v1362
    %v1364 = vmul.f32 %v1363, 2.1237322e-06
    %v1365 = vadd.f32 %v1364, 0.00028619796
    %v1366 = vmul.f32 %v1363, %v1365
    %v1367 = vadd.f32 %v1366, 0.0036580483
    %v1368 = vmul.f32 %v1363, %v1367
    %v1369 = vadd.f32 %v1368, 0.05243302
    %v1370 = vmul.f32 %v1363, %v1369
    %v1371 = vadd.f32 %v1370, 0.18741608
    %v1372 = vmul.f32 %v1363, %v1371
    %v1373 = vadd.f32 %v1372, 1.1283791
    %v1374 = vmul.f32 %v677, %v1373
    %v1375 = vmul.f32 %v1363, 3.8918573e-05
    %v1376 = vadd.f32 %v1375, 0.001143296
    %v1377 = vmul.f32 %v1363, %v1376
    %v1378 = vadd.f32 %v1377, 0.014752088
    %v1379 = vmul.f32 %v1363, %v1378
    %v1380 = vadd.f32 %v1379, 0.112945676
    %v1381 = vmul.f32 %v1363, %v1380
    %v1382 = vadd.f32 %v1381, 0.4994258
    %v1383 = vmul.f32 %v1363, %v1382
    %v1384 = vadd.f32 %v1383, 1.0
    %v1385 = vrcp.pop %v1384
    %v1386 = vmul.f32 %v1384, %v1385
    %v1387 = vsub.f32 1.0, %v1386
    %v1388 = vmul.f32 %v1385, %v1387
    %v1389 = vadd.f32 %v1385, %v1388
    %vm1390 = vweird.f32 %v1384
    %vm1391 = vweird.f32 %v1385
    %vm1392 = vmor %vm1390, %vm1391
    %v1393 = vsel %vm1392, %v1385, %v1389
    %v1394 = vand.u32 2147483647, %v1384
    %vm1395 = vcmp.eq.f32.partialorder %v1394, 8.507059e+37
    %v1396 = vand.u32 %v1384, 2147483648
    %v1397 = vor.u32 1.1754944e-38, %v1396
    %v1398 = vsel %vm1395, %v1397, %v1393
    %v1399 = vmul.f32 %v1374, %v1398
    %v1400 = vmin.f32 %v1399, 1.0
    %v1401 = vmax.f32 %v1400, -1.0
    %v1402 = vmul.f32 %v678, %v678
    %v1403 = vmin.f32 16.0, %v1402
    %v1404 = vmul.f32 %v1403, 2.1237322e-06
    %v1405 = vadd.f32 %v1404, 0.00028619796
    %v1406 = vmul.f32 %v1403, %v1405
    %v1407 = vadd.f32 %v1406, 0.0036580483
    %v1408 = vmul.f32 %v1403, %v1407
    %v1409 = vadd.f32 %v1408, 0.05243302
    %v1410 = vmul.f32 %v1403, %v1409
    %v1411 = vadd.f32 %v1410, 0.18741608
    %v1412 = vmul.f32 %v1403, %v1411
    %v1413 = vadd.f32 %v1412, 1.1283791
    %v1414 = vmul.f32 %v678, %v1413
    %v1415 = vmul.f32 %v1403, 3.8918573e-05
    %v1416 = vadd.f32 %v1415, 0.001143296
    %v1417 = vmul.f32 %v1403, %v1416
    %v1418 = vadd.f32 %v1417, 0.014752088
    %v1419 = vmul.f32 %v1403, %v1418
    %v1420 = vadd.f32 %v1419, 0.112945676
    %v1421 = vmul.f32 %v1403, %v1420
    %v1422 = vadd.f32 %v1421, 0.4994258
    %v1423 = vmul.f32 %v1403, %v1422
    %v1424 = vadd.f32 %v1423, 1.0
    %v1425 = vrcp.pop %v1424
    %v1426 = vmul.f32 %v1424, %v1425
    %v1427 = vsub.f32 1.0, %v1426
    %v1428 = vmul.f32 %v1425, %v1427
    %v1429 = vadd.f32 %v1425, %v1428
    %vm1430 = vweird.f32 %v1424
    %vm1431 = vweird.f32 %v1425
    %vm1432 = vmor %vm1430, %vm1431
    %v1433 = vsel %vm1432, %v1425, %v1429
    %v1434 = vand.u32 2147483647, %v1424
    %vm1435 = vcmp.eq.f32.partialorder %v1434, 8.507059e+37
    %v1436 = vand.u32 %v1424, 2147483648
    %v1437 = vor.u32 1.1754944e-38, %v1436
    %v1438 = vsel %vm1435, %v1437, %v1433
    %v1439 = vmul.f32 %v1414, %v1438
    %v1440 = vmin.f32 %v1439, 1.0
    %v1441 = vmax.f32 %v1440, -1.0
    %v1442 = vmul.f32 %v679, %v679
    %v1443 = vmin.f32 16.0, %v1442
    %v1444 = vmul.f32 %v1443, 2.1237322e-06
    %v1445 = vadd.f32 %v1444, 0.00028619796
    %v1446 = vmul.f32 %v1443, %v1445
    %v1447 = vadd.f32 %v1446, 0.0036580483
    %v1448 = vmul.f32 %v1443, %v1447
    %v1449 = vadd.f32 %v1448, 0.05243302
    %v1450 = vmul.f32 %v1443, %v1449
    %v1451 = vadd.f32 %v1450, 0.18741608
    %v1452 = vmul.f32 %v1443, %v1451
    %v1453 = vadd.f32 %v1452, 1.1283791
    %v1454 = vmul.f32 %v679, %v1453
    %v1455 = vmul.f32 %v1443, 3.8918573e-05
    %v1456 = vadd.f32 %v1455, 0.001143296
    %v1457 = vmul.f32 %v1443, %v1456
    %v1458 = vadd.f32 %v1457, 0.014752088
    %v1459 = vmul.f32 %v1443, %v1458
    %v1460 = vadd.f32 %v1459, 0.112945676
    %v1461 = vmul.f32 %v1443, %v1460
    %v1462 = vadd.f32 %v1461, 0.4994258
    %v1463 = vmul.f32 %v1443, %v1462
    %v1464 = vadd.f32 %v1463, 1.0
    %v1465 = vrcp.pop %v1464
    %v1466 = vmul.f32 %v1464, %v1465
    %v1467 = vsub.f32 1.0, %v1466
    %v1468 = vmul.f32 %v1465, %v1467
    %v1469 = vadd.f32 %v1465, %v1468
    %vm1470 = vweird.f32 %v1464
    %vm1471 = vweird.f32 %v1465
    %vm1472 = vmor %vm1470, %vm1471
    %v1473 = vsel %vm1472, %v1465, %v1469
    %v1474 = vand.u32 2147483647, %v1464
    %vm1475 = vcmp.eq.f32.partialorder %v1474, 8.507059e+37
    %v1476 = vand.u32 %v1464, 2147483648
    %v1477 = vor.u32 1.1754944e-38, %v1476
    %v1478 = vsel %vm1475, %v1477, %v1473
    %v1479 = vmul.f32 %v1454, %v1478
    %v1480 = vmin.f32 %v1479, 1.0
    %v1481 = vmax.f32 %v1480, -1.0
    %v1482 = vmul.f32 %v680, %v680
    %v1483 = vmin.f32 16.0, %v1482
    %v1484 = vmul.f32 %v1483, 2.1237322e-06
    %v1485 = vadd.f32 %v1484, 0.00028619796
    %v1486 = vmul.f32 %v1483, %v1485
    %v1487 = vadd.f32 %v1486, 0.0036580483
    %v1488 = vmul.f32 %v1483, %v1487
    %v1489 = vadd.f32 %v1488, 0.05243302
    %v1490 = vmul.f32 %v1483, %v1489
    %v1491 = vadd.f32 %v1490, 0.18741608
    %v1492 = vmul.f32 %v1483, %v1491
    %v1493 = vadd.f32 %v1492, 1.1283791
    %v1494 = vmul.f32 %v680, %v1493
    %v1495 = vmul.f32 %v1483, 3.8918573e-05
    %v1496 = vadd.f32 %v1495, 0.001143296
    %v1497 = vmul.f32 %v1483, %v1496
    %v1498 = vadd.f32 %v1497, 0.014752088
    %v1499 = vmul.f32 %v1483, %v1498
    %v1500 = vadd.f32 %v1499, 0.112945676
    %v1501 = vmul.f32 %v1483, %v1500
    %v1502 = vadd.f32 %v1501, 0.4994258
    %v1503 = vmul.f32 %v1483, %v1502
    %v1504 = vadd.f32 %v1503, 1.0
    %v1505 = vrcp.pop %v1504
    %v1506 = vmul.f32 %v1504, %v1505
    %v1507 = vsub.f32 1.0, %v1506
    %v1508 = vmul.f32 %v1505, %v1507
    %v1509 = vadd.f32 %v1505, %v1508
    %vm1510 = vweird.f32 %v1504
    %vm1511 = vweird.f32 %v1505
    %vm1512 = vmor %vm1510, %vm1511
    %v1513 = vsel %vm1512, %v1505, %v1509
    %v1514 = vand.u32 2147483647, %v1504
    %vm1515 = vcmp.eq.f32.partialorder %v1514, 8.507059e+37
    %v1516 = vand.u32 %v1504, 2147483648
    %v1517 = vor.u32 1.1754944e-38, %v1516
    %v1518 = vsel %vm1515, %v1517, %v1513
    %v1519 = vmul.f32 %v1494, %v1518
    %v1520 = vmin.f32 %v1519, 1.0
    %v1521 = vmax.f32 %v1520, -1.0
    %v1522 = vmul.f32 %v681, %v681
    %v1523 = vmin.f32 16.0, %v1522
    %v1524 = vmul.f32 %v1523, 2.1237322e-06
    %v1525 = vadd.f32 %v1524, 0.00028619796
    %v1526 = vmul.f32 %v1523, %v1525
    %v1527 = vadd.f32 %v1526, 0.0036580483
    %v1528 = vmul.f32 %v1523, %v1527
    %v1529 = vadd.f32 %v1528, 0.05243302
    %v1530 = vmul.f32 %v1523, %v1529
    %v1531 = vadd.f32 %v1530, 0.18741608
    %v1532 = vmul.f32 %v1523, %v1531
    %v1533 = vadd.f32 %v1532, 1.1283791
    %v1534 = vmul.f32 %v681, %v1533
    %v1535 = vmul.f32 %v1523, 3.8918573e-05
    %v1536 = vadd.f32 %v1535, 0.001143296
    %v1537 = vmul.f32 %v1523, %v1536
    %v1538 = vadd.f32 %v1537, 0.014752088
    %v1539 = vmul.f32 %v1523, %v1538
    %v1540 = vadd.f32 %v1539, 0.112945676
    %v1541 = vmul.f32 %v1523, %v1540
    %v1542 = vadd.f32 %v1541, 0.4994258
    %v1543 = vmul.f32 %v1523, %v1542
    %v1544 = vadd.f32 %v1543, 1.0
    %v1545 = vrcp.pop %v1544
    %v1546 = vmul.f32 %v1544, %v1545
    %v1547 = vsub.f32 1.0, %v1546
    %v1548 = vmul.f32 %v1545, %v1547
    %v1549 = vadd.f32 %v1545, %v1548
    %vm1550 = vweird.f32 %v1544
    %vm1551 = vweird.f32 %v1545
    %vm1552 = vmor %vm1550, %vm1551
    %v1553 = vsel %vm1552, %v1545, %v1549
    %v1554 = vand.u32 2147483647, %v1544
    %vm1555 = vcmp.eq.f32.partialorder %v1554, 8.507059e+37
    %v1556 = vand.u32 %v1544, 2147483648
    %v1557 = vor.u32 1.1754944e-38, %v1556
    %v1558 = vsel %vm1555, %v1557, %v1553
    %v1559 = vmul.f32 %v1534, %v1558
    %v1560 = vmin.f32 %v1559, 1.0
    %v1561 = vmax.f32 %v1560, -1.0
    %v1562 = vmul.f32 %v682, %v682
    %v1563 = vmin.f32 16.0, %v1562
    %v1564 = vmul.f32 %v1563, 2.1237322e-06
    %v1565 = vadd.f32 %v1564, 0.00028619796
    %v1566 = vmul.f32 %v1563, %v1565
    %v1567 = vadd.f32 %v1566, 0.0036580483
    %v1568 = vmul.f32 %v1563, %v1567
    %v1569 = vadd.f32 %v1568, 0.05243302
    %v1570 = vmul.f32 %v1563, %v1569
    %v1571 = vadd.f32 %v1570, 0.18741608
    %v1572 = vmul.f32 %v1563, %v1571
    %v1573 = vadd.f32 %v1572, 1.1283791
    %v1574 = vmul.f32 %v682, %v1573
    %v1575 = vmul.f32 %v1563, 3.8918573e-05
    %v1576 = vadd.f32 %v1575, 0.001143296
    %v1577 = vmul.f32 %v1563, %v1576
    %v1578 = vadd.f32 %v1577, 0.014752088
    %v1579 = vmul.f32 %v1563, %v1578
    %v1580 = vadd.f32 %v1579, 0.112945676
    %v1581 = vmul.f32 %v1563, %v1580
    %v1582 = vadd.f32 %v1581, 0.4994258
    %v1583 = vmul.f32 %v1563, %v1582
    %v1584 = vadd.f32 %v1583, 1.0
    %v1585 = vrcp.pop %v1584
    %v1586 = vmul.f32 %v1584, %v1585
    %v1587 = vsub.f32 1.0, %v1586
    %v1588 = vmul.f32 %v1585, %v1587
    %v1589 = vadd.f32 %v1585, %v1588
    %vm1590 = vweird.f32 %v1584
    %vm1591 = vweird.f32 %v1585
    %vm1592 = vmor %vm1590, %vm1591
    %v1593 = vsel %vm1592, %v1585, %v1589
    %v1594 = vand.u32 2147483647, %v1584
    %vm1595 = vcmp.eq.f32.partialorder %v1594, 8.507059e+37
    %v1596 = vand.u32 %v1584, 2147483648
    %v1597 = vor.u32 1.1754944e-38, %v1596
    %v1598 = vsel %vm1595, %v1597, %v1593
    %v1599 = vmul.f32 %v1574, %v1598
    %v1600 = vmin.f32 %v1599, 1.0
    %v1601 = vmax.f32 %v1600, -1.0
    %v1602 = vmul.f32 %v683, %v683
    %v1603 = vmin.f32 16.0, %v1602
    %v1604 = vmul.f32 %v1603, 2.1237322e-06
    %v1605 = vadd.f32 %v1604, 0.00028619796
    %v1606 = vmul.f32 %v1603, %v1605
    %v1607 = vadd.f32 %v1606, 0.0036580483
    %v1608 = vmul.f32 %v1603, %v1607
    %v1609 = vadd.f32 %v1608, 0.05243302
    %v1610 = vmul.f32 %v1603, %v1609
    %v1611 = vadd.f32 %v1610, 0.18741608
    %v1612 = vmul.f32 %v1603, %v1611
    %v1613 = vadd.f32 %v1612, 1.1283791
    %v1614 = vmul.f32 %v683, %v1613
    %v1615 = vmul.f32 %v1603, 3.8918573e-05
    %v1616 = vadd.f32 %v1615, 0.001143296
    %v1617 = vmul.f32 %v1603, %v1616
    %v1618 = vadd.f32 %v1617, 0.014752088
    %v1619 = vmul.f32 %v1603, %v1618
    %v1620 = vadd.f32 %v1619, 0.112945676
    %v1621 = vmul.f32 %v1603, %v1620
    %v1622 = vadd.f32 %v1621, 0.4994258
    %v1623 = vmul.f32 %v1603, %v1622
    %v1624 = vadd.f32 %v1623, 1.0
    %v1625 = vrcp.pop %v1624
    %v1626 = vmul.f32 %v1624, %v1625
    %v1627 = vsub.f32 1.0, %v1626
    %v1628 = vmul.f32 %v1625, %v1627
    %v1629 = vadd.f32 %v1625, %v1628
    %vm1630 = vweird.f32 %v1624
    %vm1631 = vweird.f32 %v1625
    %vm1632 = vmor %vm1630, %vm1631
    %v1633 = vsel %vm1632, %v1625, %v1629
    %v1634 = vand.u32 2147483647, %v1624
    %vm1635 = vcmp.eq.f32.partialorder %v1634, 8.507059e+37
    %v1636 = vand.u32 %v1624, 2147483648
    %v1637 = vor.u32 1.1754944e-38, %v1636
    %v1638 = vsel %vm1635, %v1637, %v1633
    %v1639 = vmul.f32 %v1614, %v1638
    %v1640 = vmin.f32 %v1639, 1.0
    %v1641 = vmax.f32 %v1640, -1.0
    %v1642 = vmul.f32 %v684, %v684
    %v1643 = vmin.f32 16.0, %v1642
    %v1644 = vmul.f32 %v1643, 2.1237322e-06
    %v1645 = vadd.f32 %v1644, 0.00028619796
    %v1646 = vmul.f32 %v1643, %v1645
    %v1647 = vadd.f32 %v1646, 0.0036580483
    %v1648 = vmul.f32 %v1643, %v1647
    %v1649 = vadd.f32 %v1648, 0.05243302
    %v1650 = vmul.f32 %v1643, %v1649
    %v1651 = vadd.f32 %v1650, 0.18741608
    %v1652 = vmul.f32 %v1643, %v1651
    %v1653 = vadd.f32 %v1652, 1.1283791
    %v1654 = vmul.f32 %v684, %v1653
    %v1655 = vmul.f32 %v1643, 3.8918573e-05
    %v1656 = vadd.f32 %v1655, 0.001143296
    %v1657 = vmul.f32 %v1643, %v1656
    %v1658 = vadd.f32 %v1657, 0.014752088
    %v1659 = vmul.f32 %v1643, %v1658
    %v1660 = vadd.f32 %v1659, 0.112945676
    %v1661 = vmul.f32 %v1643, %v1660
    %v1662 = vadd.f32 %v1661, 0.4994258
    %v1663 = vmul.f32 %v1643, %v1662
    %v1664 = vadd.f32 %v1663, 1.0
    %v1665 = vrcp.pop %v1664
    %v1666 = vmul.f32 %v1664, %v1665
    %v1667 = vsub.f32 1.0, %v1666
    %v1668 = vmul.f32 %v1665, %v1667
    %v1669 = vadd.f32 %v1665, %v1668
    %vm1670 = vweird.f32 %v1664
    %vm1671 = vweird.f32 %v1665
    %vm1672 = vmor %vm1670, %vm1671
    %v1673 = vsel %vm1672, %v1665, %v1669
    %v1674 = vand.u32 2147483647, %v1664
    %vm1675 = vcmp.eq.f32.partialorder %v1674, 8.507059e+37
    %v1676 = vand.u32 %v1664, 2147483648
    %v1677 = vor.u32 1.1754944e-38, %v1676
    %v1678 = vsel %vm1675, %v1677, %v1673
    %v1679 = vmul.f32 %v1654, %v1678
    %v1680 = vmin.f32 %v1679, 1.0
    %v1681 = vmax.f32 %v1680, -1.0
    %v1682 = vmul.f32 %v685, %v685
    %v1683 = vmin.f32 16.0, %v1682
    %v1684 = vmul.f32 %v1683, 2.1237322e-06
    %v1685 = vadd.f32 %v1684, 0.00028619796
    %v1686 = vmul.f32 %v1683, %v1685
    %v1687 = vadd.f32 %v1686, 0.0036580483
    %v1688 = vmul.f32 %v1683, %v1687
    %v1689 = vadd.f32 %v1688, 0.05243302
    %v1690 = vmul.f32 %v1683, %v1689
    %v1691 = vadd.f32 %v1690, 0.18741608
    %v1692 = vmul.f32 %v1683, %v1691
    %v1693 = vadd.f32 %v1692, 1.1283791
    %v1694 = vmul.f32 %v685, %v1693
    %v1695 = vmul.f32 %v1683, 3.8918573e-05
    %v1696 = vadd.f32 %v1695, 0.001143296
    %v1697 = vmul.f32 %v1683, %v1696
    %v1698 = vadd.f32 %v1697, 0.014752088
    %v1699 = vmul.f32 %v1683, %v1698
    %v1700 = vadd.f32 %v1699, 0.112945676
    %v1701 = vmul.f32 %v1683, %v1700
    %v1702 = vadd.f32 %v1701, 0.4994258
    %v1703 = vmul.f32 %v1683, %v1702
    %v1704 = vadd.f32 %v1703, 1.0
    %v1705 = vrcp.pop %v1704
    %v1706 = vmul.f32 %v1704, %v1705
    %v1707 = vsub.f32 1.0, %v1706
    %v1708 = vmul.f32 %v1705, %v1707
    %v1709 = vadd.f32 %v1705, %v1708
    %vm1710 = vweird.f32 %v1704
    %vm1711 = vweird.f32 %v1705
    %vm1712 = vmor %vm1710, %vm1711
    %v1713 = vsel %vm1712, %v1705, %v1709
    %v1714 = vand.u32 2147483647, %v1704
    %vm1715 = vcmp.eq.f32.partialorder %v1714, 8.507059e+37
    %v1716 = vand.u32 %v1704, 2147483648
    %v1717 = vor.u32 1.1754944e-38, %v1716
    %v1718 = vsel %vm1715, %v1717, %v1713
    %v1719 = vmul.f32 %v1694, %v1718
    %v1720 = vmin.f32 %v1719, 1.0
    %v1721 = vmax.f32 %v1720, -1.0
    %v1722 = vmul.f32 %v686, %v686
    %v1723 = vmin.f32 16.0, %v1722
    %v1724 = vmul.f32 %v1723, 2.1237322e-06
    %v1725 = vadd.f32 %v1724, 0.00028619796
    %v1726 = vmul.f32 %v1723, %v1725
    %v1727 = vadd.f32 %v1726, 0.0036580483
    %v1728 = vmul.f32 %v1723, %v1727
    %v1729 = vadd.f32 %v1728, 0.05243302
    %v1730 = vmul.f32 %v1723, %v1729
    %v1731 = vadd.f32 %v1730, 0.18741608
    %v1732 = vmul.f32 %v1723, %v1731
    %v1733 = vadd.f32 %v1732, 1.1283791
    %v1734 = vmul.f32 %v686, %v1733
    %v1735 = vmul.f32 %v1723, 3.8918573e-05
    %v1736 = vadd.f32 %v1735, 0.001143296
    %v1737 = vmul.f32 %v1723, %v1736
    %v1738 = vadd.f32 %v1737, 0.014752088
    %v1739 = vmul.f32 %v1723, %v1738
    %v1740 = vadd.f32 %v1739, 0.112945676
    %v1741 = vmul.f32 %v1723, %v1740
    %v1742 = vadd.f32 %v1741, 0.4994258
    %v1743 = vmul.f32 %v1723, %v1742
    %v1744 = vadd.f32 %v1743, 1.0
    %v1745 = vrcp.pop %v1744
    %v1746 = vmul.f32 %v1744, %v1745
    %v1747 = vsub.f32 1.0, %v1746
    %v1748 = vmul.f32 %v1745, %v1747
    %v1749 = vadd.f32 %v1745, %v1748
    %vm1750 = vweird.f32 %v1744
    %vm1751 = vweird.f32 %v1745
    %vm1752 = vmor %vm1750, %vm1751
    %v1753 = vsel %vm1752, %v1745, %v1749
    %v1754 = vand.u32 2147483647, %v1744
    %vm1755 = vcmp.eq.f32.partialorder %v1754, 8.507059e+37
    %v1756 = vand.u32 %v1744, 2147483648
    %v1757 = vor.u32 1.1754944e-38, %v1756
    %v1758 = vsel %vm1755, %v1757, %v1753
    %v1759 = vmul.f32 %v1734, %v1758
    %v1760 = vmin.f32 %v1759, 1.0
    %v1761 = vmax.f32 %v1760, -1.0
    %v1762 = vmul.f32 %v687, %v687
    %v1763 = vmin.f32 16.0, %v1762
    %v1764 = vmul.f32 %v1763, 2.1237322e-06
    %v1765 = vadd.f32 %v1764, 0.00028619796
    %v1766 = vmul.f32 %v1763, %v1765
    %v1767 = vadd.f32 %v1766, 0.0036580483
    %v1768 = vmul.f32 %v1763, %v1767
    %v1769 = vadd.f32 %v1768, 0.05243302
    %v1770 = vmul.f32 %v1763, %v1769
    %v1771 = vadd.f32 %v1770, 0.18741608
    %v1772 = vmul.f32 %v1763, %v1771
    %v1773 = vadd.f32 %v1772, 1.1283791
    %v1774 = vmul.f32 %v687, %v1773
    %v1775 = vmul.f32 %v1763, 3.8918573e-05
    %v1776 = vadd.f32 %v1775, 0.001143296
    %v1777 = vmul.f32 %v1763, %v1776
    %v1778 = vadd.f32 %v1777, 0.014752088
    %v1779 = vmul.f32 %v1763, %v1778
    %v1780 = vadd.f32 %v1779, 0.112945676
    %v1781 = vmul.f32 %v1763, %v1780
    %v1782 = vadd.f32 %v1781, 0.4994258
    %v1783 = vmul.f32 %v1763, %v1782
    %v1784 = vadd.f32 %v1783, 1.0
    %v1785 = vrcp.pop %v1784
    %v1786 = vmul.f32 %v1784, %v1785
    %v1787 = vsub.f32 1.0, %v1786
    %v1788 = vmul.f32 %v1785, %v1787
    %v1789 = vadd.f32 %v1785, %v1788
    %vm1790 = vweird.f32 %v1784
    %vm1791 = vweird.f32 %v1785
    %vm1792 = vmor %vm1790, %vm1791
    %v1793 = vsel %vm1792, %v1785, %v1789
    %v1794 = vand.u32 2147483647, %v1784
    %vm1795 = vcmp.eq.f32.partialorder %v1794, 8.507059e+37
    %v1796 = vand.u32 %v1784, 2147483648
    %v1797 = vor.u32 1.1754944e-38, %v1796
    %v1798 = vsel %vm1795, %v1797, %v1793
    %v1799 = vmul.f32 %v1774, %v1798
    %v1800 = vmin.f32 %v1799, 1.0
    %v1801 = vmax.f32 %v1800, -1.0
    %v1802 = vmul.f32 %v688, %v688
    %v1803 = vmin.f32 16.0, %v1802
    %v1804 = vmul.f32 %v1803, 2.1237322e-06
    %v1805 = vadd.f32 %v1804, 0.00028619796
    %v1806 = vmul.f32 %v1803, %v1805
    %v1807 = vadd.f32 %v1806, 0.0036580483
    %v1808 = vmul.f32 %v1803, %v1807
    %v1809 = vadd.f32 %v1808, 0.05243302
    %v1810 = vmul.f32 %v1803, %v1809
    %v1811 = vadd.f32 %v1810, 0.18741608
    %v1812 = vmul.f32 %v1803, %v1811
    %v1813 = vadd.f32 %v1812, 1.1283791
    %v1814 = vmul.f32 %v688, %v1813
    %v1815 = vmul.f32 %v1803, 3.8918573e-05
    %v1816 = vadd.f32 %v1815, 0.001143296
    %v1817 = vmul.f32 %v1803, %v1816
    %v1818 = vadd.f32 %v1817, 0.014752088
    %v1819 = vmul.f32 %v1803, %v1818
    %v1820 = vadd.f32 %v1819, 0.112945676
    %v1821 = vmul.f32 %v1803, %v1820
    %v1822 = vadd.f32 %v1821, 0.4994258
    %v1823 = vmul.f32 %v1803, %v1822
    %v1824 = vadd.f32 %v1823, 1.0
    %v1825 = vrcp.pop %v1824
    %v1826 = vmul.f32 %v1824, %v1825
    %v1827 = vsub.f32 1.0, %v1826
    %v1828 = vmul.f32 %v1825, %v1827
    %v1829 = vadd.f32 %v1825, %v1828
    %vm1830 = vweird.f32 %v1824
    %vm1831 = vweird.f32 %v1825
    %vm1832 = vmor %vm1830, %vm1831
    %v1833 = vsel %vm1832, %v1825, %v1829
    %v1834 = vand.u32 2147483647, %v1824
    %vm1835 = vcmp.eq.f32.partialorder %v1834, 8.507059e+37
    %v1836 = vand.u32 %v1824, 2147483648
    %v1837 = vor.u32 1.1754944e-38, %v1836
    %v1838 = vsel %vm1835, %v1837, %v1833
    %v1839 = vmul.f32 %v1814, %v1838
    %v1840 = vmin.f32 %v1839, 1.0
    %v1841 = vmax.f32 %v1840, -1.0
    %v1842 = vmul.f32 %v689, %v689
    %v1843 = vmin.f32 16.0, %v1842
    %v1844 = vmul.f32 %v1843, 2.1237322e-06
    %v1845 = vadd.f32 %v1844, 0.00028619796
    %v1846 = vmul.f32 %v1843, %v1845
    %v1847 = vadd.f32 %v1846, 0.0036580483
    %v1848 = vmul.f32 %v1843, %v1847
    %v1849 = vadd.f32 %v1848, 0.05243302
    %v1850 = vmul.f32 %v1843, %v1849
    %v1851 = vadd.f32 %v1850, 0.18741608
    %v1852 = vmul.f32 %v1843, %v1851
    %v1853 = vadd.f32 %v1852, 1.1283791
    %v1854 = vmul.f32 %v689, %v1853
    %v1855 = vmul.f32 %v1843, 3.8918573e-05
    %v1856 = vadd.f32 %v1855, 0.001143296
    %v1857 = vmul.f32 %v1843, %v1856
    %v1858 = vadd.f32 %v1857, 0.014752088
    %v1859 = vmul.f32 %v1843, %v1858
    %v1860 = vadd.f32 %v1859, 0.112945676
    %v1861 = vmul.f32 %v1843, %v1860
    %v1862 = vadd.f32 %v1861, 0.4994258
    %v1863 = vmul.f32 %v1843, %v1862
    %v1864 = vadd.f32 %v1863, 1.0
    %v1865 = vrcp.pop %v1864
    %v1866 = vmul.f32 %v1864, %v1865
    %v1867 = vsub.f32 1.0, %v1866
    %v1868 = vmul.f32 %v1865, %v1867
    %v1869 = vadd.f32 %v1865, %v1868
    %vm1870 = vweird.f32 %v1864
    %vm1871 = vweird.f32 %v1865
    %vm1872 = vmor %vm1870, %vm1871
    %v1873 = vsel %vm1872, %v1865, %v1869
    %v1874 = vand.u32 2147483647, %v1864
    %vm1875 = vcmp.eq.f32.partialorder %v1874, 8.507059e+37
    %v1876 = vand.u32 %v1864, 2147483648
    %v1877 = vor.u32 1.1754944e-38, %v1876
    %v1878 = vsel %vm1875, %v1877, %v1873
    %v1879 = vmul.f32 %v1854, %v1878
    %v1880 = vmin.f32 %v1879, 1.0
    %v1881 = vmax.f32 %v1880, -1.0
    %v1882 = vmul.f32 %v690, %v690
    %v1883 = vmin.f32 16.0, %v1882
    %v1884 = vmul.f32 %v1883, 2.1237322e-06
    %v1885 = vadd.f32 %v1884, 0.00028619796
    %v1886 = vmul.f32 %v1883, %v1885
    %v1887 = vadd.f32 %v1886, 0.0036580483
    %v1888 = vmul.f32 %v1883, %v1887
    %v1889 = vadd.f32 %v1888, 0.05243302
    %v1890 = vmul.f32 %v1883, %v1889
    %v1891 = vadd.f32 %v1890, 0.18741608
    %v1892 = vmul.f32 %v1883, %v1891
    %v1893 = vadd.f32 %v1892, 1.1283791
    %v1894 = vmul.f32 %v690, %v1893
    %v1895 = vmul.f32 %v1883, 3.8918573e-05
    %v1896 = vadd.f32 %v1895, 0.001143296
    %v1897 = vmul.f32 %v1883, %v1896
    %v1898 = vadd.f32 %v1897, 0.014752088
    %v1899 = vmul.f32 %v1883, %v1898
    %v1900 = vadd.f32 %v1899, 0.112945676
    %v1901 = vmul.f32 %v1883, %v1900
    %v1902 = vadd.f32 %v1901, 0.4994258
    %v1903 = vmul.f32 %v1883, %v1902
    %v1904 = vadd.f32 %v1903, 1.0
    %v1905 = vrcp.pop %v1904
    %v1906 = vmul.f32 %v1904, %v1905
    %v1907 = vsub.f32 1.0, %v1906
    %v1908 = vmul.f32 %v1905, %v1907
    %v1909 = vadd.f32 %v1905, %v1908
    %vm1910 = vweird.f32 %v1904
    %vm1911 = vweird.f32 %v1905
    %vm1912 = vmor %vm1910, %vm1911
    %v1913 = vsel %vm1912, %v1905, %v1909
    %v1914 = vand.u32 2147483647, %v1904
    %vm1915 = vcmp.eq.f32.partialorder %v1914, 8.507059e+37
    %v1916 = vand.u32 %v1904, 2147483648
    %v1917 = vor.u32 1.1754944e-38, %v1916
    %v1918 = vsel %vm1915, %v1917, %v1913
    %v1919 = vmul.f32 %v1894, %v1918
    %v1920 = vmin.f32 %v1919, 1.0
    %v1921 = vmax.f32 %v1920, -1.0
    %v1922 = vmul.f32 %v691, %v691
    %v1923 = vmin.f32 16.0, %v1922
    %v1924 = vmul.f32 %v1923, 2.1237322e-06
    %v1925 = vadd.f32 %v1924, 0.00028619796
    %v1926 = vmul.f32 %v1923, %v1925
    %v1927 = vadd.f32 %v1926, 0.0036580483
    %v1928 = vmul.f32 %v1923, %v1927
    %v1929 = vadd.f32 %v1928, 0.05243302
    %v1930 = vmul.f32 %v1923, %v1929
    %v1931 = vadd.f32 %v1930, 0.18741608
    %v1932 = vmul.f32 %v1923, %v1931
    %v1933 = vadd.f32 %v1932, 1.1283791
    %v1934 = vmul.f32 %v691, %v1933
    %v1935 = vmul.f32 %v1923, 3.8918573e-05
    %v1936 = vadd.f32 %v1935, 0.001143296
    %v1937 = vmul.f32 %v1923, %v1936
    %v1938 = vadd.f32 %v1937, 0.014752088
    %v1939 = vmul.f32 %v1923, %v1938
    %v1940 = vadd.f32 %v1939, 0.112945676
    %v1941 = vmul.f32 %v1923, %v1940
    %v1942 = vadd.f32 %v1941, 0.4994258
    %v1943 = vmul.f32 %v1923, %v1942
    %v1944 = vadd.f32 %v1943, 1.0
    %v1945 = vrcp.pop %v1944
    %v1946 = vmul.f32 %v1944, %v1945
    %v1947 = vsub.f32 1.0, %v1946
    %v1948 = vmul.f32 %v1945, %v1947
    %v1949 = vadd.f32 %v1945, %v1948
    %vm1950 = vweird.f32 %v1944
    %vm1951 = vweird.f32 %v1945
    %vm1952 = vmor %vm1950, %vm1951
    %v1953 = vsel %vm1952, %v1945, %v1949
    %v1954 = vand.u32 2147483647, %v1944
    %vm1955 = vcmp.eq.f32.partialorder %v1954, 8.507059e+37
    %v1956 = vand.u32 %v1944, 2147483648
    %v1957 = vor.u32 1.1754944e-38, %v1956
    %v1958 = vsel %vm1955, %v1957, %v1953
    %v1959 = vmul.f32 %v1934, %v1958
    %v1960 = vmin.f32 %v1959, 1.0
    %v1961 = vmax.f32 %v1960, -1.0
    %v1962 = vmul.f32 %v692, %v692
    %v1963 = vmin.f32 16.0, %v1962
    %v1964 = vmul.f32 %v1963, 2.1237322e-06
    %v1965 = vadd.f32 %v1964, 0.00028619796
    %v1966 = vmul.f32 %v1963, %v1965
    %v1967 = vadd.f32 %v1966, 0.0036580483
    %v1968 = vmul.f32 %v1963, %v1967
    %v1969 = vadd.f32 %v1968, 0.05243302
    %v1970 = vmul.f32 %v1963, %v1969
    %v1971 = vadd.f32 %v1970, 0.18741608
    %v1972 = vmul.f32 %v1963, %v1971
    %v1973 = vadd.f32 %v1972, 1.1283791
    %v1974 = vmul.f32 %v692, %v1973
    %v1975 = vmul.f32 %v1963, 3.8918573e-05
    %v1976 = vadd.f32 %v1975, 0.001143296
    %v1977 = vmul.f32 %v1963, %v1976
    %v1978 = vadd.f32 %v1977, 0.014752088
    %v1979 = vmul.f32 %v1963, %v1978
    %v1980 = vadd.f32 %v1979, 0.112945676
    %v1981 = vmul.f32 %v1963, %v1980
    %v1982 = vadd.f32 %v1981, 0.4994258
    %v1983 = vmul.f32 %v1963, %v1982
    %v1984 = vadd.f32 %v1983, 1.0
    %v1985 = vrcp.pop %v1984
    %v1986 = vmul.f32 %v1984, %v1985
    %v1987 = vsub.f32 1.0, %v1986
    %v1988 = vmul.f32 %v1985, %v1987
    %v1989 = vadd.f32 %v1985, %v1988
    %vm1990 = vweird.f32 %v1984
    %vm1991 = vweird.f32 %v1985
    %vm1992 = vmor %vm1990, %vm1991
    %v1993 = vsel %vm1992, %v1985, %v1989
    %v1994 = vand.u32 2147483647, %v1984
    %vm1995 = vcmp.eq.f32.partialorder %v1994, 8.507059e+37
    %v1996 = vand.u32 %v1984, 2147483648
    %v1997 = vor.u32 1.1754944e-38, %v1996
    %v1998 = vsel %vm1995, %v1997, %v1993
    %v1999 = vmul.f32 %v1974, %v1998
    %v2000 = vmin.f32 %v1999, 1.0
    %v2001 = vmax.f32 %v2000, -1.0
    %v2002 = vmul.f32 %v693, %v693
    %v2003 = vmin.f32 16.0, %v2002
    %v2004 = vmul.f32 %v2003, 2.1237322e-06
    %v2005 = vadd.f32 %v2004, 0.00028619796
    %v2006 = vmul.f32 %v2003, %v2005
    %v2007 = vadd.f32 %v2006, 0.0036580483
    %v2008 = vmul.f32 %v2003, %v2007
    %v2009 = vadd.f32 %v2008, 0.05243302
    %v2010 = vmul.f32 %v2003, %v2009
    %v2011 = vadd.f32 %v2010, 0.18741608
    %v2012 = vmul.f32 %v2003, %v2011
    %v2013 = vadd.f32 %v2012, 1.1283791
    %v2014 = vmul.f32 %v693, %v2013
    %v2015 = vmul.f32 %v2003, 3.8918573e-05
    %v2016 = vadd.f32 %v2015, 0.001143296
    %v2017 = vmul.f32 %v2003, %v2016
    %v2018 = vadd.f32 %v2017, 0.014752088
    %v2019 = vmul.f32 %v2003, %v2018
    %v2020 = vadd.f32 %v2019, 0.112945676
    %v2021 = vmul.f32 %v2003, %v2020
    %v2022 = vadd.f32 %v2021, 0.4994258
    %v2023 = vmul.f32 %v2003, %v2022
    %v2024 = vadd.f32 %v2023, 1.0
    %v2025 = vrcp.pop %v2024
    %v2026 = vmul.f32 %v2024, %v2025
    %v2027 = vsub.f32 1.0, %v2026
    %v2028 = vmul.f32 %v2025, %v2027
    %v2029 = vadd.f32 %v2025, %v2028
    %vm2030 = vweird.f32 %v2024
    %vm2031 = vweird.f32 %v2025
    %vm2032 = vmor %vm2030, %vm2031
    %v2033 = vsel %vm2032, %v2025, %v2029
    %v2034 = vand.u32 2147483647, %v2024
    %vm2035 = vcmp.eq.f32.partialorder %v2034, 8.507059e+37
    %v2036 = vand.u32 %v2024, 2147483648
    %v2037 = vor.u32 1.1754944e-38, %v2036
    %v2038 = vsel %vm2035, %v2037, %v2033
    %v2039 = vmul.f32 %v2014, %v2038
    %v2040 = vmin.f32 %v2039, 1.0
    %v2041 = vmax.f32 %v2040, -1.0
    %v2042 = vmul.f32 %v694, %v694
    %v2043 = vmin.f32 16.0, %v2042
    %v2044 = vmul.f32 %v2043, 2.1237322e-06
    %v2045 = vadd.f32 %v2044, 0.00028619796
    %v2046 = vmul.f32 %v2043, %v2045
    %v2047 = vadd.f32 %v2046, 0.0036580483
    %v2048 = vmul.f32 %v2043, %v2047
    %v2049 = vadd.f32 %v2048, 0.05243302
    %v2050 = vmul.f32 %v2043, %v2049
    %v2051 = vadd.f32 %v2050, 0.18741608
    %v2052 = vmul.f32 %v2043, %v2051
    %v2053 = vadd.f32 %v2052, 1.1283791
    %v2054 = vmul.f32 %v694, %v2053
    %v2055 = vmul.f32 %v2043, 3.8918573e-05
    %v2056 = vadd.f32 %v2055, 0.001143296
    %v2057 = vmul.f32 %v2043, %v2056
    %v2058 = vadd.f32 %v2057, 0.014752088
    %v2059 = vmul.f32 %v2043, %v2058
    %v2060 = vadd.f32 %v2059, 0.112945676
    %v2061 = vmul.f32 %v2043, %v2060
    %v2062 = vadd.f32 %v2061, 0.4994258
    %v2063 = vmul.f32 %v2043, %v2062
    %v2064 = vadd.f32 %v2063, 1.0
    %v2065 = vrcp.pop %v2064
    %v2066 = vmul.f32 %v2064, %v2065
    %v2067 = vsub.f32 1.0, %v2066
    %v2068 = vmul.f32 %v2065, %v2067
    %v2069 = vadd.f32 %v2065, %v2068
    %vm2070 = vweird.f32 %v2064
    %vm2071 = vweird.f32 %v2065
    %vm2072 = vmor %vm2070, %vm2071
    %v2073 = vsel %vm2072, %v2065, %v2069
    %v2074 = vand.u32 2147483647, %v2064
    %vm2075 = vcmp.eq.f32.partialorder %v2074, 8.507059e+37
    %v2076 = vand.u32 %v2064, 2147483648
    %v2077 = vor.u32 1.1754944e-38, %v2076
    %v2078 = vsel %vm2075, %v2077, %v2073
    %v2079 = vmul.f32 %v2054, %v2078
    %v2080 = vmin.f32 %v2079, 1.0
    %v2081 = vmax.f32 %v2080, -1.0
    %v2082 = vmul.f32 %v695, %v695
    %v2083 = vmin.f32 16.0, %v2082
    %v2084 = vmul.f32 %v2083, 2.1237322e-06
    %v2085 = vadd.f32 %v2084, 0.00028619796
    %v2086 = vmul.f32 %v2083, %v2085
    %v2087 = vadd.f32 %v2086, 0.0036580483
    %v2088 = vmul.f32 %v2083, %v2087
    %v2089 = vadd.f32 %v2088, 0.05243302
    %v2090 = vmul.f32 %v2083, %v2089
    %v2091 = vadd.f32 %v2090, 0.18741608
    %v2092 = vmul.f32 %v2083, %v2091
    %v2093 = vadd.f32 %v2092, 1.1283791
    %v2094 = vmul.f32 %v695, %v2093
    %v2095 = vmul.f32 %v2083, 3.8918573e-05
    %v2096 = vadd.f32 %v2095, 0.001143296
    %v2097 = vmul.f32 %v2083, %v2096
    %v2098 = vadd.f32 %v2097, 0.014752088
    %v2099 = vmul.f32 %v2083, %v2098
    %v2100 = vadd.f32 %v2099, 0.112945676
    %v2101 = vmul.f32 %v2083, %v2100
    %v2102 = vadd.f32 %v2101, 0.4994258
    %v2103 = vmul.f32 %v2083, %v2102
    %v2104 = vadd.f32 %v2103, 1.0
    %v2105 = vrcp.pop %v2104
    %v2106 = vmul.f32 %v2104, %v2105
    %v2107 = vsub.f32 1.0, %v2106
    %v2108 = vmul.f32 %v2105, %v2107
    %v2109 = vadd.f32 %v2105, %v2108
    %vm2110 = vweird.f32 %v2104
    %vm2111 = vweird.f32 %v2105
    %vm2112 = vmor %vm2110, %vm2111
    %v2113 = vsel %vm2112, %v2105, %v2109
    %v2114 = vand.u32 2147483647, %v2104
    %vm2115 = vcmp.eq.f32.partialorder %v2114, 8.507059e+37
    %v2116 = vand.u32 %v2104, 2147483648
    %v2117 = vor.u32 1.1754944e-38, %v2116
    %v2118 = vsel %vm2115, %v2117, %v2113
    %v2119 = vmul.f32 %v2094, %v2118
    %v2120 = vmin.f32 %v2119, 1.0
    %v2121 = vmax.f32 %v2120, -1.0
    %v2122 = vmul.f32 %v696, %v696
    %v2123 = vmin.f32 16.0, %v2122
    %v2124 = vmul.f32 %v2123, 2.1237322e-06
    %v2125 = vadd.f32 %v2124, 0.00028619796
    %v2126 = vmul.f32 %v2123, %v2125
    %v2127 = vadd.f32 %v2126, 0.0036580483
    %v2128 = vmul.f32 %v2123, %v2127
    %v2129 = vadd.f32 %v2128, 0.05243302
    %v2130 = vmul.f32 %v2123, %v2129
    %v2131 = vadd.f32 %v2130, 0.18741608
    %v2132 = vmul.f32 %v2123, %v2131
    %v2133 = vadd.f32 %v2132, 1.1283791
    %v2134 = vmul.f32 %v696, %v2133
    %v2135 = vmul.f32 %v2123, 3.8918573e-05
    %v2136 = vadd.f32 %v2135, 0.001143296
    %v2137 = vmul.f32 %v2123, %v2136
    %v2138 = vadd.f32 %v2137, 0.014752088
    %v2139 = vmul.f32 %v2123, %v2138
    %v2140 = vadd.f32 %v2139, 0.112945676
    %v2141 = vmul.f32 %v2123, %v2140
    %v2142 = vadd.f32 %v2141, 0.4994258
    %v2143 = vmul.f32 %v2123, %v2142
    %v2144 = vadd.f32 %v2143, 1.0
    %v2145 = vrcp.pop %v2144
    %v2146 = vmul.f32 %v2144, %v2145
    %v2147 = vsub.f32 1.0, %v2146
    %v2148 = vmul.f32 %v2145, %v2147
    %v2149 = vadd.f32 %v2145, %v2148
    %vm2150 = vweird.f32 %v2144
    %vm2151 = vweird.f32 %v2145
    %vm2152 = vmor %vm2150, %vm2151
    %v2153 = vsel %vm2152, %v2145, %v2149
    %v2154 = vand.u32 2147483647, %v2144
    %vm2155 = vcmp.eq.f32.partialorder %v2154, 8.507059e+37
    %v2156 = vand.u32 %v2144, 2147483648
    %v2157 = vor.u32 1.1754944e-38, %v2156
    %v2158 = vsel %vm2155, %v2157, %v2153
    %v2159 = vmul.f32 %v2134, %v2158
    %v2160 = vmin.f32 %v2159, 1.0
    %v2161 = vmax.f32 %v2160, -1.0
    %v2162 = vmul.f32 %v697, %v697
    %v2163 = vmin.f32 16.0, %v2162
    %v2164 = vmul.f32 %v2163, 2.1237322e-06
    %v2165 = vadd.f32 %v2164, 0.00028619796
    %v2166 = vmul.f32 %v2163, %v2165
    %v2167 = vadd.f32 %v2166, 0.0036580483
    %v2168 = vmul.f32 %v2163, %v2167
    %v2169 = vadd.f32 %v2168, 0.05243302
    %v2170 = vmul.f32 %v2163, %v2169
    %v2171 = vadd.f32 %v2170, 0.18741608
    %v2172 = vmul.f32 %v2163, %v2171
    %v2173 = vadd.f32 %v2172, 1.1283791
    %v2174 = vmul.f32 %v697, %v2173
    %v2175 = vmul.f32 %v2163, 3.8918573e-05
    %v2176 = vadd.f32 %v2175, 0.001143296
    %v2177 = vmul.f32 %v2163, %v2176
    %v2178 = vadd.f32 %v2177, 0.014752088
    %v2179 = vmul.f32 %v2163, %v2178
    %v2180 = vadd.f32 %v2179, 0.112945676
    %v2181 = vmul.f32 %v2163, %v2180
    %v2182 = vadd.f32 %v2181, 0.4994258
    %v2183 = vmul.f32 %v2163, %v2182
    %v2184 = vadd.f32 %v2183, 1.0
    %v2185 = vrcp.pop %v2184
    %v2186 = vmul.f32 %v2184, %v2185
    %v2187 = vsub.f32 1.0, %v2186
    %v2188 = vmul.f32 %v2185, %v2187
    %v2189 = vadd.f32 %v2185, %v2188
    %vm2190 = vweird.f32 %v2184
    %vm2191 = vweird.f32 %v2185
    %vm2192 = vmor %vm2190, %vm2191
    %v2193 = vsel %vm2192, %v2185, %v2189
    %v2194 = vand.u32 2147483647, %v2184
    %vm2195 = vcmp.eq.f32.partialorder %v2194, 8.507059e+37
    %v2196 = vand.u32 %v2184, 2147483648
    %v2197 = vor.u32 1.1754944e-38, %v2196
    %v2198 = vsel %vm2195, %v2197, %v2193
    %v2199 = vmul.f32 %v2174, %v2198
    %v2200 = vmin.f32 %v2199, 1.0
    %v2201 = vmax.f32 %v2200, -1.0
    %v2202 = vmul.f32 %v698, %v698
    %v2203 = vmin.f32 16.0, %v2202
    %v2204 = vmul.f32 %v2203, 2.1237322e-06
    %v2205 = vadd.f32 %v2204, 0.00028619796
    %v2206 = vmul.f32 %v2203, %v2205
    %v2207 = vadd.f32 %v2206, 0.0036580483
    %v2208 = vmul.f32 %v2203, %v2207
    %v2209 = vadd.f32 %v2208, 0.05243302
    %v2210 = vmul.f32 %v2203, %v2209
    %v2211 = vadd.f32 %v2210, 0.18741608
    %v2212 = vmul.f32 %v2203, %v2211
    %v2213 = vadd.f32 %v2212, 1.1283791
    %v2214 = vmul.f32 %v698, %v2213
    %v2215 = vmul.f32 %v2203, 3.8918573e-05
    %v2216 = vadd.f32 %v2215, 0.001143296
    %v2217 = vmul.f32 %v2203, %v2216
    %v2218 = vadd.f32 %v2217, 0.014752088
    %v2219 = vmul.f32 %v2203, %v2218
    %v2220 = vadd.f32 %v2219, 0.112945676
    %v2221 = vmul.f32 %v2203, %v2220
    %v2222 = vadd.f32 %v2221, 0.4994258
    %v2223 = vmul.f32 %v2203, %v2222
    %v2224 = vadd.f32 %v2223, 1.0
    %v2225 = vrcp.pop %v2224
    %v2226 = vmul.f32 %v2224, %v2225
    %v2227 = vsub.f32 1.0, %v2226
    %v2228 = vmul.f32 %v2225, %v2227
    %v2229 = vadd.f32 %v2225, %v2228
    %vm2230 = vweird.f32 %v2224
    %vm2231 = vweird.f32 %v2225
    %vm2232 = vmor %vm2230, %vm2231
    %v2233 = vsel %vm2232, %v2225, %v2229
    %v2234 = vand.u32 2147483647, %v2224
    %vm2235 = vcmp.eq.f32.partialorder %v2234, 8.507059e+37
    %v2236 = vand.u32 %v2224, 2147483648
    %v2237 = vor.u32 1.1754944e-38, %v2236
    %v2238 = vsel %vm2235, %v2237, %v2233
    %v2239 = vmul.f32 %v2214, %v2238
    %v2240 = vmin.f32 %v2239, 1.0
    %v2241 = vmax.f32 %v2240, -1.0
    %v2242 = vmul.f32 %v699, %v699
    %v2243 = vmin.f32 16.0, %v2242
    %v2244 = vmul.f32 %v2243, 2.1237322e-06
    %v2245 = vadd.f32 %v2244, 0.00028619796
    %v2246 = vmul.f32 %v2243, %v2245
    %v2247 = vadd.f32 %v2246, 0.0036580483
    %v2248 = vmul.f32 %v2243, %v2247
    %v2249 = vadd.f32 %v2248, 0.05243302
    %v2250 = vmul.f32 %v2243, %v2249
    %v2251 = vadd.f32 %v2250, 0.18741608
    %v2252 = vmul.f32 %v2243, %v2251
    %v2253 = vadd.f32 %v2252, 1.1283791
    %v2254 = vmul.f32 %v699, %v2253
    %v2255 = vmul.f32 %v2243, 3.8918573e-05
    %v2256 = vadd.f32 %v2255, 0.001143296
    %v2257 = vmul.f32 %v2243, %v2256
    %v2258 = vadd.f32 %v2257, 0.014752088
    %v2259 = vmul.f32 %v2243, %v2258
    %v2260 = vadd.f32 %v2259, 0.112945676
    %v2261 = vmul.f32 %v2243, %v2260
    %v2262 = vadd.f32 %v2261, 0.4994258
    %v2263 = vmul.f32 %v2243, %v2262
    %v2264 = vadd.f32 %v2263, 1.0
    %v2265 = vrcp.pop %v2264
    %v2266 = vmul.f32 %v2264, %v2265
    %v2267 = vsub.f32 1.0, %v2266
    %v2268 = vmul.f32 %v2265, %v2267
    %v2269 = vadd.f32 %v2265, %v2268
    %vm2270 = vweird.f32 %v2264
    %vm2271 = vweird.f32 %v2265
    %vm2272 = vmor %vm2270, %vm2271
    %v2273 = vsel %vm2272, %v2265, %v2269
    %v2274 = vand.u32 2147483647, %v2264
    %vm2275 = vcmp.eq.f32.partialorder %v2274, 8.507059e+37
    %v2276 = vand.u32 %v2264, 2147483648
    %v2277 = vor.u32 1.1754944e-38, %v2276
    %v2278 = vsel %vm2275, %v2277, %v2273
    %v2279 = vmul.f32 %v2254, %v2278
    %v2280 = vmin.f32 %v2279, 1.0
    %v2281 = vmax.f32 %v2280, -1.0
    %v2282 = vmul.f32 %v700, %v700
    %v2283 = vmin.f32 16.0, %v2282
    %v2284 = vmul.f32 %v2283, 2.1237322e-06
    %v2285 = vadd.f32 %v2284, 0.00028619796
    %v2286 = vmul.f32 %v2283, %v2285
    %v2287 = vadd.f32 %v2286, 0.0036580483
    %v2288 = vmul.f32 %v2283, %v2287
    %v2289 = vadd.f32 %v2288, 0.05243302
    %v2290 = vmul.f32 %v2283, %v2289
    %v2291 = vadd.f32 %v2290, 0.18741608
    %v2292 = vmul.f32 %v2283, %v2291
    %v2293 = vadd.f32 %v2292, 1.1283791
    %v2294 = vmul.f32 %v700, %v2293
    %v2295 = vmul.f32 %v2283, 3.8918573e-05
    %v2296 = vadd.f32 %v2295, 0.001143296
    %v2297 = vmul.f32 %v2283, %v2296
    %v2298 = vadd.f32 %v2297, 0.014752088
    %v2299 = vmul.f32 %v2283, %v2298
    %v2300 = vadd.f32 %v2299, 0.112945676
    %v2301 = vmul.f32 %v2283, %v2300
    %v2302 = vadd.f32 %v2301, 0.4994258
    %v2303 = vmul.f32 %v2283, %v2302
    %v2304 = vadd.f32 %v2303, 1.0
    %v2305 = vrcp.pop %v2304
    %v2306 = vmul.f32 %v2304, %v2305
    %v2307 = vsub.f32 1.0, %v2306
    %v2308 = vmul.f32 %v2305, %v2307
    %v2309 = vadd.f32 %v2305, %v2308
    %vm2310 = vweird.f32 %v2304
    %vm2311 = vweird.f32 %v2305
    %vm2312 = vmor %vm2310, %vm2311
    %v2313 = vsel %vm2312, %v2305, %v2309
    %v2314 = vand.u32 2147483647, %v2304
    %vm2315 = vcmp.eq.f32.partialorder %v2314, 8.507059e+37
    %v2316 = vand.u32 %v2304, 2147483648
    %v2317 = vor.u32 1.1754944e-38, %v2316
    %v2318 = vsel %vm2315, %v2317, %v2313
    %v2319 = vmul.f32 %v2294, %v2318
    %v2320 = vmin.f32 %v2319, 1.0
    %v2321 = vmax.f32 %v2320, -1.0
    %v2322 = vmul.f32 %v701, %v701
    %v2323 = vmin.f32 16.0, %v2322
    %v2324 = vmul.f32 %v2323, 2.1237322e-06
    %v2325 = vadd.f32 %v2324, 0.00028619796
    %v2326 = vmul.f32 %v2323, %v2325
    %v2327 = vadd.f32 %v2326, 0.0036580483
    %v2328 = vmul.f32 %v2323, %v2327
    %v2329 = vadd.f32 %v2328, 0.05243302
    %v2330 = vmul.f32 %v2323, %v2329
    %v2331 = vadd.f32 %v2330, 0.18741608
    %v2332 = vmul.f32 %v2323, %v2331
    %v2333 = vadd.f32 %v2332, 1.1283791
    %v2334 = vmul.f32 %v701, %v2333
    %v2335 = vmul.f32 %v2323, 3.8918573e-05
    %v2336 = vadd.f32 %v2335, 0.001143296
    %v2337 = vmul.f32 %v2323, %v2336
    %v2338 = vadd.f32 %v2337, 0.014752088
    %v2339 = vmul.f32 %v2323, %v2338
    %v2340 = vadd.f32 %v2339, 0.112945676
    %v2341 = vmul.f32 %v2323, %v2340
    %v2342 = vadd.f32 %v2341, 0.4994258
    %v2343 = vmul.f32 %v2323, %v2342
    %v2344 = vadd.f32 %v2343, 1.0
    %v2345 = vrcp.pop %v2344
    %v2346 = vmul.f32 %v2344, %v2345
    %v2347 = vsub.f32 1.0, %v2346
    %v2348 = vmul.f32 %v2345, %v2347
    %v2349 = vadd.f32 %v2345, %v2348
    %vm2350 = vweird.f32 %v2344
    %vm2351 = vweird.f32 %v2345
    %vm2352 = vmor %vm2350, %vm2351
    %v2353 = vsel %vm2352, %v2345, %v2349
    %v2354 = vand.u32 2147483647, %v2344
    %vm2355 = vcmp.eq.f32.partialorder %v2354, 8.507059e+37
    %v2356 = vand.u32 %v2344, 2147483648
    %v2357 = vor.u32 1.1754944e-38, %v2356
    %v2358 = vsel %vm2355, %v2357, %v2353
    %v2359 = vmul.f32 %v2334, %v2358
    %v2360 = vmin.f32 %v2359, 1.0
    %v2361 = vmax.f32 %v2360, -1.0
    %v2362 = vmul.f32 %v702, %v702
    %v2363 = vmin.f32 16.0, %v2362
    %v2364 = vmul.f32 %v2363, 2.1237322e-06
    %v2365 = vadd.f32 %v2364, 0.00028619796
    %v2366 = vmul.f32 %v2363, %v2365
    %v2367 = vadd.f32 %v2366, 0.0036580483
    %v2368 = vmul.f32 %v2363, %v2367
    %v2369 = vadd.f32 %v2368, 0.05243302
    %v2370 = vmul.f32 %v2363, %v2369
    %v2371 = vadd.f32 %v2370, 0.18741608
    %v2372 = vmul.f32 %v2363, %v2371
    %v2373 = vadd.f32 %v2372, 1.1283791
    %v2374 = vmul.f32 %v702, %v2373
    %v2375 = vmul.f32 %v2363, 3.8918573e-05
    %v2376 = vadd.f32 %v2375, 0.001143296
    %v2377 = vmul.f32 %v2363, %v2376
    %v2378 = vadd.f32 %v2377, 0.014752088
    %v2379 = vmul.f32 %v2363, %v2378
    %v2380 = vadd.f32 %v2379, 0.112945676
    %v2381 = vmul.f32 %v2363, %v2380
    %v2382 = vadd.f32 %v2381, 0.4994258
    %v2383 = vmul.f32 %v2363, %v2382
    %v2384 = vadd.f32 %v2383, 1.0
    %v2385 = vrcp.pop %v2384
    %v2386 = vmul.f32 %v2384, %v2385
    %v2387 = vsub.f32 1.0, %v2386
    %v2388 = vmul.f32 %v2385, %v2387
    %v2389 = vadd.f32 %v2385, %v2388
    %vm2390 = vweird.f32 %v2384
    %vm2391 = vweird.f32 %v2385
    %vm2392 = vmor %vm2390, %vm2391
    %v2393 = vsel %vm2392, %v2385, %v2389
    %v2394 = vand.u32 2147483647, %v2384
    %vm2395 = vcmp.eq.f32.partialorder %v2394, 8.507059e+37
    %v2396 = vand.u32 %v2384, 2147483648
    %v2397 = vor.u32 1.1754944e-38, %v2396
    %v2398 = vsel %vm2395, %v2397, %v2393
    %v2399 = vmul.f32 %v2374, %v2398
    %v2400 = vmin.f32 %v2399, 1.0
    %v2401 = vmax.f32 %v2400, -1.0
    %v2402 = vmul.f32 %v703, %v703
    %v2403 = vmin.f32 16.0, %v2402
    %v2404 = vmul.f32 %v2403, 2.1237322e-06
    %v2405 = vadd.f32 %v2404, 0.00028619796
    %v2406 = vmul.f32 %v2403, %v2405
    %v2407 = vadd.f32 %v2406, 0.0036580483
    %v2408 = vmul.f32 %v2403, %v2407
    %v2409 = vadd.f32 %v2408, 0.05243302
    %v2410 = vmul.f32 %v2403, %v2409
    %v2411 = vadd.f32 %v2410, 0.18741608
    %v2412 = vmul.f32 %v2403, %v2411
    %v2413 = vadd.f32 %v2412, 1.1283791
    %v2414 = vmul.f32 %v703, %v2413
    %v2415 = vmul.f32 %v2403, 3.8918573e-05
    %v2416 = vadd.f32 %v2415, 0.001143296
    %v2417 = vmul.f32 %v2403, %v2416
    %v2418 = vadd.f32 %v2417, 0.014752088
    %v2419 = vmul.f32 %v2403, %v2418
    %v2420 = vadd.f32 %v2419, 0.112945676
    %v2421 = vmul.f32 %v2403, %v2420
    %v2422 = vadd.f32 %v2421, 0.4994258
    %v2423 = vmul.f32 %v2403, %v2422
    %v2424 = vadd.f32 %v2423, 1.0
    %v2425 = vrcp.pop %v2424
    %v2426 = vmul.f32 %v2424, %v2425
    %v2427 = vsub.f32 1.0, %v2426
    %v2428 = vmul.f32 %v2425, %v2427
    %v2429 = vadd.f32 %v2425, %v2428
    %vm2430 = vweird.f32 %v2424
    %vm2431 = vweird.f32 %v2425
    %vm2432 = vmor %vm2430, %vm2431
    %v2433 = vsel %vm2432, %v2425, %v2429
    %v2434 = vand.u32 2147483647, %v2424
    %vm2435 = vcmp.eq.f32.partialorder %v2434, 8.507059e+37
    %v2436 = vand.u32 %v2424, 2147483648
    %v2437 = vor.u32 1.1754944e-38, %v2436
    %v2438 = vsel %vm2435, %v2437, %v2433
    %v2439 = vmul.f32 %v2414, %v2438
    %v2440 = vmin.f32 %v2439, 1.0
    %v2441 = vmax.f32 %v2440, -1.0
    %v2442 = vmul.f32 %v704, %v704
    %v2443 = vmin.f32 16.0, %v2442
    %v2444 = vmul.f32 %v2443, 2.1237322e-06
    %v2445 = vadd.f32 %v2444, 0.00028619796
    %v2446 = vmul.f32 %v2443, %v2445
    %v2447 = vadd.f32 %v2446, 0.0036580483
    %v2448 = vmul.f32 %v2443, %v2447
    %v2449 = vadd.f32 %v2448, 0.05243302
    %v2450 = vmul.f32 %v2443, %v2449
    %v2451 = vadd.f32 %v2450, 0.18741608
    %v2452 = vmul.f32 %v2443, %v2451
    %v2453 = vadd.f32 %v2452, 1.1283791
    %v2454 = vmul.f32 %v704, %v2453
    %v2455 = vmul.f32 %v2443, 3.8918573e-05
    %v2456 = vadd.f32 %v2455, 0.001143296
    %v2457 = vmul.f32 %v2443, %v2456
    %v2458 = vadd.f32 %v2457, 0.014752088
    %v2459 = vmul.f32 %v2443, %v2458
    %v2460 = vadd.f32 %v2459, 0.112945676
    %v2461 = vmul.f32 %v2443, %v2460
    %v2462 = vadd.f32 %v2461, 0.4994258
    %v2463 = vmul.f32 %v2443, %v2462
    %v2464 = vadd.f32 %v2463, 1.0
    %v2465 = vrcp.pop %v2464
    %v2466 = vmul.f32 %v2464, %v2465
    %v2467 = vsub.f32 1.0, %v2466
    %v2468 = vmul.f32 %v2465, %v2467
    %v2469 = vadd.f32 %v2465, %v2468
    %vm2470 = vweird.f32 %v2464
    %vm2471 = vweird.f32 %v2465
    %vm2472 = vmor %vm2470, %vm2471
    %v2473 = vsel %vm2472, %v2465, %v2469
    %v2474 = vand.u32 2147483647, %v2464
    %vm2475 = vcmp.eq.f32.partialorder %v2474, 8.507059e+37
    %v2476 = vand.u32 %v2464, 2147483648
    %v2477 = vor.u32 1.1754944e-38, %v2476
    %v2478 = vsel %vm2475, %v2477, %v2473
    %v2479 = vmul.f32 %v2454, %v2478
    %v2480 = vmin.f32 %v2479, 1.0
    %v2481 = vmax.f32 %v2480, -1.0
    %v2482 = vmul.f32 %v705, %v705
    %v2483 = vmin.f32 16.0, %v2482
    %v2484 = vmul.f32 %v2483, 2.1237322e-06
    %v2485 = vadd.f32 %v2484, 0.00028619796
    %v2486 = vmul.f32 %v2483, %v2485
    %v2487 = vadd.f32 %v2486, 0.0036580483
    %v2488 = vmul.f32 %v2483, %v2487
    %v2489 = vadd.f32 %v2488, 0.05243302
    %v2490 = vmul.f32 %v2483, %v2489
    %v2491 = vadd.f32 %v2490, 0.18741608
    %v2492 = vmul.f32 %v2483, %v2491
    %v2493 = vadd.f32 %v2492, 1.1283791
    %v2494 = vmul.f32 %v705, %v2493
    %v2495 = vmul.f32 %v2483, 3.8918573e-05
    %v2496 = vadd.f32 %v2495, 0.001143296
    %v2497 = vmul.f32 %v2483, %v2496
    %v2498 = vadd.f32 %v2497, 0.014752088
    %v2499 = vmul.f32 %v2483, %v2498
    %v2500 = vadd.f32 %v2499, 0.112945676
    %v2501 = vmul.f32 %v2483, %v2500
    %v2502 = vadd.f32 %v2501, 0.4994258
    %v2503 = vmul.f32 %v2483, %v2502
    %v2504 = vadd.f32 %v2503, 1.0
    %v2505 = vrcp.pop %v2504
    %v2506 = vmul.f32 %v2504, %v2505
    %v2507 = vsub.f32 1.0, %v2506
    %v2508 = vmul.f32 %v2505, %v2507
    %v2509 = vadd.f32 %v2505, %v2508
    %vm2510 = vweird.f32 %v2504
    %vm2511 = vweird.f32 %v2505
    %vm2512 = vmor %vm2510, %vm2511
    %v2513 = vsel %vm2512, %v2505, %v2509
    %v2514 = vand.u32 2147483647, %v2504
    %vm2515 = vcmp.eq.f32.partialorder %v2514, 8.507059e+37
    %v2516 = vand.u32 %v2504, 2147483648
    %v2517 = vor.u32 1.1754944e-38, %v2516
    %v2518 = vsel %vm2515, %v2517, %v2513
    %v2519 = vmul.f32 %v2494, %v2518
    %v2520 = vmin.f32 %v2519, 1.0
    %v2521 = vmax.f32 %v2520, -1.0
    %v2522 = vmul.f32 %v706, %v706
    %v2523 = vmin.f32 16.0, %v2522
    %v2524 = vmul.f32 %v2523, 2.1237322e-06
    %v2525 = vadd.f32 %v2524, 0.00028619796
    %v2526 = vmul.f32 %v2523, %v2525
    %v2527 = vadd.f32 %v2526, 0.0036580483
    %v2528 = vmul.f32 %v2523, %v2527
    %v2529 = vadd.f32 %v2528, 0.05243302
    %v2530 = vmul.f32 %v2523, %v2529
    %v2531 = vadd.f32 %v2530, 0.18741608
    %v2532 = vmul.f32 %v2523, %v2531
    %v2533 = vadd.f32 %v2532, 1.1283791
    %v2534 = vmul.f32 %v706, %v2533
    %v2535 = vmul.f32 %v2523, 3.8918573e-05
    %v2536 = vadd.f32 %v2535, 0.001143296
    %v2537 = vmul.f32 %v2523, %v2536
    %v2538 = vadd.f32 %v2537, 0.014752088
    %v2539 = vmul.f32 %v2523, %v2538
    %v2540 = vadd.f32 %v2539, 0.112945676
    %v2541 = vmul.f32 %v2523, %v2540
    %v2542 = vadd.f32 %v2541, 0.4994258
    %v2543 = vmul.f32 %v2523, %v2542
    %v2544 = vadd.f32 %v2543, 1.0
    %v2545 = vrcp.pop %v2544
    %v2546 = vmul.f32 %v2544, %v2545
    %v2547 = vsub.f32 1.0, %v2546
    %v2548 = vmul.f32 %v2545, %v2547
    %v2549 = vadd.f32 %v2545, %v2548
    %vm2550 = vweird.f32 %v2544
    %vm2551 = vweird.f32 %v2545
    %vm2552 = vmor %vm2550, %vm2551
    %v2553 = vsel %vm2552, %v2545, %v2549
    %v2554 = vand.u32 2147483647, %v2544
    %vm2555 = vcmp.eq.f32.partialorder %v2554, 8.507059e+37
    %v2556 = vand.u32 %v2544, 2147483648
    %v2557 = vor.u32 1.1754944e-38, %v2556
    %v2558 = vsel %vm2555, %v2557, %v2553
    %v2559 = vmul.f32 %v2534, %v2558
    %v2560 = vmin.f32 %v2559, 1.0
    %v2561 = vmax.f32 %v2560, -1.0
    %v2562 = vmul.f32 %v707, %v707
    %v2563 = vmin.f32 16.0, %v2562
    %v2564 = vmul.f32 %v2563, 2.1237322e-06
    %v2565 = vadd.f32 %v2564, 0.00028619796
    %v2566 = vmul.f32 %v2563, %v2565
    %v2567 = vadd.f32 %v2566, 0.0036580483
    %v2568 = vmul.f32 %v2563, %v2567
    %v2569 = vadd.f32 %v2568, 0.05243302
    %v2570 = vmul.f32 %v2563, %v2569
    %v2571 = vadd.f32 %v2570, 0.18741608
    %v2572 = vmul.f32 %v2563, %v2571
    %v2573 = vadd.f32 %v2572, 1.1283791
    %v2574 = vmul.f32 %v707, %v2573
    %v2575 = vmul.f32 %v2563, 3.8918573e-05
    %v2576 = vadd.f32 %v2575, 0.001143296
    %v2577 = vmul.f32 %v2563, %v2576
    %v2578 = vadd.f32 %v2577, 0.014752088
    %v2579 = vmul.f32 %v2563, %v2578
    %v2580 = vadd.f32 %v2579, 0.112945676
    %v2581 = vmul.f32 %v2563, %v2580
    %v2582 = vadd.f32 %v2581, 0.4994258
    %v2583 = vmul.f32 %v2563, %v2582
    %v2584 = vadd.f32 %v2583, 1.0
    %v2585 = vrcp.pop %v2584
    %v2586 = vmul.f32 %v2584, %v2585
    %v2587 = vsub.f32 1.0, %v2586
    %v2588 = vmul.f32 %v2585, %v2587
    %v2589 = vadd.f32 %v2585, %v2588
    %vm2590 = vweird.f32 %v2584
    %vm2591 = vweird.f32 %v2585
    %vm2592 = vmor %vm2590, %vm2591
    %v2593 = vsel %vm2592, %v2585, %v2589
    %v2594 = vand.u32 2147483647, %v2584
    %vm2595 = vcmp.eq.f32.partialorder %v2594, 8.507059e+37
    %v2596 = vand.u32 %v2584, 2147483648
    %v2597 = vor.u32 1.1754944e-38, %v2596
    %v2598 = vsel %vm2595, %v2597, %v2593
    %v2599 = vmul.f32 %v2574, %v2598
    %v2600 = vmin.f32 %v2599, 1.0
    %v2601 = vmax.f32 %v2600, -1.0
    %v2602 = vmul.f32 %v708, %v708
    %v2603 = vmin.f32 16.0, %v2602
    %v2604 = vmul.f32 %v2603, 2.1237322e-06
    %v2605 = vadd.f32 %v2604, 0.00028619796
    %v2606 = vmul.f32 %v2603, %v2605
    %v2607 = vadd.f32 %v2606, 0.0036580483
    %v2608 = vmul.f32 %v2603, %v2607
    %v2609 = vadd.f32 %v2608, 0.05243302
    %v2610 = vmul.f32 %v2603, %v2609
    %v2611 = vadd.f32 %v2610, 0.18741608
    %v2612 = vmul.f32 %v2603, %v2611
    %v2613 = vadd.f32 %v2612, 1.1283791
    %v2614 = vmul.f32 %v708, %v2613
    %v2615 = vmul.f32 %v2603, 3.8918573e-05
    %v2616 = vadd.f32 %v2615, 0.001143296
    %v2617 = vmul.f32 %v2603, %v2616
    %v2618 = vadd.f32 %v2617, 0.014752088
    %v2619 = vmul.f32 %v2603, %v2618
    %v2620 = vadd.f32 %v2619, 0.112945676
    %v2621 = vmul.f32 %v2603, %v2620
    %v2622 = vadd.f32 %v2621, 0.4994258
    %v2623 = vmul.f32 %v2603, %v2622
    %v2624 = vadd.f32 %v2623, 1.0
    %v2625 = vrcp.pop %v2624
    %v2626 = vmul.f32 %v2624, %v2625
    %v2627 = vsub.f32 1.0, %v2626
    %v2628 = vmul.f32 %v2625, %v2627
    %v2629 = vadd.f32 %v2625, %v2628
    %vm2630 = vweird.f32 %v2624
    %vm2631 = vweird.f32 %v2625
    %vm2632 = vmor %vm2630, %vm2631
    %v2633 = vsel %vm2632, %v2625, %v2629
    %v2634 = vand.u32 2147483647, %v2624
    %vm2635 = vcmp.eq.f32.partialorder %v2634, 8.507059e+37
    %v2636 = vand.u32 %v2624, 2147483648
    %v2637 = vor.u32 1.1754944e-38, %v2636
    %v2638 = vsel %vm2635, %v2637, %v2633
    %v2639 = vmul.f32 %v2614, %v2638
    %v2640 = vmin.f32 %v2639, 1.0
    %v2641 = vmax.f32 %v2640, -1.0
    %v2642 = vmul.f32 %v709, %v709
    %v2643 = vmin.f32 16.0, %v2642
    %v2644 = vmul.f32 %v2643, 2.1237322e-06
    %v2645 = vadd.f32 %v2644, 0.00028619796
    %v2646 = vmul.f32 %v2643, %v2645
    %v2647 = vadd.f32 %v2646, 0.0036580483
    %v2648 = vmul.f32 %v2643, %v2647
    %v2649 = vadd.f32 %v2648, 0.05243302
    %v2650 = vmul.f32 %v2643, %v2649
    %v2651 = vadd.f32 %v2650, 0.18741608
    %v2652 = vmul.f32 %v2643, %v2651
    %v2653 = vadd.f32 %v2652, 1.1283791
    %v2654 = vmul.f32 %v709, %v2653
    %v2655 = vmul.f32 %v2643, 3.8918573e-05
    %v2656 = vadd.f32 %v2655, 0.001143296
    %v2657 = vmul.f32 %v2643, %v2656
    %v2658 = vadd.f32 %v2657, 0.014752088
    %v2659 = vmul.f32 %v2643, %v2658
    %v2660 = vadd.f32 %v2659, 0.112945676
    %v2661 = vmul.f32 %v2643, %v2660
    %v2662 = vadd.f32 %v2661, 0.4994258
    %v2663 = vmul.f32 %v2643, %v2662
    %v2664 = vadd.f32 %v2663, 1.0
    %v2665 = vrcp.pop %v2664
    %v2666 = vmul.f32 %v2664, %v2665
    %v2667 = vsub.f32 1.0, %v2666
    %v2668 = vmul.f32 %v2665, %v2667
    %v2669 = vadd.f32 %v2665, %v2668
    %vm2670 = vweird.f32 %v2664
    %vm2671 = vweird.f32 %v2665
    %vm2672 = vmor %vm2670, %vm2671
    %v2673 = vsel %vm2672, %v2665, %v2669
    %v2674 = vand.u32 2147483647, %v2664
    %vm2675 = vcmp.eq.f32.partialorder %v2674, 8.507059e+37
    %v2676 = vand.u32 %v2664, 2147483648
    %v2677 = vor.u32 1.1754944e-38, %v2676
    %v2678 = vsel %vm2675, %v2677, %v2673
    %v2679 = vmul.f32 %v2654, %v2678
    %v2680 = vmin.f32 %v2679, 1.0
    %v2681 = vmax.f32 %v2680, -1.0
    %v2682 = vmul.f32 %v710, %v710
    %v2683 = vmin.f32 16.0, %v2682
    %v2684 = vmul.f32 %v2683, 2.1237322e-06
    %v2685 = vadd.f32 %v2684, 0.00028619796
    %v2686 = vmul.f32 %v2683, %v2685
    %v2687 = vadd.f32 %v2686, 0.0036580483
    %v2688 = vmul.f32 %v2683, %v2687
    %v2689 = vadd.f32 %v2688, 0.05243302
    %v2690 = vmul.f32 %v2683, %v2689
    %v2691 = vadd.f32 %v2690, 0.18741608
    %v2692 = vmul.f32 %v2683, %v2691
    %v2693 = vadd.f32 %v2692, 1.1283791
    %v2694 = vmul.f32 %v710, %v2693
    %v2695 = vmul.f32 %v2683, 3.8918573e-05
    %v2696 = vadd.f32 %v2695, 0.001143296
    %v2697 = vmul.f32 %v2683, %v2696
    %v2698 = vadd.f32 %v2697, 0.014752088
    %v2699 = vmul.f32 %v2683, %v2698
    %v2700 = vadd.f32 %v2699, 0.112945676
    %v2701 = vmul.f32 %v2683, %v2700
    %v2702 = vadd.f32 %v2701, 0.4994258
    %v2703 = vmul.f32 %v2683, %v2702
    %v2704 = vadd.f32 %v2703, 1.0
    %v2705 = vrcp.pop %v2704
    %v2706 = vmul.f32 %v2704, %v2705
    %v2707 = vsub.f32 1.0, %v2706
    %v2708 = vmul.f32 %v2705, %v2707
    %v2709 = vadd.f32 %v2705, %v2708
    %vm2710 = vweird.f32 %v2704
    %vm2711 = vweird.f32 %v2705
    %vm2712 = vmor %vm2710, %vm2711
    %v2713 = vsel %vm2712, %v2705, %v2709
    %v2714 = vand.u32 2147483647, %v2704
    %vm2715 = vcmp.eq.f32.partialorder %v2714, 8.507059e+37
    %v2716 = vand.u32 %v2704, 2147483648
    %v2717 = vor.u32 1.1754944e-38, %v2716
    %v2718 = vsel %vm2715, %v2717, %v2713
    %v2719 = vmul.f32 %v2694, %v2718
    %v2720 = vmin.f32 %v2719, 1.0
    %v2721 = vmax.f32 %v2720, -1.0
    %v2722 = vmul.f32 %v711, %v711
    %v2723 = vmin.f32 16.0, %v2722
    %v2724 = vmul.f32 %v2723, 2.1237322e-06
    %v2725 = vadd.f32 %v2724, 0.00028619796
    %v2726 = vmul.f32 %v2723, %v2725
    %v2727 = vadd.f32 %v2726, 0.0036580483
    %v2728 = vmul.f32 %v2723, %v2727
    %v2729 = vadd.f32 %v2728, 0.05243302
    %v2730 = vmul.f32 %v2723, %v2729
    %v2731 = vadd.f32 %v2730, 0.18741608
    %v2732 = vmul.f32 %v2723, %v2731
    %v2733 = vadd.f32 %v2732, 1.1283791
    %v2734 = vmul.f32 %v711, %v2733
    %v2735 = vmul.f32 %v2723, 3.8918573e-05
    %v2736 = vadd.f32 %v2735, 0.001143296
    %v2737 = vmul.f32 %v2723, %v2736
    %v2738 = vadd.f32 %v2737, 0.014752088
    %v2739 = vmul.f32 %v2723, %v2738
    %v2740 = vadd.f32 %v2739, 0.112945676
    %v2741 = vmul.f32 %v2723, %v2740
    %v2742 = vadd.f32 %v2741, 0.4994258
    %v2743 = vmul.f32 %v2723, %v2742
    %v2744 = vadd.f32 %v2743, 1.0
    %v2745 = vrcp.pop %v2744
    %v2746 = vmul.f32 %v2744, %v2745
    %v2747 = vsub.f32 1.0, %v2746
    %v2748 = vmul.f32 %v2745, %v2747
    %v2749 = vadd.f32 %v2745, %v2748
    %vm2750 = vweird.f32 %v2744
    %vm2751 = vweird.f32 %v2745
    %vm2752 = vmor %vm2750, %vm2751
    %v2753 = vsel %vm2752, %v2745, %v2749
    %v2754 = vand.u32 2147483647, %v2744
    %vm2755 = vcmp.eq.f32.partialorder %v2754, 8.507059e+37
    %v2756 = vand.u32 %v2744, 2147483648
    %v2757 = vor.u32 1.1754944e-38, %v2756
    %v2758 = vsel %vm2755, %v2757, %v2753
    %v2759 = vmul.f32 %v2734, %v2758
    %v2760 = vmin.f32 %v2759, 1.0
    %v2761 = vmax.f32 %v2760, -1.0
    %v2762 = vmul.f32 %v712, %v712
    %v2763 = vmin.f32 16.0, %v2762
    %v2764 = vmul.f32 %v2763, 2.1237322e-06
    %v2765 = vadd.f32 %v2764, 0.00028619796
    %v2766 = vmul.f32 %v2763, %v2765
    %v2767 = vadd.f32 %v2766, 0.0036580483
    %v2768 = vmul.f32 %v2763, %v2767
    %v2769 = vadd.f32 %v2768, 0.05243302
    %v2770 = vmul.f32 %v2763, %v2769
    %v2771 = vadd.f32 %v2770, 0.18741608
    %v2772 = vmul.f32 %v2763, %v2771
    %v2773 = vadd.f32 %v2772, 1.1283791
    %v2774 = vmul.f32 %v712, %v2773
    %v2775 = vmul.f32 %v2763, 3.8918573e-05
    %v2776 = vadd.f32 %v2775, 0.001143296
    %v2777 = vmul.f32 %v2763, %v2776
    %v2778 = vadd.f32 %v2777, 0.014752088
    %v2779 = vmul.f32 %v2763, %v2778
    %v2780 = vadd.f32 %v2779, 0.112945676
    %v2781 = vmul.f32 %v2763, %v2780
    %v2782 = vadd.f32 %v2781, 0.4994258
    %v2783 = vmul.f32 %v2763, %v2782
    %v2784 = vadd.f32 %v2783, 1.0
    %v2785 = vrcp.pop %v2784
    %v2786 = vmul.f32 %v2784, %v2785
    %v2787 = vsub.f32 1.0, %v2786
    %v2788 = vmul.f32 %v2785, %v2787
    %v2789 = vadd.f32 %v2785, %v2788
    %vm2790 = vweird.f32 %v2784
    %vm2791 = vweird.f32 %v2785
    %vm2792 = vmor %vm2790, %vm2791
    %v2793 = vsel %vm2792, %v2785, %v2789
    %v2794 = vand.u32 2147483647, %v2784
    %vm2795 = vcmp.eq.f32.partialorder %v2794, 8.507059e+37
    %v2796 = vand.u32 %v2784, 2147483648
    %v2797 = vor.u32 1.1754944e-38, %v2796
    %v2798 = vsel %vm2795, %v2797, %v2793
    %v2799 = vmul.f32 %v2774, %v2798
    %v2800 = vmin.f32 %v2799, 1.0
    %v2801 = vmax.f32 %v2800, -1.0
    %v2802 = vmul.f32 %v713, %v713
    %v2803 = vmin.f32 16.0, %v2802
    %v2804 = vmul.f32 %v2803, 2.1237322e-06
    %v2805 = vadd.f32 %v2804, 0.00028619796
    %v2806 = vmul.f32 %v2803, %v2805
    %v2807 = vadd.f32 %v2806, 0.0036580483
    %v2808 = vmul.f32 %v2803, %v2807
    %v2809 = vadd.f32 %v2808, 0.05243302
    %v2810 = vmul.f32 %v2803, %v2809
    %v2811 = vadd.f32 %v2810, 0.18741608
    %v2812 = vmul.f32 %v2803, %v2811
    %v2813 = vadd.f32 %v2812, 1.1283791
    %v2814 = vmul.f32 %v713, %v2813
    %v2815 = vmul.f32 %v2803, 3.8918573e-05
    %v2816 = vadd.f32 %v2815, 0.001143296
    %v2817 = vmul.f32 %v2803, %v2816
    %v2818 = vadd.f32 %v2817, 0.014752088
    %v2819 = vmul.f32 %v2803, %v2818
    %v2820 = vadd.f32 %v2819, 0.112945676
    %v2821 = vmul.f32 %v2803, %v2820
    %v2822 = vadd.f32 %v2821, 0.4994258
    %v2823 = vmul.f32 %v2803, %v2822
    %v2824 = vadd.f32 %v2823, 1.0
    %v2825 = vrcp.pop %v2824
    %v2826 = vmul.f32 %v2824, %v2825
    %v2827 = vsub.f32 1.0, %v2826
    %v2828 = vmul.f32 %v2825, %v2827
    %v2829 = vadd.f32 %v2825, %v2828
    %vm2830 = vweird.f32 %v2824
    %vm2831 = vweird.f32 %v2825
    %vm2832 = vmor %vm2830, %vm2831
    %v2833 = vsel %vm2832, %v2825, %v2829
    %v2834 = vand.u32 2147483647, %v2824
    %vm2835 = vcmp.eq.f32.partialorder %v2834, 8.507059e+37
    %v2836 = vand.u32 %v2824, 2147483648
    %v2837 = vor.u32 1.1754944e-38, %v2836
    %v2838 = vsel %vm2835, %v2837, %v2833
    %v2839 = vmul.f32 %v2814, %v2838
    %v2840 = vmin.f32 %v2839, 1.0
    %v2841 = vmax.f32 %v2840, -1.0
    %v2842 = vmul.f32 %v714, %v714
    %v2843 = vmin.f32 16.0, %v2842
    %v2844 = vmul.f32 %v2843, 2.1237322e-06
    %v2845 = vadd.f32 %v2844, 0.00028619796
    %v2846 = vmul.f32 %v2843, %v2845
    %v2847 = vadd.f32 %v2846, 0.0036580483
    %v2848 = vmul.f32 %v2843, %v2847
    %v2849 = vadd.f32 %v2848, 0.05243302
    %v2850 = vmul.f32 %v2843, %v2849
    %v2851 = vadd.f32 %v2850, 0.18741608
    %v2852 = vmul.f32 %v2843, %v2851
    %v2853 = vadd.f32 %v2852, 1.1283791
    %v2854 = vmul.f32 %v714, %v2853
    %v2855 = vmul.f32 %v2843, 3.8918573e-05
    %v2856 = vadd.f32 %v2855, 0.001143296
    %v2857 = vmul.f32 %v2843, %v2856
    %v2858 = vadd.f32 %v2857, 0.014752088
    %v2859 = vmul.f32 %v2843, %v2858
    %v2860 = vadd.f32 %v2859, 0.112945676
    %v2861 = vmul.f32 %v2843, %v2860
    %v2862 = vadd.f32 %v2861, 0.4994258
    %v2863 = vmul.f32 %v2843, %v2862
    %v2864 = vadd.f32 %v2863, 1.0
    %v2865 = vrcp.pop %v2864
    %v2866 = vmul.f32 %v2864, %v2865
    %v2867 = vsub.f32 1.0, %v2866
    %v2868 = vmul.f32 %v2865, %v2867
    %v2869 = vadd.f32 %v2865, %v2868
    %vm2870 = vweird.f32 %v2864
    %vm2871 = vweird.f32 %v2865
    %vm2872 = vmor %vm2870, %vm2871
    %v2873 = vsel %vm2872, %v2865, %v2869
    %v2874 = vand.u32 2147483647, %v2864
    %vm2875 = vcmp.eq.f32.partialorder %v2874, 8.507059e+37
    %v2876 = vand.u32 %v2864, 2147483648
    %v2877 = vor.u32 1.1754944e-38, %v2876
    %v2878 = vsel %vm2875, %v2877, %v2873
    %v2879 = vmul.f32 %v2854, %v2878
    %v2880 = vmin.f32 %v2879, 1.0
    %v2881 = vmax.f32 %v2880, -1.0
    %v2882 = vmul.f32 %v715, %v715
    %v2883 = vmin.f32 16.0, %v2882
    %v2884 = vmul.f32 %v2883, 2.1237322e-06
    %v2885 = vadd.f32 %v2884, 0.00028619796
    %v2886 = vmul.f32 %v2883, %v2885
    %v2887 = vadd.f32 %v2886, 0.0036580483
    %v2888 = vmul.f32 %v2883, %v2887
    %v2889 = vadd.f32 %v2888, 0.05243302
    %v2890 = vmul.f32 %v2883, %v2889
    %v2891 = vadd.f32 %v2890, 0.18741608
    %v2892 = vmul.f32 %v2883, %v2891
    %v2893 = vadd.f32 %v2892, 1.1283791
    %v2894 = vmul.f32 %v715, %v2893
    %v2895 = vmul.f32 %v2883, 3.8918573e-05
    %v2896 = vadd.f32 %v2895, 0.001143296
    %v2897 = vmul.f32 %v2883, %v2896
    %v2898 = vadd.f32 %v2897, 0.014752088
    %v2899 = vmul.f32 %v2883, %v2898
    %v2900 = vadd.f32 %v2899, 0.112945676
    %v2901 = vmul.f32 %v2883, %v2900
    %v2902 = vadd.f32 %v2901, 0.4994258
    %v2903 = vmul.f32 %v2883, %v2902
    %v2904 = vadd.f32 %v2903, 1.0
    %v2905 = vrcp.pop %v2904
    %v2906 = vmul.f32 %v2904, %v2905
    %v2907 = vsub.f32 1.0, %v2906
    %v2908 = vmul.f32 %v2905, %v2907
    %v2909 = vadd.f32 %v2905, %v2908
    %vm2910 = vweird.f32 %v2904
    %vm2911 = vweird.f32 %v2905
    %vm2912 = vmor %vm2910, %vm2911
    %v2913 = vsel %vm2912, %v2905, %v2909
    %v2914 = vand.u32 2147483647, %v2904
    %vm2915 = vcmp.eq.f32.partialorder %v2914, 8.507059e+37
    %v2916 = vand.u32 %v2904, 2147483648
    %v2917 = vor.u32 1.1754944e-38, %v2916
    %v2918 = vsel %vm2915, %v2917, %v2913
    %v2919 = vmul.f32 %v2894, %v2918
    %v2920 = vmin.f32 %v2919, 1.0
    %v2921 = vmax.f32 %v2920, -1.0
    %v2922 = vmul.f32 %v716, %v716
    %v2923 = vmin.f32 16.0, %v2922
    %v2924 = vmul.f32 %v2923, 2.1237322e-06
    %v2925 = vadd.f32 %v2924, 0.00028619796
    %v2926 = vmul.f32 %v2923, %v2925
    %v2927 = vadd.f32 %v2926, 0.0036580483
    %v2928 = vmul.f32 %v2923, %v2927
    %v2929 = vadd.f32 %v2928, 0.05243302
    %v2930 = vmul.f32 %v2923, %v2929
    %v2931 = vadd.f32 %v2930, 0.18741608
    %v2932 = vmul.f32 %v2923, %v2931
    %v2933 = vadd.f32 %v2932, 1.1283791
    %v2934 = vmul.f32 %v716, %v2933
    %v2935 = vmul.f32 %v2923, 3.8918573e-05
    %v2936 = vadd.f32 %v2935, 0.001143296
    %v2937 = vmul.f32 %v2923, %v2936
    %v2938 = vadd.f32 %v2937, 0.014752088
    %v2939 = vmul.f32 %v2923, %v2938
    %v2940 = vadd.f32 %v2939, 0.112945676
    %v2941 = vmul.f32 %v2923, %v2940
    %v2942 = vadd.f32 %v2941, 0.4994258
    %v2943 = vmul.f32 %v2923, %v2942
    %v2944 = vadd.f32 %v2943, 1.0
    %v2945 = vrcp.pop %v2944
    %v2946 = vmul.f32 %v2944, %v2945
    %v2947 = vsub.f32 1.0, %v2946
    %v2948 = vmul.f32 %v2945, %v2947
    %v2949 = vadd.f32 %v2945, %v2948
    %vm2950 = vweird.f32 %v2944
    %vm2951 = vweird.f32 %v2945
    %vm2952 = vmor %vm2950, %vm2951
    %v2953 = vsel %vm2952, %v2945, %v2949
    %v2954 = vand.u32 2147483647, %v2944
    %vm2955 = vcmp.eq.f32.partialorder %v2954, 8.507059e+37
    %v2956 = vand.u32 %v2944, 2147483648
    %v2957 = vor.u32 1.1754944e-38, %v2956
    %v2958 = vsel %vm2955, %v2957, %v2953
    %v2959 = vmul.f32 %v2934, %v2958
    %v2960 = vmin.f32 %v2959, 1.0
    %v2961 = vmax.f32 %v2960, -1.0
    %v2962 = vmul.f32 %v717, %v717
    %v2963 = vmin.f32 16.0, %v2962
    %v2964 = vmul.f32 %v2963, 2.1237322e-06
    %v2965 = vadd.f32 %v2964, 0.00028619796
    %v2966 = vmul.f32 %v2963, %v2965
    %v2967 = vadd.f32 %v2966, 0.0036580483
    %v2968 = vmul.f32 %v2963, %v2967
    %v2969 = vadd.f32 %v2968, 0.05243302
    %v2970 = vmul.f32 %v2963, %v2969
    %v2971 = vadd.f32 %v2970, 0.18741608
    %v2972 = vmul.f32 %v2963, %v2971
    %v2973 = vadd.f32 %v2972, 1.1283791
    %v2974 = vmul.f32 %v717, %v2973
    %v2975 = vmul.f32 %v2963, 3.8918573e-05
    %v2976 = vadd.f32 %v2975, 0.001143296
    %v2977 = vmul.f32 %v2963, %v2976
    %v2978 = vadd.f32 %v2977, 0.014752088
    %v2979 = vmul.f32 %v2963, %v2978
    %v2980 = vadd.f32 %v2979, 0.112945676
    %v2981 = vmul.f32 %v2963, %v2980
    %v2982 = vadd.f32 %v2981, 0.4994258
    %v2983 = vmul.f32 %v2963, %v2982
    %v2984 = vadd.f32 %v2983, 1.0
    %v2985 = vrcp.pop %v2984
    %v2986 = vmul.f32 %v2984, %v2985
    %v2987 = vsub.f32 1.0, %v2986
    %v2988 = vmul.f32 %v2985, %v2987
    %v2989 = vadd.f32 %v2985, %v2988
    %vm2990 = vweird.f32 %v2984
    %vm2991 = vweird.f32 %v2985
    %vm2992 = vmor %vm2990, %vm2991
    %v2993 = vsel %vm2992, %v2985, %v2989
    %v2994 = vand.u32 2147483647, %v2984
    %vm2995 = vcmp.eq.f32.partialorder %v2994, 8.507059e+37
    %v2996 = vand.u32 %v2984, 2147483648
    %v2997 = vor.u32 1.1754944e-38, %v2996
    %v2998 = vsel %vm2995, %v2997, %v2993
    %v2999 = vmul.f32 %v2974, %v2998
    %v3000 = vmin.f32 %v2999, 1.0
    %v3001 = vmax.f32 %v3000, -1.0
    %v3002 = vmul.f32 %v718, %v718
    %v3003 = vmin.f32 16.0, %v3002
    %v3004 = vmul.f32 %v3003, 2.1237322e-06
    %v3005 = vadd.f32 %v3004, 0.00028619796
    %v3006 = vmul.f32 %v3003, %v3005
    %v3007 = vadd.f32 %v3006, 0.0036580483
    %v3008 = vmul.f32 %v3003, %v3007
    %v3009 = vadd.f32 %v3008, 0.05243302
    %v3010 = vmul.f32 %v3003, %v3009
    %v3011 = vadd.f32 %v3010, 0.18741608
    %v3012 = vmul.f32 %v3003, %v3011
    %v3013 = vadd.f32 %v3012, 1.1283791
    %v3014 = vmul.f32 %v718, %v3013
    %v3015 = vmul.f32 %v3003, 3.8918573e-05
    %v3016 = vadd.f32 %v3015, 0.001143296
    %v3017 = vmul.f32 %v3003, %v3016
    %v3018 = vadd.f32 %v3017, 0.014752088
    %v3019 = vmul.f32 %v3003, %v3018
    %v3020 = vadd.f32 %v3019, 0.112945676
    %v3021 = vmul.f32 %v3003, %v3020
    %v3022 = vadd.f32 %v3021, 0.4994258
    %v3023 = vmul.f32 %v3003, %v3022
    %v3024 = vadd.f32 %v3023, 1.0
    %v3025 = vrcp.pop %v3024
    %v3026 = vmul.f32 %v3024, %v3025
    %v3027 = vsub.f32 1.0, %v3026
    %v3028 = vmul.f32 %v3025, %v3027
    %v3029 = vadd.f32 %v3025, %v3028
    %vm3030 = vweird.f32 %v3024
    %vm3031 = vweird.f32 %v3025
    %vm3032 = vmor %vm3030, %vm3031
    %v3033 = vsel %vm3032, %v3025, %v3029
    %v3034 = vand.u32 2147483647, %v3024
    %vm3035 = vcmp.eq.f32.partialorder %v3034, 8.507059e+37
    %v3036 = vand.u32 %v3024, 2147483648
    %v3037 = vor.u32 1.1754944e-38, %v3036
    %v3038 = vsel %vm3035, %v3037, %v3033
    %v3039 = vmul.f32 %v3014, %v3038
    %v3040 = vmin.f32 %v3039, 1.0
    %v3041 = vmax.f32 %v3040, -1.0
    %v3042 = vmul.f32 %v719, %v719
    %v3043 = vmin.f32 16.0, %v3042
    %v3044 = vmul.f32 %v3043, 2.1237322e-06
    %v3045 = vadd.f32 %v3044, 0.00028619796
    %v3046 = vmul.f32 %v3043, %v3045
    %v3047 = vadd.f32 %v3046, 0.0036580483
    %v3048 = vmul.f32 %v3043, %v3047
    %v3049 = vadd.f32 %v3048, 0.05243302
    %v3050 = vmul.f32 %v3043, %v3049
    %v3051 = vadd.f32 %v3050, 0.18741608
    %v3052 = vmul.f32 %v3043, %v3051
    %v3053 = vadd.f32 %v3052, 1.1283791
    %v3054 = vmul.f32 %v719, %v3053
    %v3055 = vmul.f32 %v3043, 3.8918573e-05
    %v3056 = vadd.f32 %v3055, 0.001143296
    %v3057 = vmul.f32 %v3043, %v3056
    %v3058 = vadd.f32 %v3057, 0.014752088
    %v3059 = vmul.f32 %v3043, %v3058
    %v3060 = vadd.f32 %v3059, 0.112945676
    %v3061 = vmul.f32 %v3043, %v3060
    %v3062 = vadd.f32 %v3061, 0.4994258
    %v3063 = vmul.f32 %v3043, %v3062
    %v3064 = vadd.f32 %v3063, 1.0
    %v3065 = vrcp.pop %v3064
    %v3066 = vmul.f32 %v3064, %v3065
    %v3067 = vsub.f32 1.0, %v3066
    %v3068 = vmul.f32 %v3065, %v3067
    %v3069 = vadd.f32 %v3065, %v3068
    %vm3070 = vweird.f32 %v3064
    %vm3071 = vweird.f32 %v3065
    %vm3072 = vmor %vm3070, %vm3071
    %v3073 = vsel %vm3072, %v3065, %v3069
    %v3074 = vand.u32 2147483647, %v3064
    %vm3075 = vcmp.eq.f32.partialorder %v3074, 8.507059e+37
    %v3076 = vand.u32 %v3064, 2147483648
    %v3077 = vor.u32 1.1754944e-38, %v3076
    %v3078 = vsel %vm3075, %v3077, %v3073
    %v3079 = vmul.f32 %v3054, %v3078
    %v3080 = vmin.f32 %v3079, 1.0
    %v3081 = vmax.f32 %v3080, -1.0
    %v3082 = vmul.f32 %v720, %v720
    %v3083 = vmin.f32 16.0, %v3082
    %v3084 = vmul.f32 %v3083, 2.1237322e-06
    %v3085 = vadd.f32 %v3084, 0.00028619796
    %v3086 = vmul.f32 %v3083, %v3085
    %v3087 = vadd.f32 %v3086, 0.0036580483
    %v3088 = vmul.f32 %v3083, %v3087
    %v3089 = vadd.f32 %v3088, 0.05243302
    %v3090 = vmul.f32 %v3083, %v3089
    %v3091 = vadd.f32 %v3090, 0.18741608
    %v3092 = vmul.f32 %v3083, %v3091
    %v3093 = vadd.f32 %v3092, 1.1283791
    %v3094 = vmul.f32 %v720, %v3093
    %v3095 = vmul.f32 %v3083, 3.8918573e-05
    %v3096 = vadd.f32 %v3095, 0.001143296
    %v3097 = vmul.f32 %v3083, %v3096
    %v3098 = vadd.f32 %v3097, 0.014752088
    %v3099 = vmul.f32 %v3083, %v3098
    %v3100 = vadd.f32 %v3099, 0.112945676
    %v3101 = vmul.f32 %v3083, %v3100
    %v3102 = vadd.f32 %v3101, 0.4994258
    %v3103 = vmul.f32 %v3083, %v3102
    %v3104 = vadd.f32 %v3103, 1.0
    %v3105 = vrcp.pop %v3104
    %v3106 = vmul.f32 %v3104, %v3105
    %v3107 = vsub.f32 1.0, %v3106
    %v3108 = vmul.f32 %v3105, %v3107
    %v3109 = vadd.f32 %v3105, %v3108
    %vm3110 = vweird.f32 %v3104
    %vm3111 = vweird.f32 %v3105
    %vm3112 = vmor %vm3110, %vm3111
    %v3113 = vsel %vm3112, %v3105, %v3109
    %v3114 = vand.u32 2147483647, %v3104
    %vm3115 = vcmp.eq.f32.partialorder %v3114, 8.507059e+37
    %v3116 = vand.u32 %v3104, 2147483648
    %v3117 = vor.u32 1.1754944e-38, %v3116
    %v3118 = vsel %vm3115, %v3117, %v3113
    %v3119 = vmul.f32 %v3094, %v3118
    %v3120 = vmin.f32 %v3119, 1.0
    %v3121 = vmax.f32 %v3120, -1.0
    %v3122 = vmul.f32 %v721, %v721
    %v3123 = vmin.f32 16.0, %v3122
    %v3124 = vmul.f32 %v3123, 2.1237322e-06
    %v3125 = vadd.f32 %v3124, 0.00028619796
    %v3126 = vmul.f32 %v3123, %v3125
    %v3127 = vadd.f32 %v3126, 0.0036580483
    %v3128 = vmul.f32 %v3123, %v3127
    %v3129 = vadd.f32 %v3128, 0.05243302
    %v3130 = vmul.f32 %v3123, %v3129
    %v3131 = vadd.f32 %v3130, 0.18741608
    %v3132 = vmul.f32 %v3123, %v3131
    %v3133 = vadd.f32 %v3132, 1.1283791
    %v3134 = vmul.f32 %v721, %v3133
    %v3135 = vmul.f32 %v3123, 3.8918573e-05
    %v3136 = vadd.f32 %v3135, 0.001143296
    %v3137 = vmul.f32 %v3123, %v3136
    %v3138 = vadd.f32 %v3137, 0.014752088
    %v3139 = vmul.f32 %v3123, %v3138
    %v3140 = vadd.f32 %v3139, 0.112945676
    %v3141 = vmul.f32 %v3123, %v3140
    %v3142 = vadd.f32 %v3141, 0.4994258
    %v3143 = vmul.f32 %v3123, %v3142
    %v3144 = vadd.f32 %v3143, 1.0
    %v3145 = vrcp.pop %v3144
    %v3146 = vmul.f32 %v3144, %v3145
    %v3147 = vsub.f32 1.0, %v3146
    %v3148 = vmul.f32 %v3145, %v3147
    %v3149 = vadd.f32 %v3145, %v3148
    %vm3150 = vweird.f32 %v3144
    %vm3151 = vweird.f32 %v3145
    %vm3152 = vmor %vm3150, %vm3151
    %v3153 = vsel %vm3152, %v3145, %v3149
    %v3154 = vand.u32 2147483647, %v3144
    %vm3155 = vcmp.eq.f32.partialorder %v3154, 8.507059e+37
    %v3156 = vand.u32 %v3144, 2147483648
    %v3157 = vor.u32 1.1754944e-38, %v3156
    %v3158 = vsel %vm3155, %v3157, %v3153
    %v3159 = vmul.f32 %v3134, %v3158
    %v3160 = vmin.f32 %v3159, 1.0
    %v3161 = vmax.f32 %v3160, -1.0
    %v3162 = vmul.f32 %v722, %v722
    %v3163 = vmin.f32 16.0, %v3162
    %v3164 = vmul.f32 %v3163, 2.1237322e-06
    %v3165 = vadd.f32 %v3164, 0.00028619796
    %v3166 = vmul.f32 %v3163, %v3165
    %v3167 = vadd.f32 %v3166, 0.0036580483
    %v3168 = vmul.f32 %v3163, %v3167
    %v3169 = vadd.f32 %v3168, 0.05243302
    %v3170 = vmul.f32 %v3163, %v3169
    %v3171 = vadd.f32 %v3170, 0.18741608
    %v3172 = vmul.f32 %v3163, %v3171
    %v3173 = vadd.f32 %v3172, 1.1283791
    %v3174 = vmul.f32 %v722, %v3173
    %v3175 = vmul.f32 %v3163, 3.8918573e-05
    %v3176 = vadd.f32 %v3175, 0.001143296
    %v3177 = vmul.f32 %v3163, %v3176
    %v3178 = vadd.f32 %v3177, 0.014752088
    %v3179 = vmul.f32 %v3163, %v3178
    %v3180 = vadd.f32 %v3179, 0.112945676
    %v3181 = vmul.f32 %v3163, %v3180
    %v3182 = vadd.f32 %v3181, 0.4994258
    %v3183 = vmul.f32 %v3163, %v3182
    %v3184 = vadd.f32 %v3183, 1.0
    %v3185 = vrcp.pop %v3184
    %v3186 = vmul.f32 %v3184, %v3185
    %v3187 = vsub.f32 1.0, %v3186
    %v3188 = vmul.f32 %v3185, %v3187
    %v3189 = vadd.f32 %v3185, %v3188
    %vm3190 = vweird.f32 %v3184
    %vm3191 = vweird.f32 %v3185
    %vm3192 = vmor %vm3190, %vm3191
    %v3193 = vsel %vm3192, %v3185, %v3189
    %v3194 = vand.u32 2147483647, %v3184
    %vm3195 = vcmp.eq.f32.partialorder %v3194, 8.507059e+37
    %v3196 = vand.u32 %v3184, 2147483648
    %v3197 = vor.u32 1.1754944e-38, %v3196
    %v3198 = vsel %vm3195, %v3197, %v3193
    %v3199 = vmul.f32 %v3174, %v3198
    %v3200 = vmin.f32 %v3199, 1.0
    %v3201 = vmax.f32 %v3200, -1.0
    %v3202 = vmul.f32 %v723, %v723
    %v3203 = vmin.f32 16.0, %v3202
    %v3204 = vmul.f32 %v3203, 2.1237322e-06
    %v3205 = vadd.f32 %v3204, 0.00028619796
    %v3206 = vmul.f32 %v3203, %v3205
    %v3207 = vadd.f32 %v3206, 0.0036580483
    %v3208 = vmul.f32 %v3203, %v3207
    %v3209 = vadd.f32 %v3208, 0.05243302
    %v3210 = vmul.f32 %v3203, %v3209
    %v3211 = vadd.f32 %v3210, 0.18741608
    %v3212 = vmul.f32 %v3203, %v3211
    %v3213 = vadd.f32 %v3212, 1.1283791
    %v3214 = vmul.f32 %v723, %v3213
    %v3215 = vmul.f32 %v3203, 3.8918573e-05
    %v3216 = vadd.f32 %v3215, 0.001143296
    %v3217 = vmul.f32 %v3203, %v3216
    %v3218 = vadd.f32 %v3217, 0.014752088
    %v3219 = vmul.f32 %v3203, %v3218
    %v3220 = vadd.f32 %v3219, 0.112945676
    %v3221 = vmul.f32 %v3203, %v3220
    %v3222 = vadd.f32 %v3221, 0.4994258
    %v3223 = vmul.f32 %v3203, %v3222
    %v3224 = vadd.f32 %v3223, 1.0
    %v3225 = vrcp.pop %v3224
    %v3226 = vmul.f32 %v3224, %v3225
    %v3227 = vsub.f32 1.0, %v3226
    %v3228 = vmul.f32 %v3225, %v3227
    %v3229 = vadd.f32 %v3225, %v3228
    %vm3230 = vweird.f32 %v3224
    %vm3231 = vweird.f32 %v3225
    %vm3232 = vmor %vm3230, %vm3231
    %v3233 = vsel %vm3232, %v3225, %v3229
    %v3234 = vand.u32 2147483647, %v3224
    %vm3235 = vcmp.eq.f32.partialorder %v3234, 8.507059e+37
    %v3236 = vand.u32 %v3224, 2147483648
    %v3237 = vor.u32 1.1754944e-38, %v3236
    %v3238 = vsel %vm3235, %v3237, %v3233
    %v3239 = vmul.f32 %v3214, %v3238
    %v3240 = vmin.f32 %v3239, 1.0
    %v3241 = vmax.f32 %v3240, -1.0
    %v3242 = vmul.f32 %v724, %v724
    %v3243 = vmin.f32 16.0, %v3242
    %v3244 = vmul.f32 %v3243, 2.1237322e-06
    %v3245 = vadd.f32 %v3244, 0.00028619796
    %v3246 = vmul.f32 %v3243, %v3245
    %v3247 = vadd.f32 %v3246, 0.0036580483
    %v3248 = vmul.f32 %v3243, %v3247
    %v3249 = vadd.f32 %v3248, 0.05243302
    %v3250 = vmul.f32 %v3243, %v3249
    %v3251 = vadd.f32 %v3250, 0.18741608
    %v3252 = vmul.f32 %v3243, %v3251
    %v3253 = vadd.f32 %v3252, 1.1283791
    %v3254 = vmul.f32 %v724, %v3253
    %v3255 = vmul.f32 %v3243, 3.8918573e-05
    %v3256 = vadd.f32 %v3255, 0.001143296
    %v3257 = vmul.f32 %v3243, %v3256
    %v3258 = vadd.f32 %v3257, 0.014752088
    %v3259 = vmul.f32 %v3243, %v3258
    %v3260 = vadd.f32 %v3259, 0.112945676
    %v3261 = vmul.f32 %v3243, %v3260
    %v3262 = vadd.f32 %v3261, 0.4994258
    %v3263 = vmul.f32 %v3243, %v3262
    %v3264 = vadd.f32 %v3263, 1.0
    %v3265 = vrcp.pop %v3264
    %v3266 = vmul.f32 %v3264, %v3265
    %v3267 = vsub.f32 1.0, %v3266
    %v3268 = vmul.f32 %v3265, %v3267
    %v3269 = vadd.f32 %v3265, %v3268
    %vm3270 = vweird.f32 %v3264
    %vm3271 = vweird.f32 %v3265
    %vm3272 = vmor %vm3270, %vm3271
    %v3273 = vsel %vm3272, %v3265, %v3269
    %v3274 = vand.u32 2147483647, %v3264
    %vm3275 = vcmp.eq.f32.partialorder %v3274, 8.507059e+37
    %v3276 = vand.u32 %v3264, 2147483648
    %v3277 = vor.u32 1.1754944e-38, %v3276
    %v3278 = vsel %vm3275, %v3277, %v3273
    %v3279 = vmul.f32 %v3254, %v3278
    %v3280 = vmin.f32 %v3279, 1.0
    %v3281 = vmax.f32 %v3280, -1.0
    %v3282 = vmul.f32 %v725, %v725
    %v3283 = vmin.f32 16.0, %v3282
    %v3284 = vmul.f32 %v3283, 2.1237322e-06
    %v3285 = vadd.f32 %v3284, 0.00028619796
    %v3286 = vmul.f32 %v3283, %v3285
    %v3287 = vadd.f32 %v3286, 0.0036580483
    %v3288 = vmul.f32 %v3283, %v3287
    %v3289 = vadd.f32 %v3288, 0.05243302
    %v3290 = vmul.f32 %v3283, %v3289
    %v3291 = vadd.f32 %v3290, 0.18741608
    %v3292 = vmul.f32 %v3283, %v3291
    %v3293 = vadd.f32 %v3292, 1.1283791
    %v3294 = vmul.f32 %v725, %v3293
    %v3295 = vmul.f32 %v3283, 3.8918573e-05
    %v3296 = vadd.f32 %v3295, 0.001143296
    %v3297 = vmul.f32 %v3283, %v3296
    %v3298 = vadd.f32 %v3297, 0.014752088
    %v3299 = vmul.f32 %v3283, %v3298
    %v3300 = vadd.f32 %v3299, 0.112945676
    %v3301 = vmul.f32 %v3283, %v3300
    %v3302 = vadd.f32 %v3301, 0.4994258
    %v3303 = vmul.f32 %v3283, %v3302
    %v3304 = vadd.f32 %v3303, 1.0
    %v3305 = vrcp.pop %v3304
    %v3306 = vmul.f32 %v3304, %v3305
    %v3307 = vsub.f32 1.0, %v3306
    %v3308 = vmul.f32 %v3305, %v3307
    %v3309 = vadd.f32 %v3305, %v3308
    %vm3310 = vweird.f32 %v3304
    %vm3311 = vweird.f32 %v3305
    %vm3312 = vmor %vm3310, %vm3311
    %v3313 = vsel %vm3312, %v3305, %v3309
    %v3314 = vand.u32 2147483647, %v3304
    %vm3315 = vcmp.eq.f32.partialorder %v3314, 8.507059e+37
    %v3316 = vand.u32 %v3304, 2147483648
    %v3317 = vor.u32 1.1754944e-38, %v3316
    %v3318 = vsel %vm3315, %v3317, %v3313
    %v3319 = vmul.f32 %v3294, %v3318
    %v3320 = vmin.f32 %v3319, 1.0
    %v3321 = vmax.f32 %v3320, -1.0
    %v3322 = vmul.f32 %v726, %v726
    %v3323 = vmin.f32 16.0, %v3322
    %v3324 = vmul.f32 %v3323, 2.1237322e-06
    %v3325 = vadd.f32 %v3324, 0.00028619796
    %v3326 = vmul.f32 %v3323, %v3325
    %v3327 = vadd.f32 %v3326, 0.0036580483
    %v3328 = vmul.f32 %v3323, %v3327
    %v3329 = vadd.f32 %v3328, 0.05243302
    %v3330 = vmul.f32 %v3323, %v3329
    %v3331 = vadd.f32 %v3330, 0.18741608
    %v3332 = vmul.f32 %v3323, %v3331
    %v3333 = vadd.f32 %v3332, 1.1283791
    %v3334 = vmul.f32 %v726, %v3333
    %v3335 = vmul.f32 %v3323, 3.8918573e-05
    %v3336 = vadd.f32 %v3335, 0.001143296
    %v3337 = vmul.f32 %v3323, %v3336
    %v3338 = vadd.f32 %v3337, 0.014752088
    %v3339 = vmul.f32 %v3323, %v3338
    %v3340 = vadd.f32 %v3339, 0.112945676
    %v3341 = vmul.f32 %v3323, %v3340
    %v3342 = vadd.f32 %v3341, 0.4994258
    %v3343 = vmul.f32 %v3323, %v3342
    %v3344 = vadd.f32 %v3343, 1.0
    %v3345 = vrcp.pop %v3344
    %v3346 = vmul.f32 %v3344, %v3345
    %v3347 = vsub.f32 1.0, %v3346
    %v3348 = vmul.f32 %v3345, %v3347
    %v3349 = vadd.f32 %v3345, %v3348
    %vm3350 = vweird.f32 %v3344
    %vm3351 = vweird.f32 %v3345
    %vm3352 = vmor %vm3350, %vm3351
    %v3353 = vsel %vm3352, %v3345, %v3349
    %v3354 = vand.u32 2147483647, %v3344
    %vm3355 = vcmp.eq.f32.partialorder %v3354, 8.507059e+37
    %v3356 = vand.u32 %v3344, 2147483648
    %v3357 = vor.u32 1.1754944e-38, %v3356
    %v3358 = vsel %vm3355, %v3357, %v3353
    %v3359 = vmul.f32 %v3334, %v3358
    %v3360 = vmin.f32 %v3359, 1.0
    %v3361 = vmax.f32 %v3360, -1.0
    %v3362 = vmul.f32 %v727, %v727
    %v3363 = vmin.f32 16.0, %v3362
    %v3364 = vmul.f32 %v3363, 2.1237322e-06
    %v3365 = vadd.f32 %v3364, 0.00028619796
    %v3366 = vmul.f32 %v3363, %v3365
    %v3367 = vadd.f32 %v3366, 0.0036580483
    %v3368 = vmul.f32 %v3363, %v3367
    %v3369 = vadd.f32 %v3368, 0.05243302
    %v3370 = vmul.f32 %v3363, %v3369
    %v3371 = vadd.f32 %v3370, 0.18741608
    %v3372 = vmul.f32 %v3363, %v3371
    %v3373 = vadd.f32 %v3372, 1.1283791
    %v3374 = vmul.f32 %v727, %v3373
    %v3375 = vmul.f32 %v3363, 3.8918573e-05
    %v3376 = vadd.f32 %v3375, 0.001143296
    %v3377 = vmul.f32 %v3363, %v3376
    %v3378 = vadd.f32 %v3377, 0.014752088
    %v3379 = vmul.f32 %v3363, %v3378
    %v3380 = vadd.f32 %v3379, 0.112945676
    %v3381 = vmul.f32 %v3363, %v3380
    %v3382 = vadd.f32 %v3381, 0.4994258
    %v3383 = vmul.f32 %v3363, %v3382
    %v3384 = vadd.f32 %v3383, 1.0
    %v3385 = vrcp.pop %v3384
    %v3386 = vmul.f32 %v3384, %v3385
    %v3387 = vsub.f32 1.0, %v3386
    %v3388 = vmul.f32 %v3385, %v3387
    %v3389 = vadd.f32 %v3385, %v3388
    %vm3390 = vweird.f32 %v3384
    %vm3391 = vweird.f32 %v3385
    %vm3392 = vmor %vm3390, %vm3391
    %v3393 = vsel %vm3392, %v3385, %v3389
    %v3394 = vand.u32 2147483647, %v3384
    %vm3395 = vcmp.eq.f32.partialorder %v3394, 8.507059e+37
    %v3396 = vand.u32 %v3384, 2147483648
    %v3397 = vor.u32 1.1754944e-38, %v3396
    %v3398 = vsel %vm3395, %v3397, %v3393
    %v3399 = vmul.f32 %v3374, %v3398
    %v3400 = vmin.f32 %v3399, 1.0
    %v3401 = vmax.f32 %v3400, -1.0
    %v3402 = vmul.f32 %v728, %v728
    %v3403 = vmin.f32 16.0, %v3402
    %v3404 = vmul.f32 %v3403, 2.1237322e-06
    %v3405 = vadd.f32 %v3404, 0.00028619796
    %v3406 = vmul.f32 %v3403, %v3405
    %v3407 = vadd.f32 %v3406, 0.0036580483
    %v3408 = vmul.f32 %v3403, %v3407
    %v3409 = vadd.f32 %v3408, 0.05243302
    %v3410 = vmul.f32 %v3403, %v3409
    %v3411 = vadd.f32 %v3410, 0.18741608
    %v3412 = vmul.f32 %v3403, %v3411
    %v3413 = vadd.f32 %v3412, 1.1283791
    %v3414 = vmul.f32 %v728, %v3413
    %v3415 = vmul.f32 %v3403, 3.8918573e-05
    %v3416 = vadd.f32 %v3415, 0.001143296
    %v3417 = vmul.f32 %v3403, %v3416
    %v3418 = vadd.f32 %v3417, 0.014752088
    %v3419 = vmul.f32 %v3403, %v3418
    %v3420 = vadd.f32 %v3419, 0.112945676
    %v3421 = vmul.f32 %v3403, %v3420
    %v3422 = vadd.f32 %v3421, 0.4994258
    %v3423 = vmul.f32 %v3403, %v3422
    %v3424 = vadd.f32 %v3423, 1.0
    %v3425 = vrcp.pop %v3424
    %v3426 = vmul.f32 %v3424, %v3425
    %v3427 = vsub.f32 1.0, %v3426
    %v3428 = vmul.f32 %v3425, %v3427
    %v3429 = vadd.f32 %v3425, %v3428
    %vm3430 = vweird.f32 %v3424
    %vm3431 = vweird.f32 %v3425
    %vm3432 = vmor %vm3430, %vm3431
    %v3433 = vsel %vm3432, %v3425, %v3429
    %v3434 = vand.u32 2147483647, %v3424
    %vm3435 = vcmp.eq.f32.partialorder %v3434, 8.507059e+37
    %v3436 = vand.u32 %v3424, 2147483648
    %v3437 = vor.u32 1.1754944e-38, %v3436
    %v3438 = vsel %vm3435, %v3437, %v3433
    %v3439 = vmul.f32 %v3414, %v3438
    %v3440 = vmin.f32 %v3439, 1.0
    %v3441 = vmax.f32 %v3440, -1.0
    %v3442 = vmul.f32 %v729, %v729
    %v3443 = vmin.f32 16.0, %v3442
    %v3444 = vmul.f32 %v3443, 2.1237322e-06
    %v3445 = vadd.f32 %v3444, 0.00028619796
    %v3446 = vmul.f32 %v3443, %v3445
    %v3447 = vadd.f32 %v3446, 0.0036580483
    %v3448 = vmul.f32 %v3443, %v3447
    %v3449 = vadd.f32 %v3448, 0.05243302
    %v3450 = vmul.f32 %v3443, %v3449
    %v3451 = vadd.f32 %v3450, 0.18741608
    %v3452 = vmul.f32 %v3443, %v3451
    %v3453 = vadd.f32 %v3452, 1.1283791
    %v3454 = vmul.f32 %v729, %v3453
    %v3455 = vmul.f32 %v3443, 3.8918573e-05
    %v3456 = vadd.f32 %v3455, 0.001143296
    %v3457 = vmul.f32 %v3443, %v3456
    %v3458 = vadd.f32 %v3457, 0.014752088
    %v3459 = vmul.f32 %v3443, %v3458
    %v3460 = vadd.f32 %v3459, 0.112945676
    %v3461 = vmul.f32 %v3443, %v3460
    %v3462 = vadd.f32 %v3461, 0.4994258
    %v3463 = vmul.f32 %v3443, %v3462
    %v3464 = vadd.f32 %v3463, 1.0
    %v3465 = vrcp.pop %v3464
    %v3466 = vmul.f32 %v3464, %v3465
    %v3467 = vsub.f32 1.0, %v3466
    %v3468 = vmul.f32 %v3465, %v3467
    %v3469 = vadd.f32 %v3465, %v3468
    %vm3470 = vweird.f32 %v3464
    %vm3471 = vweird.f32 %v3465
    %vm3472 = vmor %vm3470, %vm3471
    %v3473 = vsel %vm3472, %v3465, %v3469
    %v3474 = vand.u32 2147483647, %v3464
    %vm3475 = vcmp.eq.f32.partialorder %v3474, 8.507059e+37
    %v3476 = vand.u32 %v3464, 2147483648
    %v3477 = vor.u32 1.1754944e-38, %v3476
    %v3478 = vsel %vm3475, %v3477, %v3473
    %v3479 = vmul.f32 %v3454, %v3478
    %v3480 = vmin.f32 %v3479, 1.0
    %v3481 = vmax.f32 %v3480, -1.0
    %v3482 = vmul.f32 %v730, %v730
    %v3483 = vmin.f32 16.0, %v3482
    %v3484 = vmul.f32 %v3483, 2.1237322e-06
    %v3485 = vadd.f32 %v3484, 0.00028619796
    %v3486 = vmul.f32 %v3483, %v3485
    %v3487 = vadd.f32 %v3486, 0.0036580483
    %v3488 = vmul.f32 %v3483, %v3487
    %v3489 = vadd.f32 %v3488, 0.05243302
    %v3490 = vmul.f32 %v3483, %v3489
    %v3491 = vadd.f32 %v3490, 0.18741608
    %v3492 = vmul.f32 %v3483, %v3491
    %v3493 = vadd.f32 %v3492, 1.1283791
    %v3494 = vmul.f32 %v730, %v3493
    %v3495 = vmul.f32 %v3483, 3.8918573e-05
    %v3496 = vadd.f32 %v3495, 0.001143296
    %v3497 = vmul.f32 %v3483, %v3496
    %v3498 = vadd.f32 %v3497, 0.014752088
    %v3499 = vmul.f32 %v3483, %v3498
    %v3500 = vadd.f32 %v3499, 0.112945676
    %v3501 = vmul.f32 %v3483, %v3500
    %v3502 = vadd.f32 %v3501, 0.4994258
    %v3503 = vmul.f32 %v3483, %v3502
    %v3504 = vadd.f32 %v3503, 1.0
    %v3505 = vrcp.pop %v3504
    %v3506 = vmul.f32 %v3504, %v3505
    %v3507 = vsub.f32 1.0, %v3506
    %v3508 = vmul.f32 %v3505, %v3507
    %v3509 = vadd.f32 %v3505, %v3508
    %vm3510 = vweird.f32 %v3504
    %vm3511 = vweird.f32 %v3505
    %vm3512 = vmor %vm3510, %vm3511
    %v3513 = vsel %vm3512, %v3505, %v3509
    %v3514 = vand.u32 2147483647, %v3504
    %vm3515 = vcmp.eq.f32.partialorder %v3514, 8.507059e+37
    %v3516 = vand.u32 %v3504, 2147483648
    %v3517 = vor.u32 1.1754944e-38, %v3516
    %v3518 = vsel %vm3515, %v3517, %v3513
    %v3519 = vmul.f32 %v3494, %v3518
    %v3520 = vmin.f32 %v3519, 1.0
    %v3521 = vmax.f32 %v3520, -1.0
    %v3522 = vmul.f32 %v731, %v731
    %v3523 = vmin.f32 16.0, %v3522
    %v3524 = vmul.f32 %v3523, 2.1237322e-06
    %v3525 = vadd.f32 %v3524, 0.00028619796
    %v3526 = vmul.f32 %v3523, %v3525
    %v3527 = vadd.f32 %v3526, 0.0036580483
    %v3528 = vmul.f32 %v3523, %v3527
    %v3529 = vadd.f32 %v3528, 0.05243302
    %v3530 = vmul.f32 %v3523, %v3529
    %v3531 = vadd.f32 %v3530, 0.18741608
    %v3532 = vmul.f32 %v3523, %v3531
    %v3533 = vadd.f32 %v3532, 1.1283791
    %v3534 = vmul.f32 %v731, %v3533
    %v3535 = vmul.f32 %v3523, 3.8918573e-05
    %v3536 = vadd.f32 %v3535, 0.001143296
    %v3537 = vmul.f32 %v3523, %v3536
    %v3538 = vadd.f32 %v3537, 0.014752088
    %v3539 = vmul.f32 %v3523, %v3538
    %v3540 = vadd.f32 %v3539, 0.112945676
    %v3541 = vmul.f32 %v3523, %v3540
    %v3542 = vadd.f32 %v3541, 0.4994258
    %v3543 = vmul.f32 %v3523, %v3542
    %v3544 = vadd.f32 %v3543, 1.0
    %v3545 = vrcp.pop %v3544
    %v3546 = vmul.f32 %v3544, %v3545
    %v3547 = vsub.f32 1.0, %v3546
    %v3548 = vmul.f32 %v3545, %v3547
    %v3549 = vadd.f32 %v3545, %v3548
    %vm3550 = vweird.f32 %v3544
    %vm3551 = vweird.f32 %v3545
    %vm3552 = vmor %vm3550, %vm3551
    %v3553 = vsel %vm3552, %v3545, %v3549
    %v3554 = vand.u32 2147483647, %v3544
    %vm3555 = vcmp.eq.f32.partialorder %v3554, 8.507059e+37
    %v3556 = vand.u32 %v3544, 2147483648
    %v3557 = vor.u32 1.1754944e-38, %v3556
    %v3558 = vsel %vm3555, %v3557, %v3553
    %v3559 = vmul.f32 %v3534, %v3558
    %v3560 = vmin.f32 %v3559, 1.0
    %v3561 = vmax.f32 %v3560, -1.0
    %v3562 = vmul.f32 %v732, %v732
    %v3563 = vmin.f32 16.0, %v3562
    %v3564 = vmul.f32 %v3563, 2.1237322e-06
    %v3565 = vadd.f32 %v3564, 0.00028619796
    %v3566 = vmul.f32 %v3563, %v3565
    %v3567 = vadd.f32 %v3566, 0.0036580483
    %v3568 = vmul.f32 %v3563, %v3567
    %v3569 = vadd.f32 %v3568, 0.05243302
    %v3570 = vmul.f32 %v3563, %v3569
    %v3571 = vadd.f32 %v3570, 0.18741608
    %v3572 = vmul.f32 %v3563, %v3571
    %v3573 = vadd.f32 %v3572, 1.1283791
    %v3574 = vmul.f32 %v732, %v3573
    %v3575 = vmul.f32 %v3563, 3.8918573e-05
    %v3576 = vadd.f32 %v3575, 0.001143296
    %v3577 = vmul.f32 %v3563, %v3576
    %v3578 = vadd.f32 %v3577, 0.014752088
    %v3579 = vmul.f32 %v3563, %v3578
    %v3580 = vadd.f32 %v3579, 0.112945676
    %v3581 = vmul.f32 %v3563, %v3580
    %v3582 = vadd.f32 %v3581, 0.4994258
    %v3583 = vmul.f32 %v3563, %v3582
    %v3584 = vadd.f32 %v3583, 1.0
    %v3585 = vrcp.pop %v3584
    %v3586 = vmul.f32 %v3584, %v3585
    %v3587 = vsub.f32 1.0, %v3586
    %v3588 = vmul.f32 %v3585, %v3587
    %v3589 = vadd.f32 %v3585, %v3588
    %vm3590 = vweird.f32 %v3584
    %vm3591 = vweird.f32 %v3585
    %vm3592 = vmor %vm3590, %vm3591
    %v3593 = vsel %vm3592, %v3585, %v3589
    %v3594 = vand.u32 2147483647, %v3584
    %vm3595 = vcmp.eq.f32.partialorder %v3594, 8.507059e+37
    %v3596 = vand.u32 %v3584, 2147483648
    %v3597 = vor.u32 1.1754944e-38, %v3596
    %v3598 = vsel %vm3595, %v3597, %v3593
    %v3599 = vmul.f32 %v3574, %v3598
    %v3600 = vmin.f32 %v3599, 1.0
    %v3601 = vmax.f32 %v3600, -1.0
    %v3602 = vmul.f32 %v733, %v733
    %v3603 = vmin.f32 16.0, %v3602
    %v3604 = vmul.f32 %v3603, 2.1237322e-06
    %v3605 = vadd.f32 %v3604, 0.00028619796
    %v3606 = vmul.f32 %v3603, %v3605
    %v3607 = vadd.f32 %v3606, 0.0036580483
    %v3608 = vmul.f32 %v3603, %v3607
    %v3609 = vadd.f32 %v3608, 0.05243302
    %v3610 = vmul.f32 %v3603, %v3609
    %v3611 = vadd.f32 %v3610, 0.18741608
    %v3612 = vmul.f32 %v3603, %v3611
    %v3613 = vadd.f32 %v3612, 1.1283791
    %v3614 = vmul.f32 %v733, %v3613
    %v3615 = vmul.f32 %v3603, 3.8918573e-05
    %v3616 = vadd.f32 %v3615, 0.001143296
    %v3617 = vmul.f32 %v3603, %v3616
    %v3618 = vadd.f32 %v3617, 0.014752088
    %v3619 = vmul.f32 %v3603, %v3618
    %v3620 = vadd.f32 %v3619, 0.112945676
    %v3621 = vmul.f32 %v3603, %v3620
    %v3622 = vadd.f32 %v3621, 0.4994258
    %v3623 = vmul.f32 %v3603, %v3622
    %v3624 = vadd.f32 %v3623, 1.0
    %v3625 = vrcp.pop %v3624
    %v3626 = vmul.f32 %v3624, %v3625
    %v3627 = vsub.f32 1.0, %v3626
    %v3628 = vmul.f32 %v3625, %v3627
    %v3629 = vadd.f32 %v3625, %v3628
    %vm3630 = vweird.f32 %v3624
    %vm3631 = vweird.f32 %v3625
    %vm3632 = vmor %vm3630, %vm3631
    %v3633 = vsel %vm3632, %v3625, %v3629
    %v3634 = vand.u32 2147483647, %v3624
    %vm3635 = vcmp.eq.f32.partialorder %v3634, 8.507059e+37
    %v3636 = vand.u32 %v3624, 2147483648
    %v3637 = vor.u32 1.1754944e-38, %v3636
    %v3638 = vsel %vm3635, %v3637, %v3633
    %v3639 = vmul.f32 %v3614, %v3638
    %v3640 = vmin.f32 %v3639, 1.0
    %v3641 = vmax.f32 %v3640, -1.0
    %v3642 = vmul.f32 %v734, %v734
    %v3643 = vmin.f32 16.0, %v3642
    %v3644 = vmul.f32 %v3643, 2.1237322e-06
    %v3645 = vadd.f32 %v3644, 0.00028619796
    %v3646 = vmul.f32 %v3643, %v3645
    %v3647 = vadd.f32 %v3646, 0.0036580483
    %v3648 = vmul.f32 %v3643, %v3647
    %v3649 = vadd.f32 %v3648, 0.05243302
    %v3650 = vmul.f32 %v3643, %v3649
    %v3651 = vadd.f32 %v3650, 0.18741608
    %v3652 = vmul.f32 %v3643, %v3651
    %v3653 = vadd.f32 %v3652, 1.1283791
    %v3654 = vmul.f32 %v734, %v3653
    %v3655 = vmul.f32 %v3643, 3.8918573e-05
    %v3656 = vadd.f32 %v3655, 0.001143296
    %v3657 = vmul.f32 %v3643, %v3656
    %v3658 = vadd.f32 %v3657, 0.014752088
    %v3659 = vmul.f32 %v3643, %v3658
    %v3660 = vadd.f32 %v3659, 0.112945676
    %v3661 = vmul.f32 %v3643, %v3660
    %v3662 = vadd.f32 %v3661, 0.4994258
    %v3663 = vmul.f32 %v3643, %v3662
    %v3664 = vadd.f32 %v3663, 1.0
    %v3665 = vrcp.pop %v3664
    %v3666 = vmul.f32 %v3664, %v3665
    %v3667 = vsub.f32 1.0, %v3666
    %v3668 = vmul.f32 %v3665, %v3667
    %v3669 = vadd.f32 %v3665, %v3668
    %vm3670 = vweird.f32 %v3664
    %vm3671 = vweird.f32 %v3665
    %vm3672 = vmor %vm3670, %vm3671
    %v3673 = vsel %vm3672, %v3665, %v3669
    %v3674 = vand.u32 2147483647, %v3664
    %vm3675 = vcmp.eq.f32.partialorder %v3674, 8.507059e+37
    %v3676 = vand.u32 %v3664, 2147483648
    %v3677 = vor.u32 1.1754944e-38, %v3676
    %v3678 = vsel %vm3675, %v3677, %v3673
    %v3679 = vmul.f32 %v3654, %v3678
    %v3680 = vmin.f32 %v3679, 1.0
    %v3681 = vmax.f32 %v3680, -1.0
    %v3682 = vmul.f32 %v735, %v735
    %v3683 = vmin.f32 16.0, %v3682
    %v3684 = vmul.f32 %v3683, 2.1237322e-06
    %v3685 = vadd.f32 %v3684, 0.00028619796
    %v3686 = vmul.f32 %v3683, %v3685
    %v3687 = vadd.f32 %v3686, 0.0036580483
    %v3688 = vmul.f32 %v3683, %v3687
    %v3689 = vadd.f32 %v3688, 0.05243302
    %v3690 = vmul.f32 %v3683, %v3689
    %v3691 = vadd.f32 %v3690, 0.18741608
    %v3692 = vmul.f32 %v3683, %v3691
    %v3693 = vadd.f32 %v3692, 1.1283791
    %v3694 = vmul.f32 %v735, %v3693
    %v3695 = vmul.f32 %v3683, 3.8918573e-05
    %v3696 = vadd.f32 %v3695, 0.001143296
    %v3697 = vmul.f32 %v3683, %v3696
    %v3698 = vadd.f32 %v3697, 0.014752088
    %v3699 = vmul.f32 %v3683, %v3698
    %v3700 = vadd.f32 %v3699, 0.112945676
    %v3701 = vmul.f32 %v3683, %v3700
    %v3702 = vadd.f32 %v3701, 0.4994258
    %v3703 = vmul.f32 %v3683, %v3702
    %v3704 = vadd.f32 %v3703, 1.0
    %v3705 = vrcp.pop %v3704
    %v3706 = vmul.f32 %v3704, %v3705
    %v3707 = vsub.f32 1.0, %v3706
    %v3708 = vmul.f32 %v3705, %v3707
    %v3709 = vadd.f32 %v3705, %v3708
    %vm3710 = vweird.f32 %v3704
    %vm3711 = vweird.f32 %v3705
    %vm3712 = vmor %vm3710, %vm3711
    %v3713 = vsel %vm3712, %v3705, %v3709
    %v3714 = vand.u32 2147483647, %v3704
    %vm3715 = vcmp.eq.f32.partialorder %v3714, 8.507059e+37
    %v3716 = vand.u32 %v3704, 2147483648
    %v3717 = vor.u32 1.1754944e-38, %v3716
    %v3718 = vsel %vm3715, %v3717, %v3713
    %v3719 = vmul.f32 %v3694, %v3718
    %v3720 = vmin.f32 %v3719, 1.0
    %v3721 = vmax.f32 %v3720, -1.0
    %v3722 = vmul.f32 %v736, %v736
    %v3723 = vmin.f32 16.0, %v3722
    %v3724 = vmul.f32 %v3723, 2.1237322e-06
    %v3725 = vadd.f32 %v3724, 0.00028619796
    %v3726 = vmul.f32 %v3723, %v3725
    %v3727 = vadd.f32 %v3726, 0.0036580483
    %v3728 = vmul.f32 %v3723, %v3727
    %v3729 = vadd.f32 %v3728, 0.05243302
    %v3730 = vmul.f32 %v3723, %v3729
    %v3731 = vadd.f32 %v3730, 0.18741608
    %v3732 = vmul.f32 %v3723, %v3731
    %v3733 = vadd.f32 %v3732, 1.1283791
    %v3734 = vmul.f32 %v736, %v3733
    %v3735 = vmul.f32 %v3723, 3.8918573e-05
    %v3736 = vadd.f32 %v3735, 0.001143296
    %v3737 = vmul.f32 %v3723, %v3736
    %v3738 = vadd.f32 %v3737, 0.014752088
    %v3739 = vmul.f32 %v3723, %v3738
    %v3740 = vadd.f32 %v3739, 0.112945676
    %v3741 = vmul.f32 %v3723, %v3740
    %v3742 = vadd.f32 %v3741, 0.4994258
    %v3743 = vmul.f32 %v3723, %v3742
    %v3744 = vadd.f32 %v3743, 1.0
    %v3745 = vrcp.pop %v3744
    %v3746 = vmul.f32 %v3744, %v3745
    %v3747 = vsub.f32 1.0, %v3746
    %v3748 = vmul.f32 %v3745, %v3747
    %v3749 = vadd.f32 %v3745, %v3748
    %vm3750 = vweird.f32 %v3744
    %vm3751 = vweird.f32 %v3745
    %vm3752 = vmor %vm3750, %vm3751
    %v3753 = vsel %vm3752, %v3745, %v3749
    %v3754 = vand.u32 2147483647, %v3744
    %vm3755 = vcmp.eq.f32.partialorder %v3754, 8.507059e+37
    %v3756 = vand.u32 %v3744, 2147483648
    %v3757 = vor.u32 1.1754944e-38, %v3756
    %v3758 = vsel %vm3755, %v3757, %v3753
    %v3759 = vmul.f32 %v3734, %v3758
    %v3760 = vmin.f32 %v3759, 1.0
    %v3761 = vmax.f32 %v3760, -1.0
    %v3762 = vmul.f32 %v737, %v737
    %v3763 = vmin.f32 16.0, %v3762
    %v3764 = vmul.f32 %v3763, 2.1237322e-06
    %v3765 = vadd.f32 %v3764, 0.00028619796
    %v3766 = vmul.f32 %v3763, %v3765
    %v3767 = vadd.f32 %v3766, 0.0036580483
    %v3768 = vmul.f32 %v3763, %v3767
    %v3769 = vadd.f32 %v3768, 0.05243302
    %v3770 = vmul.f32 %v3763, %v3769
    %v3771 = vadd.f32 %v3770, 0.18741608
    %v3772 = vmul.f32 %v3763, %v3771
    %v3773 = vadd.f32 %v3772, 1.1283791
    %v3774 = vmul.f32 %v737, %v3773
    %v3775 = vmul.f32 %v3763, 3.8918573e-05
    %v3776 = vadd.f32 %v3775, 0.001143296
    %v3777 = vmul.f32 %v3763, %v3776
    %v3778 = vadd.f32 %v3777, 0.014752088
    %v3779 = vmul.f32 %v3763, %v3778
    %v3780 = vadd.f32 %v3779, 0.112945676
    %v3781 = vmul.f32 %v3763, %v3780
    %v3782 = vadd.f32 %v3781, 0.4994258
    %v3783 = vmul.f32 %v3763, %v3782
    %v3784 = vadd.f32 %v3783, 1.0
    %v3785 = vrcp.pop %v3784
    %v3786 = vmul.f32 %v3784, %v3785
    %v3787 = vsub.f32 1.0, %v3786
    %v3788 = vmul.f32 %v3785, %v3787
    %v3789 = vadd.f32 %v3785, %v3788
    %vm3790 = vweird.f32 %v3784
    %vm3791 = vweird.f32 %v3785
    %vm3792 = vmor %vm3790, %vm3791
    %v3793 = vsel %vm3792, %v3785, %v3789
    %v3794 = vand.u32 2147483647, %v3784
    %vm3795 = vcmp.eq.f32.partialorder %v3794, 8.507059e+37
    %v3796 = vand.u32 %v3784, 2147483648
    %v3797 = vor.u32 1.1754944e-38, %v3796
    %v3798 = vsel %vm3795, %v3797, %v3793
    %v3799 = vmul.f32 %v3774, %v3798
    %v3800 = vmin.f32 %v3799, 1.0
    %v3801 = vmax.f32 %v3800, -1.0
    %v3802 = vmul.f32 %v738, %v738
    %v3803 = vmin.f32 16.0, %v3802
    %v3804 = vmul.f32 %v3803, 2.1237322e-06
    %v3805 = vadd.f32 %v3804, 0.00028619796
    %v3806 = vmul.f32 %v3803, %v3805
    %v3807 = vadd.f32 %v3806, 0.0036580483
    %v3808 = vmul.f32 %v3803, %v3807
    %v3809 = vadd.f32 %v3808, 0.05243302
    %v3810 = vmul.f32 %v3803, %v3809
    %v3811 = vadd.f32 %v3810, 0.18741608
    %v3812 = vmul.f32 %v3803, %v3811
    %v3813 = vadd.f32 %v3812, 1.1283791
    %v3814 = vmul.f32 %v738, %v3813
    %v3815 = vmul.f32 %v3803, 3.8918573e-05
    %v3816 = vadd.f32 %v3815, 0.001143296
    %v3817 = vmul.f32 %v3803, %v3816
    %v3818 = vadd.f32 %v3817, 0.014752088
    %v3819 = vmul.f32 %v3803, %v3818
    %v3820 = vadd.f32 %v3819, 0.112945676
    %v3821 = vmul.f32 %v3803, %v3820
    %v3822 = vadd.f32 %v3821, 0.4994258
    %v3823 = vmul.f32 %v3803, %v3822
    %v3824 = vadd.f32 %v3823, 1.0
    %v3825 = vrcp.pop %v3824
    %v3826 = vmul.f32 %v3824, %v3825
    %v3827 = vsub.f32 1.0, %v3826
    %v3828 = vmul.f32 %v3825, %v3827
    %v3829 = vadd.f32 %v3825, %v3828
    %vm3830 = vweird.f32 %v3824
    %vm3831 = vweird.f32 %v3825
    %vm3832 = vmor %vm3830, %vm3831
    %v3833 = vsel %vm3832, %v3825, %v3829
    %v3834 = vand.u32 2147483647, %v3824
    %vm3835 = vcmp.eq.f32.partialorder %v3834, 8.507059e+37
    %v3836 = vand.u32 %v3824, 2147483648
    %v3837 = vor.u32 1.1754944e-38, %v3836
    %v3838 = vsel %vm3835, %v3837, %v3833
    %v3839 = vmul.f32 %v3814, %v3838
    %v3840 = vmin.f32 %v3839, 1.0
    %v3841 = vmax.f32 %v3840, -1.0
    %v3842 = vmul.f32 %v739, %v739
    %v3843 = vmin.f32 16.0, %v3842
    %v3844 = vmul.f32 %v3843, 2.1237322e-06
    %v3845 = vadd.f32 %v3844, 0.00028619796
    %v3846 = vmul.f32 %v3843, %v3845
    %v3847 = vadd.f32 %v3846, 0.0036580483
    %v3848 = vmul.f32 %v3843, %v3847
    %v3849 = vadd.f32 %v3848, 0.05243302
    %v3850 = vmul.f32 %v3843, %v3849
    %v3851 = vadd.f32 %v3850, 0.18741608
    %v3852 = vmul.f32 %v3843, %v3851
    %v3853 = vadd.f32 %v3852, 1.1283791
    %v3854 = vmul.f32 %v739, %v3853
    %v3855 = vmul.f32 %v3843, 3.8918573e-05
    %v3856 = vadd.f32 %v3855, 0.001143296
    %v3857 = vmul.f32 %v3843, %v3856
    %v3858 = vadd.f32 %v3857, 0.014752088
    %v3859 = vmul.f32 %v3843, %v3858
    %v3860 = vadd.f32 %v3859, 0.112945676
    %v3861 = vmul.f32 %v3843, %v3860
    %v3862 = vadd.f32 %v3861, 0.4994258
    %v3863 = vmul.f32 %v3843, %v3862
    %v3864 = vadd.f32 %v3863, 1.0
    %v3865 = vrcp.pop %v3864
    %v3866 = vmul.f32 %v3864, %v3865
    %v3867 = vsub.f32 1.0, %v3866
    %v3868 = vmul.f32 %v3865, %v3867
    %v3869 = vadd.f32 %v3865, %v3868
    %vm3870 = vweird.f32 %v3864
    %vm3871 = vweird.f32 %v3865
    %vm3872 = vmor %vm3870, %vm3871
    %v3873 = vsel %vm3872, %v3865, %v3869
    %v3874 = vand.u32 2147483647, %v3864
    %vm3875 = vcmp.eq.f32.partialorder %v3874, 8.507059e+37
    %v3876 = vand.u32 %v3864, 2147483648
    %v3877 = vor.u32 1.1754944e-38, %v3876
    %v3878 = vsel %vm3875, %v3877, %v3873
    %v3879 = vmul.f32 %v3854, %v3878
    %v3880 = vmin.f32 %v3879, 1.0
    %v3881 = vmax.f32 %v3880, -1.0
    %v3882 = vmul.f32 %v740, %v740
    %v3883 = vmin.f32 16.0, %v3882
    %v3884 = vmul.f32 %v3883, 2.1237322e-06
    %v3885 = vadd.f32 %v3884, 0.00028619796
    %v3886 = vmul.f32 %v3883, %v3885
    %v3887 = vadd.f32 %v3886, 0.0036580483
    %v3888 = vmul.f32 %v3883, %v3887
    %v3889 = vadd.f32 %v3888, 0.05243302
    %v3890 = vmul.f32 %v3883, %v3889
    %v3891 = vadd.f32 %v3890, 0.18741608
    %v3892 = vmul.f32 %v3883, %v3891
    %v3893 = vadd.f32 %v3892, 1.1283791
    %v3894 = vmul.f32 %v740, %v3893
    %v3895 = vmul.f32 %v3883, 3.8918573e-05
    %v3896 = vadd.f32 %v3895, 0.001143296
    %v3897 = vmul.f32 %v3883, %v3896
    %v3898 = vadd.f32 %v3897, 0.014752088
    %v3899 = vmul.f32 %v3883, %v3898
    %v3900 = vadd.f32 %v3899, 0.112945676
    %v3901 = vmul.f32 %v3883, %v3900
    %v3902 = vadd.f32 %v3901, 0.4994258
    %v3903 = vmul.f32 %v3883, %v3902
    %v3904 = vadd.f32 %v3903, 1.0
    %v3905 = vrcp.pop %v3904
    %v3906 = vmul.f32 %v3904, %v3905
    %v3907 = vsub.f32 1.0, %v3906
    %v3908 = vmul.f32 %v3905, %v3907
    %v3909 = vadd.f32 %v3905, %v3908
    %vm3910 = vweird.f32 %v3904
    %vm3911 = vweird.f32 %v3905
    %vm3912 = vmor %vm3910, %vm3911
    %v3913 = vsel %vm3912, %v3905, %v3909
    %v3914 = vand.u32 2147483647, %v3904
    %vm3915 = vcmp.eq.f32.partialorder %v3914, 8.507059e+37
    %v3916 = vand.u32 %v3904, 2147483648
    %v3917 = vor.u32 1.1754944e-38, %v3916
    %v3918 = vsel %vm3915, %v3917, %v3913
    %v3919 = vmul.f32 %v3894, %v3918
    %v3920 = vmin.f32 %v3919, 1.0
    %v3921 = vmax.f32 %v3920, -1.0
    %v3922 = vmul.f32 %v741, %v741
    %v3923 = vmin.f32 16.0, %v3922
    %v3924 = vmul.f32 %v3923, 2.1237322e-06
    %v3925 = vadd.f32 %v3924, 0.00028619796
    %v3926 = vmul.f32 %v3923, %v3925
    %v3927 = vadd.f32 %v3926, 0.0036580483
    %v3928 = vmul.f32 %v3923, %v3927
    %v3929 = vadd.f32 %v3928, 0.05243302
    %v3930 = vmul.f32 %v3923, %v3929
    %v3931 = vadd.f32 %v3930, 0.18741608
    %v3932 = vmul.f32 %v3923, %v3931
    %v3933 = vadd.f32 %v3932, 1.1283791
    %v3934 = vmul.f32 %v741, %v3933
    %v3935 = vmul.f32 %v3923, 3.8918573e-05
    %v3936 = vadd.f32 %v3935, 0.001143296
    %v3937 = vmul.f32 %v3923, %v3936
    %v3938 = vadd.f32 %v3937, 0.014752088
    %v3939 = vmul.f32 %v3923, %v3938
    %v3940 = vadd.f32 %v3939, 0.112945676
    %v3941 = vmul.f32 %v3923, %v3940
    %v3942 = vadd.f32 %v3941, 0.4994258
    %v3943 = vmul.f32 %v3923, %v3942
    %v3944 = vadd.f32 %v3943, 1.0
    %v3945 = vrcp.pop %v3944
    %v3946 = vmul.f32 %v3944, %v3945
    %v3947 = vsub.f32 1.0, %v3946
    %v3948 = vmul.f32 %v3945, %v3947
    %v3949 = vadd.f32 %v3945, %v3948
    %vm3950 = vweird.f32 %v3944
    %vm3951 = vweird.f32 %v3945
    %vm3952 = vmor %vm3950, %vm3951
    %v3953 = vsel %vm3952, %v3945, %v3949
    %v3954 = vand.u32 2147483647, %v3944
    %vm3955 = vcmp.eq.f32.partialorder %v3954, 8.507059e+37
    %v3956 = vand.u32 %v3944, 2147483648
    %v3957 = vor.u32 1.1754944e-38, %v3956
    %v3958 = vsel %vm3955, %v3957, %v3953
    %v3959 = vmul.f32 %v3934, %v3958
    %v3960 = vmin.f32 %v3959, 1.0
    %v3961 = vmax.f32 %v3960, -1.0
    %v3962 = vmul.f32 %v742, %v742
    %v3963 = vmin.f32 16.0, %v3962
    %v3964 = vmul.f32 %v3963, 2.1237322e-06
    %v3965 = vadd.f32 %v3964, 0.00028619796
    %v3966 = vmul.f32 %v3963, %v3965
    %v3967 = vadd.f32 %v3966, 0.0036580483
    %v3968 = vmul.f32 %v3963, %v3967
    %v3969 = vadd.f32 %v3968, 0.05243302
    %v3970 = vmul.f32 %v3963, %v3969
    %v3971 = vadd.f32 %v3970, 0.18741608
    %v3972 = vmul.f32 %v3963, %v3971
    %v3973 = vadd.f32 %v3972, 1.1283791
    %v3974 = vmul.f32 %v742, %v3973
    %v3975 = vmul.f32 %v3963, 3.8918573e-05
    %v3976 = vadd.f32 %v3975, 0.001143296
    %v3977 = vmul.f32 %v3963, %v3976
    %v3978 = vadd.f32 %v3977, 0.014752088
    %v3979 = vmul.f32 %v3963, %v3978
    %v3980 = vadd.f32 %v3979, 0.112945676
    %v3981 = vmul.f32 %v3963, %v3980
    %v3982 = vadd.f32 %v3981, 0.4994258
    %v3983 = vmul.f32 %v3963, %v3982
    %v3984 = vadd.f32 %v3983, 1.0
    %v3985 = vrcp.pop %v3984
    %v3986 = vmul.f32 %v3984, %v3985
    %v3987 = vsub.f32 1.0, %v3986
    %v3988 = vmul.f32 %v3985, %v3987
    %v3989 = vadd.f32 %v3985, %v3988
    %vm3990 = vweird.f32 %v3984
    %vm3991 = vweird.f32 %v3985
    %vm3992 = vmor %vm3990, %vm3991
    %v3993 = vsel %vm3992, %v3985, %v3989
    %v3994 = vand.u32 2147483647, %v3984
    %vm3995 = vcmp.eq.f32.partialorder %v3994, 8.507059e+37
    %v3996 = vand.u32 %v3984, 2147483648
    %v3997 = vor.u32 1.1754944e-38, %v3996
    %v3998 = vsel %vm3995, %v3997, %v3993
    %v3999 = vmul.f32 %v3974, %v3998
    %v4000 = vmin.f32 %v3999, 1.0
    %v4001 = vmax.f32 %v4000, -1.0
    %v4002 = vmul.f32 %v743, %v743
    %v4003 = vmin.f32 16.0, %v4002
    %v4004 = vmul.f32 %v4003, 2.1237322e-06
    %v4005 = vadd.f32 %v4004, 0.00028619796
    %v4006 = vmul.f32 %v4003, %v4005
    %v4007 = vadd.f32 %v4006, 0.0036580483
    %v4008 = vmul.f32 %v4003, %v4007
    %v4009 = vadd.f32 %v4008, 0.05243302
    %v4010 = vmul.f32 %v4003, %v4009
    %v4011 = vadd.f32 %v4010, 0.18741608
    %v4012 = vmul.f32 %v4003, %v4011
    %v4013 = vadd.f32 %v4012, 1.1283791
    %v4014 = vmul.f32 %v743, %v4013
    %v4015 = vmul.f32 %v4003, 3.8918573e-05
    %v4016 = vadd.f32 %v4015, 0.001143296
    %v4017 = vmul.f32 %v4003, %v4016
    %v4018 = vadd.f32 %v4017, 0.014752088
    %v4019 = vmul.f32 %v4003, %v4018
    %v4020 = vadd.f32 %v4019, 0.112945676
    %v4021 = vmul.f32 %v4003, %v4020
    %v4022 = vadd.f32 %v4021, 0.4994258
    %v4023 = vmul.f32 %v4003, %v4022
    %v4024 = vadd.f32 %v4023, 1.0
    %v4025 = vrcp.pop %v4024
    %v4026 = vmul.f32 %v4024, %v4025
    %v4027 = vsub.f32 1.0, %v4026
    %v4028 = vmul.f32 %v4025, %v4027
    %v4029 = vadd.f32 %v4025, %v4028
    %vm4030 = vweird.f32 %v4024
    %vm4031 = vweird.f32 %v4025
    %vm4032 = vmor %vm4030, %vm4031
    %v4033 = vsel %vm4032, %v4025, %v4029
    %v4034 = vand.u32 2147483647, %v4024
    %vm4035 = vcmp.eq.f32.partialorder %v4034, 8.507059e+37
    %v4036 = vand.u32 %v4024, 2147483648
    %v4037 = vor.u32 1.1754944e-38, %v4036
    %v4038 = vsel %vm4035, %v4037, %v4033
    %v4039 = vmul.f32 %v4014, %v4038
    %v4040 = vmin.f32 %v4039, 1.0
    %v4041 = vmax.f32 %v4040, -1.0
    %v4042 = vmul.f32 %v744, %v744
    %v4043 = vmin.f32 16.0, %v4042
    %v4044 = vmul.f32 %v4043, 2.1237322e-06
    %v4045 = vadd.f32 %v4044, 0.00028619796
    %v4046 = vmul.f32 %v4043, %v4045
    %v4047 = vadd.f32 %v4046, 0.0036580483
    %v4048 = vmul.f32 %v4043, %v4047
    %v4049 = vadd.f32 %v4048, 0.05243302
    %v4050 = vmul.f32 %v4043, %v4049
    %v4051 = vadd.f32 %v4050, 0.18741608
    %v4052 = vmul.f32 %v4043, %v4051
    %v4053 = vadd.f32 %v4052, 1.1283791
    %v4054 = vmul.f32 %v744, %v4053
    %v4055 = vmul.f32 %v4043, 3.8918573e-05
    %v4056 = vadd.f32 %v4055, 0.001143296
    %v4057 = vmul.f32 %v4043, %v4056
    %v4058 = vadd.f32 %v4057, 0.014752088
    %v4059 = vmul.f32 %v4043, %v4058
    %v4060 = vadd.f32 %v4059, 0.112945676
    %v4061 = vmul.f32 %v4043, %v4060
    %v4062 = vadd.f32 %v4061, 0.4994258
    %v4063 = vmul.f32 %v4043, %v4062
    %v4064 = vadd.f32 %v4063, 1.0
    %v4065 = vrcp.pop %v4064
    %v4066 = vmul.f32 %v4064, %v4065
    %v4067 = vsub.f32 1.0, %v4066
    %v4068 = vmul.f32 %v4065, %v4067
    %v4069 = vadd.f32 %v4065, %v4068
    %vm4070 = vweird.f32 %v4064
    %vm4071 = vweird.f32 %v4065
    %vm4072 = vmor %vm4070, %vm4071
    %v4073 = vsel %vm4072, %v4065, %v4069
    %v4074 = vand.u32 2147483647, %v4064
    %vm4075 = vcmp.eq.f32.partialorder %v4074, 8.507059e+37
    %v4076 = vand.u32 %v4064, 2147483648
    %v4077 = vor.u32 1.1754944e-38, %v4076
    %v4078 = vsel %vm4075, %v4077, %v4073
    %v4079 = vmul.f32 %v4054, %v4078
    %v4080 = vmin.f32 %v4079, 1.0
    %v4081 = vmax.f32 %v4080, -1.0
    %v4082 = vmul.f32 %v745, %v745
    %v4083 = vmin.f32 16.0, %v4082
    %v4084 = vmul.f32 %v4083, 2.1237322e-06
    %v4085 = vadd.f32 %v4084, 0.00028619796
    %v4086 = vmul.f32 %v4083, %v4085
    %v4087 = vadd.f32 %v4086, 0.0036580483
    %v4088 = vmul.f32 %v4083, %v4087
    %v4089 = vadd.f32 %v4088, 0.05243302
    %v4090 = vmul.f32 %v4083, %v4089
    %v4091 = vadd.f32 %v4090, 0.18741608
    %v4092 = vmul.f32 %v4083, %v4091
    %v4093 = vadd.f32 %v4092, 1.1283791
    %v4094 = vmul.f32 %v745, %v4093
    %v4095 = vmul.f32 %v4083, 3.8918573e-05
    %v4096 = vadd.f32 %v4095, 0.001143296
    %v4097 = vmul.f32 %v4083, %v4096
    %v4098 = vadd.f32 %v4097, 0.014752088
    %v4099 = vmul.f32 %v4083, %v4098
    %v4100 = vadd.f32 %v4099, 0.112945676
    %v4101 = vmul.f32 %v4083, %v4100
    %v4102 = vadd.f32 %v4101, 0.4994258
    %v4103 = vmul.f32 %v4083, %v4102
    %v4104 = vadd.f32 %v4103, 1.0
    %v4105 = vrcp.pop %v4104
    %v4106 = vmul.f32 %v4104, %v4105
    %v4107 = vsub.f32 1.0, %v4106
    %v4108 = vmul.f32 %v4105, %v4107
    %v4109 = vadd.f32 %v4105, %v4108
    %vm4110 = vweird.f32 %v4104
    %vm4111 = vweird.f32 %v4105
    %vm4112 = vmor %vm4110, %vm4111
    %v4113 = vsel %vm4112, %v4105, %v4109
    %v4114 = vand.u32 2147483647, %v4104
    %vm4115 = vcmp.eq.f32.partialorder %v4114, 8.507059e+37
    %v4116 = vand.u32 %v4104, 2147483648
    %v4117 = vor.u32 1.1754944e-38, %v4116
    %v4118 = vsel %vm4115, %v4117, %v4113
    %v4119 = vmul.f32 %v4094, %v4118
    %v4120 = vmin.f32 %v4119, 1.0
    %v4121 = vmax.f32 %v4120, -1.0
    %v4122 = vmul.f32 %v746, %v746
    %v4123 = vmin.f32 16.0, %v4122
    %v4124 = vmul.f32 %v4123, 2.1237322e-06
    %v4125 = vadd.f32 %v4124, 0.00028619796
    %v4126 = vmul.f32 %v4123, %v4125
    %v4127 = vadd.f32 %v4126, 0.0036580483
    %v4128 = vmul.f32 %v4123, %v4127
    %v4129 = vadd.f32 %v4128, 0.05243302
    %v4130 = vmul.f32 %v4123, %v4129
    %v4131 = vadd.f32 %v4130, 0.18741608
    %v4132 = vmul.f32 %v4123, %v4131
    %v4133 = vadd.f32 %v4132, 1.1283791
    %v4134 = vmul.f32 %v746, %v4133
    %v4135 = vmul.f32 %v4123, 3.8918573e-05
    %v4136 = vadd.f32 %v4135, 0.001143296
    %v4137 = vmul.f32 %v4123, %v4136
    %v4138 = vadd.f32 %v4137, 0.014752088
    %v4139 = vmul.f32 %v4123, %v4138
    %v4140 = vadd.f32 %v4139, 0.112945676
    %v4141 = vmul.f32 %v4123, %v4140
    %v4142 = vadd.f32 %v4141, 0.4994258
    %v4143 = vmul.f32 %v4123, %v4142
    %v4144 = vadd.f32 %v4143, 1.0
    %v4145 = vrcp.pop %v4144
    %v4146 = vmul.f32 %v4144, %v4145
    %v4147 = vsub.f32 1.0, %v4146
    %v4148 = vmul.f32 %v4145, %v4147
    %v4149 = vadd.f32 %v4145, %v4148
    %vm4150 = vweird.f32 %v4144
    %vm4151 = vweird.f32 %v4145
    %vm4152 = vmor %vm4150, %vm4151
    %v4153 = vsel %vm4152, %v4145, %v4149
    %v4154 = vand.u32 2147483647, %v4144
    %vm4155 = vcmp.eq.f32.partialorder %v4154, 8.507059e+37
    %v4156 = vand.u32 %v4144, 2147483648
    %v4157 = vor.u32 1.1754944e-38, %v4156
    %v4158 = vsel %vm4155, %v4157, %v4153
    %v4159 = vmul.f32 %v4134, %v4158
    %v4160 = vmin.f32 %v4159, 1.0
    %v4161 = vmax.f32 %v4160, -1.0
    %v4162 = vmul.f32 %v747, %v747
    %v4163 = vmin.f32 16.0, %v4162
    %v4164 = vmul.f32 %v4163, 2.1237322e-06
    %v4165 = vadd.f32 %v4164, 0.00028619796
    %v4166 = vmul.f32 %v4163, %v4165
    %v4167 = vadd.f32 %v4166, 0.0036580483
    %v4168 = vmul.f32 %v4163, %v4167
    %v4169 = vadd.f32 %v4168, 0.05243302
    %v4170 = vmul.f32 %v4163, %v4169
    %v4171 = vadd.f32 %v4170, 0.18741608
    %v4172 = vmul.f32 %v4163, %v4171
    %v4173 = vadd.f32 %v4172, 1.1283791
    %v4174 = vmul.f32 %v747, %v4173
    %v4175 = vmul.f32 %v4163, 3.8918573e-05
    %v4176 = vadd.f32 %v4175, 0.001143296
    %v4177 = vmul.f32 %v4163, %v4176
    %v4178 = vadd.f32 %v4177, 0.014752088
    %v4179 = vmul.f32 %v4163, %v4178
    %v4180 = vadd.f32 %v4179, 0.112945676
    %v4181 = vmul.f32 %v4163, %v4180
    %v4182 = vadd.f32 %v4181, 0.4994258
    %v4183 = vmul.f32 %v4163, %v4182
    %v4184 = vadd.f32 %v4183, 1.0
    %v4185 = vrcp.pop %v4184
    %v4186 = vmul.f32 %v4184, %v4185
    %v4187 = vsub.f32 1.0, %v4186
    %v4188 = vmul.f32 %v4185, %v4187
    %v4189 = vadd.f32 %v4185, %v4188
    %vm4190 = vweird.f32 %v4184
    %vm4191 = vweird.f32 %v4185
    %vm4192 = vmor %vm4190, %vm4191
    %v4193 = vsel %vm4192, %v4185, %v4189
    %v4194 = vand.u32 2147483647, %v4184
    %vm4195 = vcmp.eq.f32.partialorder %v4194, 8.507059e+37
    %v4196 = vand.u32 %v4184, 2147483648
    %v4197 = vor.u32 1.1754944e-38, %v4196
    %v4198 = vsel %vm4195, %v4197, %v4193
    %v4199 = vmul.f32 %v4174, %v4198
    %v4200 = vmin.f32 %v4199, 1.0
    %v4201 = vmax.f32 %v4200, -1.0
    %v4202 = vmul.f32 %v748, %v748
    %v4203 = vmin.f32 16.0, %v4202
    %v4204 = vmul.f32 %v4203, 2.1237322e-06
    %v4205 = vadd.f32 %v4204, 0.00028619796
    %v4206 = vmul.f32 %v4203, %v4205
    %v4207 = vadd.f32 %v4206, 0.0036580483
    %v4208 = vmul.f32 %v4203, %v4207
    %v4209 = vadd.f32 %v4208, 0.05243302
    %v4210 = vmul.f32 %v4203, %v4209
    %v4211 = vadd.f32 %v4210, 0.18741608
    %v4212 = vmul.f32 %v4203, %v4211
    %v4213 = vadd.f32 %v4212, 1.1283791
    %v4214 = vmul.f32 %v748, %v4213
    %v4215 = vmul.f32 %v4203, 3.8918573e-05
    %v4216 = vadd.f32 %v4215, 0.001143296
    %v4217 = vmul.f32 %v4203, %v4216
    %v4218 = vadd.f32 %v4217, 0.014752088
    %v4219 = vmul.f32 %v4203, %v4218
    %v4220 = vadd.f32 %v4219, 0.112945676
    %v4221 = vmul.f32 %v4203, %v4220
    %v4222 = vadd.f32 %v4221, 0.4994258
    %v4223 = vmul.f32 %v4203, %v4222
    %v4224 = vadd.f32 %v4223, 1.0
    %v4225 = vrcp.pop %v4224
    %v4226 = vmul.f32 %v4224, %v4225
    %v4227 = vsub.f32 1.0, %v4226
    %v4228 = vmul.f32 %v4225, %v4227
    %v4229 = vadd.f32 %v4225, %v4228
    %vm4230 = vweird.f32 %v4224
    %vm4231 = vweird.f32 %v4225
    %vm4232 = vmor %vm4230, %vm4231
    %v4233 = vsel %vm4232, %v4225, %v4229
    %v4234 = vand.u32 2147483647, %v4224
    %vm4235 = vcmp.eq.f32.partialorder %v4234, 8.507059e+37
    %v4236 = vand.u32 %v4224, 2147483648
    %v4237 = vor.u32 1.1754944e-38, %v4236
    %v4238 = vsel %vm4235, %v4237, %v4233
    %v4239 = vmul.f32 %v4214, %v4238
    %v4240 = vmin.f32 %v4239, 1.0
    %v4241 = vmax.f32 %v4240, -1.0
    %v4242 = vmul.f32 %v749, %v749
    %v4243 = vmin.f32 16.0, %v4242
    %v4244 = vmul.f32 %v4243, 2.1237322e-06
    %v4245 = vadd.f32 %v4244, 0.00028619796
    %v4246 = vmul.f32 %v4243, %v4245
    %v4247 = vadd.f32 %v4246, 0.0036580483
    %v4248 = vmul.f32 %v4243, %v4247
    %v4249 = vadd.f32 %v4248, 0.05243302
    %v4250 = vmul.f32 %v4243, %v4249
    %v4251 = vadd.f32 %v4250, 0.18741608
    %v4252 = vmul.f32 %v4243, %v4251
    %v4253 = vadd.f32 %v4252, 1.1283791
    %v4254 = vmul.f32 %v749, %v4253
    %v4255 = vmul.f32 %v4243, 3.8918573e-05
    %v4256 = vadd.f32 %v4255, 0.001143296
    %v4257 = vmul.f32 %v4243, %v4256
    %v4258 = vadd.f32 %v4257, 0.014752088
    %v4259 = vmul.f32 %v4243, %v4258
    %v4260 = vadd.f32 %v4259, 0.112945676
    %v4261 = vmul.f32 %v4243, %v4260
    %v4262 = vadd.f32 %v4261, 0.4994258
    %v4263 = vmul.f32 %v4243, %v4262
    %v4264 = vadd.f32 %v4263, 1.0
    %v4265 = vrcp.pop %v4264
    %v4266 = vmul.f32 %v4264, %v4265
    %v4267 = vsub.f32 1.0, %v4266
    %v4268 = vmul.f32 %v4265, %v4267
    %v4269 = vadd.f32 %v4265, %v4268
    %vm4270 = vweird.f32 %v4264
    %vm4271 = vweird.f32 %v4265
    %vm4272 = vmor %vm4270, %vm4271
    %v4273 = vsel %vm4272, %v4265, %v4269
    %v4274 = vand.u32 2147483647, %v4264
    %vm4275 = vcmp.eq.f32.partialorder %v4274, 8.507059e+37
    %v4276 = vand.u32 %v4264, 2147483648
    %v4277 = vor.u32 1.1754944e-38, %v4276
    %v4278 = vsel %vm4275, %v4277, %v4273
    %v4279 = vmul.f32 %v4254, %v4278
    %v4280 = vmin.f32 %v4279, 1.0
    %v4281 = vmax.f32 %v4280, -1.0
    %v4282 = vmul.f32 %v750, %v750
    %v4283 = vmin.f32 16.0, %v4282
    %v4284 = vmul.f32 %v4283, 2.1237322e-06
    %v4285 = vadd.f32 %v4284, 0.00028619796
    %v4286 = vmul.f32 %v4283, %v4285
    %v4287 = vadd.f32 %v4286, 0.0036580483
    %v4288 = vmul.f32 %v4283, %v4287
    %v4289 = vadd.f32 %v4288, 0.05243302
    %v4290 = vmul.f32 %v4283, %v4289
    %v4291 = vadd.f32 %v4290, 0.18741608
    %v4292 = vmul.f32 %v4283, %v4291
    %v4293 = vadd.f32 %v4292, 1.1283791
    %v4294 = vmul.f32 %v750, %v4293
    %v4295 = vmul.f32 %v4283, 3.8918573e-05
    %v4296 = vadd.f32 %v4295, 0.001143296
    %v4297 = vmul.f32 %v4283, %v4296
    %v4298 = vadd.f32 %v4297, 0.014752088
    %v4299 = vmul.f32 %v4283, %v4298
    %v4300 = vadd.f32 %v4299, 0.112945676
    %v4301 = vmul.f32 %v4283, %v4300
    %v4302 = vadd.f32 %v4301, 0.4994258
    %v4303 = vmul.f32 %v4283, %v4302
    %v4304 = vadd.f32 %v4303, 1.0
    %v4305 = vrcp.pop %v4304
    %v4306 = vmul.f32 %v4304, %v4305
    %v4307 = vsub.f32 1.0, %v4306
    %v4308 = vmul.f32 %v4305, %v4307
    %v4309 = vadd.f32 %v4305, %v4308
    %vm4310 = vweird.f32 %v4304
    %vm4311 = vweird.f32 %v4305
    %vm4312 = vmor %vm4310, %vm4311
    %v4313 = vsel %vm4312, %v4305, %v4309
    %v4314 = vand.u32 2147483647, %v4304
    %vm4315 = vcmp.eq.f32.partialorder %v4314, 8.507059e+37
    %v4316 = vand.u32 %v4304, 2147483648
    %v4317 = vor.u32 1.1754944e-38, %v4316
    %v4318 = vsel %vm4315, %v4317, %v4313
    %v4319 = vmul.f32 %v4294, %v4318
    %v4320 = vmin.f32 %v4319, 1.0
    %v4321 = vmax.f32 %v4320, -1.0
    %v4322 = vmul.f32 %v751, %v751
    %v4323 = vmin.f32 16.0, %v4322
    %v4324 = vmul.f32 %v4323, 2.1237322e-06
    %v4325 = vadd.f32 %v4324, 0.00028619796
    %v4326 = vmul.f32 %v4323, %v4325
    %v4327 = vadd.f32 %v4326, 0.0036580483
    %v4328 = vmul.f32 %v4323, %v4327
    %v4329 = vadd.f32 %v4328, 0.05243302
    %v4330 = vmul.f32 %v4323, %v4329
    %v4331 = vadd.f32 %v4330, 0.18741608
    %v4332 = vmul.f32 %v4323, %v4331
    %v4333 = vadd.f32 %v4332, 1.1283791
    %v4334 = vmul.f32 %v751, %v4333
    %v4335 = vmul.f32 %v4323, 3.8918573e-05
    %v4336 = vadd.f32 %v4335, 0.001143296
    %v4337 = vmul.f32 %v4323, %v4336
    %v4338 = vadd.f32 %v4337, 0.014752088
    %v4339 = vmul.f32 %v4323, %v4338
    %v4340 = vadd.f32 %v4339, 0.112945676
    %v4341 = vmul.f32 %v4323, %v4340
    %v4342 = vadd.f32 %v4341, 0.4994258
    %v4343 = vmul.f32 %v4323, %v4342
    %v4344 = vadd.f32 %v4343, 1.0
    %v4345 = vrcp.pop %v4344
    %v4346 = vmul.f32 %v4344, %v4345
    %v4347 = vsub.f32 1.0, %v4346
    %v4348 = vmul.f32 %v4345, %v4347
    %v4349 = vadd.f32 %v4345, %v4348
    %vm4350 = vweird.f32 %v4344
    %vm4351 = vweird.f32 %v4345
    %vm4352 = vmor %vm4350, %vm4351
    %v4353 = vsel %vm4352, %v4345, %v4349
    %v4354 = vand.u32 2147483647, %v4344
    %vm4355 = vcmp.eq.f32.partialorder %v4354, 8.507059e+37
    %v4356 = vand.u32 %v4344, 2147483648
    %v4357 = vor.u32 1.1754944e-38, %v4356
    %v4358 = vsel %vm4355, %v4357, %v4353
    %v4359 = vmul.f32 %v4334, %v4358
    %v4360 = vmin.f32 %v4359, 1.0
    %v4361 = vmax.f32 %v4360, -1.0
    %v4362 = vmul.f32 %v752, %v752
    %v4363 = vmin.f32 16.0, %v4362
    %v4364 = vmul.f32 %v4363, 2.1237322e-06
    %v4365 = vadd.f32 %v4364, 0.00028619796
    %v4366 = vmul.f32 %v4363, %v4365
    %v4367 = vadd.f32 %v4366, 0.0036580483
    %v4368 = vmul.f32 %v4363, %v4367
    %v4369 = vadd.f32 %v4368, 0.05243302
    %v4370 = vmul.f32 %v4363, %v4369
    %v4371 = vadd.f32 %v4370, 0.18741608
    %v4372 = vmul.f32 %v4363, %v4371
    %v4373 = vadd.f32 %v4372, 1.1283791
    %v4374 = vmul.f32 %v752, %v4373
    %v4375 = vmul.f32 %v4363, 3.8918573e-05
    %v4376 = vadd.f32 %v4375, 0.001143296
    %v4377 = vmul.f32 %v4363, %v4376
    %v4378 = vadd.f32 %v4377, 0.014752088
    %v4379 = vmul.f32 %v4363, %v4378
    %v4380 = vadd.f32 %v4379, 0.112945676
    %v4381 = vmul.f32 %v4363, %v4380
    %v4382 = vadd.f32 %v4381, 0.4994258
    %v4383 = vmul.f32 %v4363, %v4382
    %v4384 = vadd.f32 %v4383, 1.0
    %v4385 = vrcp.pop %v4384
    %v4386 = vmul.f32 %v4384, %v4385
    %v4387 = vsub.f32 1.0, %v4386
    %v4388 = vmul.f32 %v4385, %v4387
    %v4389 = vadd.f32 %v4385, %v4388
    %vm4390 = vweird.f32 %v4384
    %vm4391 = vweird.f32 %v4385
    %vm4392 = vmor %vm4390, %vm4391
    %v4393 = vsel %vm4392, %v4385, %v4389
    %v4394 = vand.u32 2147483647, %v4384
    %vm4395 = vcmp.eq.f32.partialorder %v4394, 8.507059e+37
    %v4396 = vand.u32 %v4384, 2147483648
    %v4397 = vor.u32 1.1754944e-38, %v4396
    %v4398 = vsel %vm4395, %v4397, %v4393
    %v4399 = vmul.f32 %v4374, %v4398
    %v4400 = vmin.f32 %v4399, 1.0
    %v4401 = vmax.f32 %v4400, -1.0
    %v4402 = vmul.f32 %v753, %v753
    %v4403 = vmin.f32 16.0, %v4402
    %v4404 = vmul.f32 %v4403, 2.1237322e-06
    %v4405 = vadd.f32 %v4404, 0.00028619796
    %v4406 = vmul.f32 %v4403, %v4405
    %v4407 = vadd.f32 %v4406, 0.0036580483
    %v4408 = vmul.f32 %v4403, %v4407
    %v4409 = vadd.f32 %v4408, 0.05243302
    %v4410 = vmul.f32 %v4403, %v4409
    %v4411 = vadd.f32 %v4410, 0.18741608
    %v4412 = vmul.f32 %v4403, %v4411
    %v4413 = vadd.f32 %v4412, 1.1283791
    %v4414 = vmul.f32 %v753, %v4413
    %v4415 = vmul.f32 %v4403, 3.8918573e-05
    %v4416 = vadd.f32 %v4415, 0.001143296
    %v4417 = vmul.f32 %v4403, %v4416
    %v4418 = vadd.f32 %v4417, 0.014752088
    %v4419 = vmul.f32 %v4403, %v4418
    %v4420 = vadd.f32 %v4419, 0.112945676
    %v4421 = vmul.f32 %v4403, %v4420
    %v4422 = vadd.f32 %v4421, 0.4994258
    %v4423 = vmul.f32 %v4403, %v4422
    %v4424 = vadd.f32 %v4423, 1.0
    %v4425 = vrcp.pop %v4424
    %v4426 = vmul.f32 %v4424, %v4425
    %v4427 = vsub.f32 1.0, %v4426
    %v4428 = vmul.f32 %v4425, %v4427
    %v4429 = vadd.f32 %v4425, %v4428
    %vm4430 = vweird.f32 %v4424
    %vm4431 = vweird.f32 %v4425
    %vm4432 = vmor %vm4430, %vm4431
    %v4433 = vsel %vm4432, %v4425, %v4429
    %v4434 = vand.u32 2147483647, %v4424
    %vm4435 = vcmp.eq.f32.partialorder %v4434, 8.507059e+37
    %v4436 = vand.u32 %v4424, 2147483648
    %v4437 = vor.u32 1.1754944e-38, %v4436
    %v4438 = vsel %vm4435, %v4437, %v4433
    %v4439 = vmul.f32 %v4414, %v4438
    %v4440 = vmin.f32 %v4439, 1.0
    %v4441 = vmax.f32 %v4440, -1.0
    %v4442 = vmul.f32 %v754, %v754
    %v4443 = vmin.f32 16.0, %v4442
    %v4444 = vmul.f32 %v4443, 2.1237322e-06
    %v4445 = vadd.f32 %v4444, 0.00028619796
    %v4446 = vmul.f32 %v4443, %v4445
    %v4447 = vadd.f32 %v4446, 0.0036580483
    %v4448 = vmul.f32 %v4443, %v4447
    %v4449 = vadd.f32 %v4448, 0.05243302
    %v4450 = vmul.f32 %v4443, %v4449
    %v4451 = vadd.f32 %v4450, 0.18741608
    %v4452 = vmul.f32 %v4443, %v4451
    %v4453 = vadd.f32 %v4452, 1.1283791
    %v4454 = vmul.f32 %v754, %v4453
    %v4455 = vmul.f32 %v4443, 3.8918573e-05
    %v4456 = vadd.f32 %v4455, 0.001143296
    %v4457 = vmul.f32 %v4443, %v4456
    %v4458 = vadd.f32 %v4457, 0.014752088
    %v4459 = vmul.f32 %v4443, %v4458
    %v4460 = vadd.f32 %v4459, 0.112945676
    %v4461 = vmul.f32 %v4443, %v4460
    %v4462 = vadd.f32 %v4461, 0.4994258
    %v4463 = vmul.f32 %v4443, %v4462
    %v4464 = vadd.f32 %v4463, 1.0
    %v4465 = vrcp.pop %v4464
    %v4466 = vmul.f32 %v4464, %v4465
    %v4467 = vsub.f32 1.0, %v4466
    %v4468 = vmul.f32 %v4465, %v4467
    %v4469 = vadd.f32 %v4465, %v4468
    %vm4470 = vweird.f32 %v4464
    %vm4471 = vweird.f32 %v4465
    %vm4472 = vmor %vm4470, %vm4471
    %v4473 = vsel %vm4472, %v4465, %v4469
    %v4474 = vand.u32 2147483647, %v4464
    %vm4475 = vcmp.eq.f32.partialorder %v4474, 8.507059e+37
    %v4476 = vand.u32 %v4464, 2147483648
    %v4477 = vor.u32 1.1754944e-38, %v4476
    %v4478 = vsel %vm4475, %v4477, %v4473
    %v4479 = vmul.f32 %v4454, %v4478
    %v4480 = vmin.f32 %v4479, 1.0
    %v4481 = vmax.f32 %v4480, -1.0
    %v4482 = vmul.f32 %v755, %v755
    %v4483 = vmin.f32 16.0, %v4482
    %v4484 = vmul.f32 %v4483, 2.1237322e-06
    %v4485 = vadd.f32 %v4484, 0.00028619796
    %v4486 = vmul.f32 %v4483, %v4485
    %v4487 = vadd.f32 %v4486, 0.0036580483
    %v4488 = vmul.f32 %v4483, %v4487
    %v4489 = vadd.f32 %v4488, 0.05243302
    %v4490 = vmul.f32 %v4483, %v4489
    %v4491 = vadd.f32 %v4490, 0.18741608
    %v4492 = vmul.f32 %v4483, %v4491
    %v4493 = vadd.f32 %v4492, 1.1283791
    %v4494 = vmul.f32 %v755, %v4493
    %v4495 = vmul.f32 %v4483, 3.8918573e-05
    %v4496 = vadd.f32 %v4495, 0.001143296
    %v4497 = vmul.f32 %v4483, %v4496
    %v4498 = vadd.f32 %v4497, 0.014752088
    %v4499 = vmul.f32 %v4483, %v4498
    %v4500 = vadd.f32 %v4499, 0.112945676
    %v4501 = vmul.f32 %v4483, %v4500
    %v4502 = vadd.f32 %v4501, 0.4994258
    %v4503 = vmul.f32 %v4483, %v4502
    %v4504 = vadd.f32 %v4503, 1.0
    %v4505 = vrcp.pop %v4504
    %v4506 = vmul.f32 %v4504, %v4505
    %v4507 = vsub.f32 1.0, %v4506
    %v4508 = vmul.f32 %v4505, %v4507
    %v4509 = vadd.f32 %v4505, %v4508
    %vm4510 = vweird.f32 %v4504
    %vm4511 = vweird.f32 %v4505
    %vm4512 = vmor %vm4510, %vm4511
    %v4513 = vsel %vm4512, %v4505, %v4509
    %v4514 = vand.u32 2147483647, %v4504
    %vm4515 = vcmp.eq.f32.partialorder %v4514, 8.507059e+37
    %v4516 = vand.u32 %v4504, 2147483648
    %v4517 = vor.u32 1.1754944e-38, %v4516
    %v4518 = vsel %vm4515, %v4517, %v4513
    %v4519 = vmul.f32 %v4494, %v4518
    %v4520 = vmin.f32 %v4519, 1.0
    %v4521 = vmax.f32 %v4520, -1.0
    %v4522 = vmul.f32 %v756, %v756
    %v4523 = vmin.f32 16.0, %v4522
    %v4524 = vmul.f32 %v4523, 2.1237322e-06
    %v4525 = vadd.f32 %v4524, 0.00028619796
    %v4526 = vmul.f32 %v4523, %v4525
    %v4527 = vadd.f32 %v4526, 0.0036580483
    %v4528 = vmul.f32 %v4523, %v4527
    %v4529 = vadd.f32 %v4528, 0.05243302
    %v4530 = vmul.f32 %v4523, %v4529
    %v4531 = vadd.f32 %v4530, 0.18741608
    %v4532 = vmul.f32 %v4523, %v4531
    %v4533 = vadd.f32 %v4532, 1.1283791
    %v4534 = vmul.f32 %v756, %v4533
    %v4535 = vmul.f32 %v4523, 3.8918573e-05
    %v4536 = vadd.f32 %v4535, 0.001143296
    %v4537 = vmul.f32 %v4523, %v4536
    %v4538 = vadd.f32 %v4537, 0.014752088
    %v4539 = vmul.f32 %v4523, %v4538
    %v4540 = vadd.f32 %v4539, 0.112945676
    %v4541 = vmul.f32 %v4523, %v4540
    %v4542 = vadd.f32 %v4541, 0.4994258
    %v4543 = vmul.f32 %v4523, %v4542
    %v4544 = vadd.f32 %v4543, 1.0
    %v4545 = vrcp.pop %v4544
    %v4546 = vmul.f32 %v4544, %v4545
    %v4547 = vsub.f32 1.0, %v4546
    %v4548 = vmul.f32 %v4545, %v4547
    %v4549 = vadd.f32 %v4545, %v4548
    %vm4550 = vweird.f32 %v4544
    %vm4551 = vweird.f32 %v4545
    %vm4552 = vmor %vm4550, %vm4551
    %v4553 = vsel %vm4552, %v4545, %v4549
    %v4554 = vand.u32 2147483647, %v4544
    %vm4555 = vcmp.eq.f32.partialorder %v4554, 8.507059e+37
    %v4556 = vand.u32 %v4544, 2147483648
    %v4557 = vor.u32 1.1754944e-38, %v4556
    %v4558 = vsel %vm4555, %v4557, %v4553
    %v4559 = vmul.f32 %v4534, %v4558
    %v4560 = vmin.f32 %v4559, 1.0
    %v4561 = vmax.f32 %v4560, -1.0
    %v4562 = vmul.f32 %v757, %v757
    %v4563 = vmin.f32 16.0, %v4562
    %v4564 = vmul.f32 %v4563, 2.1237322e-06
    %v4565 = vadd.f32 %v4564, 0.00028619796
    %v4566 = vmul.f32 %v4563, %v4565
    %v4567 = vadd.f32 %v4566, 0.0036580483
    %v4568 = vmul.f32 %v4563, %v4567
    %v4569 = vadd.f32 %v4568, 0.05243302
    %v4570 = vmul.f32 %v4563, %v4569
    %v4571 = vadd.f32 %v4570, 0.18741608
    %v4572 = vmul.f32 %v4563, %v4571
    %v4573 = vadd.f32 %v4572, 1.1283791
    %v4574 = vmul.f32 %v757, %v4573
    %v4575 = vmul.f32 %v4563, 3.8918573e-05
    %v4576 = vadd.f32 %v4575, 0.001143296
    %v4577 = vmul.f32 %v4563, %v4576
    %v4578 = vadd.f32 %v4577, 0.014752088
    %v4579 = vmul.f32 %v4563, %v4578
    %v4580 = vadd.f32 %v4579, 0.112945676
    %v4581 = vmul.f32 %v4563, %v4580
    %v4582 = vadd.f32 %v4581, 0.4994258
    %v4583 = vmul.f32 %v4563, %v4582
    %v4584 = vadd.f32 %v4583, 1.0
    %v4585 = vrcp.pop %v4584
    %v4586 = vmul.f32 %v4584, %v4585
    %v4587 = vsub.f32 1.0, %v4586
    %v4588 = vmul.f32 %v4585, %v4587
    %v4589 = vadd.f32 %v4585, %v4588
    %vm4590 = vweird.f32 %v4584
    %vm4591 = vweird.f32 %v4585
    %vm4592 = vmor %vm4590, %vm4591
    %v4593 = vsel %vm4592, %v4585, %v4589
    %v4594 = vand.u32 2147483647, %v4584
    %vm4595 = vcmp.eq.f32.partialorder %v4594, 8.507059e+37
    %v4596 = vand.u32 %v4584, 2147483648
    %v4597 = vor.u32 1.1754944e-38, %v4596
    %v4598 = vsel %vm4595, %v4597, %v4593
    %v4599 = vmul.f32 %v4574, %v4598
    %v4600 = vmin.f32 %v4599, 1.0
    %v4601 = vmax.f32 %v4600, -1.0
    %v4602 = vmul.f32 %v758, %v758
    %v4603 = vmin.f32 16.0, %v4602
    %v4604 = vmul.f32 %v4603, 2.1237322e-06
    %v4605 = vadd.f32 %v4604, 0.00028619796
    %v4606 = vmul.f32 %v4603, %v4605
    %v4607 = vadd.f32 %v4606, 0.0036580483
    %v4608 = vmul.f32 %v4603, %v4607
    %v4609 = vadd.f32 %v4608, 0.05243302
    %v4610 = vmul.f32 %v4603, %v4609
    %v4611 = vadd.f32 %v4610, 0.18741608
    %v4612 = vmul.f32 %v4603, %v4611
    %v4613 = vadd.f32 %v4612, 1.1283791
    %v4614 = vmul.f32 %v758, %v4613
    %v4615 = vmul.f32 %v4603, 3.8918573e-05
    %v4616 = vadd.f32 %v4615, 0.001143296
    %v4617 = vmul.f32 %v4603, %v4616
    %v4618 = vadd.f32 %v4617, 0.014752088
    %v4619 = vmul.f32 %v4603, %v4618
    %v4620 = vadd.f32 %v4619, 0.112945676
    %v4621 = vmul.f32 %v4603, %v4620
    %v4622 = vadd.f32 %v4621, 0.4994258
    %v4623 = vmul.f32 %v4603, %v4622
    %v4624 = vadd.f32 %v4623, 1.0
    %v4625 = vrcp.pop %v4624
    %v4626 = vmul.f32 %v4624, %v4625
    %v4627 = vsub.f32 1.0, %v4626
    %v4628 = vmul.f32 %v4625, %v4627
    %v4629 = vadd.f32 %v4625, %v4628
    %vm4630 = vweird.f32 %v4624
    %vm4631 = vweird.f32 %v4625
    %vm4632 = vmor %vm4630, %vm4631
    %v4633 = vsel %vm4632, %v4625, %v4629
    %v4634 = vand.u32 2147483647, %v4624
    %vm4635 = vcmp.eq.f32.partialorder %v4634, 8.507059e+37
    %v4636 = vand.u32 %v4624, 2147483648
    %v4637 = vor.u32 1.1754944e-38, %v4636
    %v4638 = vsel %vm4635, %v4637, %v4633
    %v4639 = vmul.f32 %v4614, %v4638
    %v4640 = vmin.f32 %v4639, 1.0
    %v4641 = vmax.f32 %v4640, -1.0
    %v4642 = vmul.f32 %v759, %v759
    %v4643 = vmin.f32 16.0, %v4642
    %v4644 = vmul.f32 %v4643, 2.1237322e-06
    %v4645 = vadd.f32 %v4644, 0.00028619796
    %v4646 = vmul.f32 %v4643, %v4645
    %v4647 = vadd.f32 %v4646, 0.0036580483
    %v4648 = vmul.f32 %v4643, %v4647
    %v4649 = vadd.f32 %v4648, 0.05243302
    %v4650 = vmul.f32 %v4643, %v4649
    %v4651 = vadd.f32 %v4650, 0.18741608
    %v4652 = vmul.f32 %v4643, %v4651
    %v4653 = vadd.f32 %v4652, 1.1283791
    %v4654 = vmul.f32 %v759, %v4653
    %v4655 = vmul.f32 %v4643, 3.8918573e-05
    %v4656 = vadd.f32 %v4655, 0.001143296
    %v4657 = vmul.f32 %v4643, %v4656
    %v4658 = vadd.f32 %v4657, 0.014752088
    %v4659 = vmul.f32 %v4643, %v4658
    %v4660 = vadd.f32 %v4659, 0.112945676
    %v4661 = vmul.f32 %v4643, %v4660
    %v4662 = vadd.f32 %v4661, 0.4994258
    %v4663 = vmul.f32 %v4643, %v4662
    %v4664 = vadd.f32 %v4663, 1.0
    %v4665 = vrcp.pop %v4664
    %v4666 = vmul.f32 %v4664, %v4665
    %v4667 = vsub.f32 1.0, %v4666
    %v4668 = vmul.f32 %v4665, %v4667
    %v4669 = vadd.f32 %v4665, %v4668
    %vm4670 = vweird.f32 %v4664
    %vm4671 = vweird.f32 %v4665
    %vm4672 = vmor %vm4670, %vm4671
    %v4673 = vsel %vm4672, %v4665, %v4669
    %v4674 = vand.u32 2147483647, %v4664
    %vm4675 = vcmp.eq.f32.partialorder %v4674, 8.507059e+37
    %v4676 = vand.u32 %v4664, 2147483648
    %v4677 = vor.u32 1.1754944e-38, %v4676
    %v4678 = vsel %vm4675, %v4677, %v4673
    %v4679 = vmul.f32 %v4654, %v4678
    %v4680 = vmin.f32 %v4679, 1.0
    %v4681 = vmax.f32 %v4680, -1.0
    %v4682 = vmul.f32 %v760, %v760
    %v4683 = vmin.f32 16.0, %v4682
    %v4684 = vmul.f32 %v4683, 2.1237322e-06
    %v4685 = vadd.f32 %v4684, 0.00028619796
    %v4686 = vmul.f32 %v4683, %v4685
    %v4687 = vadd.f32 %v4686, 0.0036580483
    %v4688 = vmul.f32 %v4683, %v4687
    %v4689 = vadd.f32 %v4688, 0.05243302
    %v4690 = vmul.f32 %v4683, %v4689
    %v4691 = vadd.f32 %v4690, 0.18741608
    %v4692 = vmul.f32 %v4683, %v4691
    %v4693 = vadd.f32 %v4692, 1.1283791
    %v4694 = vmul.f32 %v760, %v4693
    %v4695 = vmul.f32 %v4683, 3.8918573e-05
    %v4696 = vadd.f32 %v4695, 0.001143296
    %v4697 = vmul.f32 %v4683, %v4696
    %v4698 = vadd.f32 %v4697, 0.014752088
    %v4699 = vmul.f32 %v4683, %v4698
    %v4700 = vadd.f32 %v4699, 0.112945676
    %v4701 = vmul.f32 %v4683, %v4700
    %v4702 = vadd.f32 %v4701, 0.4994258
    %v4703 = vmul.f32 %v4683, %v4702
    %v4704 = vadd.f32 %v4703, 1.0
    %v4705 = vrcp.pop %v4704
    %v4706 = vmul.f32 %v4704, %v4705
    %v4707 = vsub.f32 1.0, %v4706
    %v4708 = vmul.f32 %v4705, %v4707
    %v4709 = vadd.f32 %v4705, %v4708
    %vm4710 = vweird.f32 %v4704
    %vm4711 = vweird.f32 %v4705
    %vm4712 = vmor %vm4710, %vm4711
    %v4713 = vsel %vm4712, %v4705, %v4709
    %v4714 = vand.u32 2147483647, %v4704
    %vm4715 = vcmp.eq.f32.partialorder %v4714, 8.507059e+37
    %v4716 = vand.u32 %v4704, 2147483648
    %v4717 = vor.u32 1.1754944e-38, %v4716
    %v4718 = vsel %vm4715, %v4717, %v4713
    %v4719 = vmul.f32 %v4694, %v4718
    %v4720 = vmin.f32 %v4719, 1.0
    %v4721 = vmax.f32 %v4720, -1.0
    %v4722 = vmul.f32 %v761, %v761
    %v4723 = vmin.f32 16.0, %v4722
    %v4724 = vmul.f32 %v4723, 2.1237322e-06
    %v4725 = vadd.f32 %v4724, 0.00028619796
    %v4726 = vmul.f32 %v4723, %v4725
    %v4727 = vadd.f32 %v4726, 0.0036580483
    %v4728 = vmul.f32 %v4723, %v4727
    %v4729 = vadd.f32 %v4728, 0.05243302
    %v4730 = vmul.f32 %v4723, %v4729
    %v4731 = vadd.f32 %v4730, 0.18741608
    %v4732 = vmul.f32 %v4723, %v4731
    %v4733 = vadd.f32 %v4732, 1.1283791
    %v4734 = vmul.f32 %v761, %v4733
    %v4735 = vmul.f32 %v4723, 3.8918573e-05
    %v4736 = vadd.f32 %v4735, 0.001143296
    %v4737 = vmul.f32 %v4723, %v4736
    %v4738 = vadd.f32 %v4737, 0.014752088
    %v4739 = vmul.f32 %v4723, %v4738
    %v4740 = vadd.f32 %v4739, 0.112945676
    %v4741 = vmul.f32 %v4723, %v4740
    %v4742 = vadd.f32 %v4741, 0.4994258
    %v4743 = vmul.f32 %v4723, %v4742
    %v4744 = vadd.f32 %v4743, 1.0
    %v4745 = vrcp.pop %v4744
    %v4746 = vmul.f32 %v4744, %v4745
    %v4747 = vsub.f32 1.0, %v4746
    %v4748 = vmul.f32 %v4745, %v4747
    %v4749 = vadd.f32 %v4745, %v4748
    %vm4750 = vweird.f32 %v4744
    %vm4751 = vweird.f32 %v4745
    %vm4752 = vmor %vm4750, %vm4751
    %v4753 = vsel %vm4752, %v4745, %v4749
    %v4754 = vand.u32 2147483647, %v4744
    %vm4755 = vcmp.eq.f32.partialorder %v4754, 8.507059e+37
    %v4756 = vand.u32 %v4744, 2147483648
    %v4757 = vor.u32 1.1754944e-38, %v4756
    %v4758 = vsel %vm4755, %v4757, %v4753
    %v4759 = vmul.f32 %v4734, %v4758
    %v4760 = vmin.f32 %v4759, 1.0
    %v4761 = vmax.f32 %v4760, -1.0
    %v4762 = vadd.f32 %v801, 1.0
    %v4763 = vadd.f32 %v841, 1.0
    %v4764 = vadd.f32 %v881, 1.0
    %v4765 = vadd.f32 %v921, 1.0
    %v4766 = vadd.f32 %v961, 1.0
    %v4767 = vadd.f32 %v1001, 1.0
    %v4768 = vadd.f32 %v1041, 1.0
    %v4769 = vadd.f32 %v1081, 1.0
    %v4770 = vadd.f32 %v1121, 1.0
    %v4771 = vadd.f32 %v1161, 1.0
    %v4772 = vadd.f32 %v1201, 1.0
    %v4773 = vadd.f32 %v1241, 1.0
    %v4774 = vadd.f32 %v1281, 1.0
    %v4775 = vadd.f32 %v1321, 1.0
    %v4776 = vadd.f32 %v1361, 1.0
    %v4777 = vadd.f32 %v1401, 1.0
    %v4778 = vadd.f32 %v1441, 1.0
    %v4779 = vadd.f32 %v1481, 1.0
    %v4780 = vadd.f32 %v1521, 1.0
    %v4781 = vadd.f32 %v1561, 1.0
    %v4782 = vadd.f32 %v1601, 1.0
    %v4783 = vadd.f32 %v1641, 1.0
    %v4784 = vadd.f32 %v1681, 1.0
    %v4785 = vadd.f32 %v1721, 1.0
    %v4786 = vadd.f32 %v1761, 1.0
    %v4787 = vadd.f32 %v1801, 1.0
    %v4788 = vadd.f32 %v1841, 1.0
    %v4789 = vadd.f32 %v1881, 1.0
    %v4790 = vadd.f32 %v1921, 1.0
    %v4791 = vadd.f32 %v1961, 1.0
    %v4792 = vadd.f32 %v2001, 1.0
    %v4793 = vadd.f32 %v2041, 1.0
    %v4794 = vadd.f32 %v2081, 1.0
    %v4795 = vadd.f32 %v2121, 1.0
    %v4796 = vadd.f32 %v2161, 1.0
    %v4797 = vadd.f32 %v2201, 1.0
    %v4798 = vadd.f32 %v2241, 1.0
    %v4799 = vadd.f32 %v2281, 1.0
    %v4800 = vadd.f32 %v2321, 1.0
    %v4801 = vadd.f32 %v2361, 1.0
    %v4802 = vadd.f32 %v2401, 1.0
    %v4803 = vadd.f32 %v2441, 1.0
    %v4804 = vadd.f32 %v2481, 1.0
    %v4805 = vadd.f32 %v2521, 1.0
    %v4806 = vadd.f32 %v2561, 1.0
    %v4807 = vadd.f32 %v2601, 1.0
    %v4808 = vadd.f32 %v2641, 1.0
    %v4809 = vadd.f32 %v2681, 1.0
    %v4810 = vadd.f32 %v2721, 1.0
    %v4811 = vadd.f32 %v2761, 1.0
    %v4812 = vadd.f32 %v2801, 1.0
    %v4813 = vadd.f32 %v2841, 1.0
    %v4814 = vadd.f32 %v2881, 1.0
    %v4815 = vadd.f32 %v2921, 1.0
    %v4816 = vadd.f32 %v2961, 1.0
    %v4817 = vadd.f32 %v3001, 1.0
    %v4818 = vadd.f32 %v3041, 1.0
    %v4819 = vadd.f32 %v3081, 1.0
    %v4820 = vadd.f32 %v3121, 1.0
    %v4821 = vadd.f32 %v3161, 1.0
    %v4822 = vadd.f32 %v3201, 1.0
    %v4823 = vadd.f32 %v3241, 1.0
    %v4824 = vadd.f32 %v3281, 1.0
    %v4825 = vadd.f32 %v3321, 1.0
    %v4826 = vadd.f32 %v3361, 1.0
    %v4827 = vadd.f32 %v3401, 1.0
    %v4828 = vadd.f32 %v3441, 1.0
    %v4829 = vadd.f32 %v3481, 1.0
    %v4830 = vadd.f32 %v3521, 1.0
    %v4831 = vadd.f32 %v3561, 1.0
    %v4832 = vadd.f32 %v3601, 1.0
    %v4833 = vadd.f32 %v3641, 1.0
    %v4834 = vadd.f32 %v3681, 1.0
    %v4835 = vadd.f32 %v3721, 1.0
    %v4836 = vadd.f32 %v3761, 1.0
    %v4837 = vadd.f32 %v3801, 1.0
    %v4838 = vadd.f32 %v3841, 1.0
    %v4839 = vadd.f32 %v3881, 1.0
    %v4840 = vadd.f32 %v3921, 1.0
    %v4841 = vadd.f32 %v3961, 1.0
    %v4842 = vadd.f32 %v4001, 1.0
    %v4843 = vadd.f32 %v4041, 1.0
    %v4844 = vadd.f32 %v4081, 1.0
    %v4845 = vadd.f32 %v4121, 1.0
    %v4846 = vadd.f32 %v4161, 1.0
    %v4847 = vadd.f32 %v4201, 1.0
    %v4848 = vadd.f32 %v4241, 1.0
    %v4849 = vadd.f32 %v4281, 1.0
    %v4850 = vadd.f32 %v4321, 1.0
    %v4851 = vadd.f32 %v4361, 1.0
    %v4852 = vadd.f32 %v4401, 1.0
    %v4853 = vadd.f32 %v4441, 1.0
    %v4854 = vadd.f32 %v4481, 1.0
    %v4855 = vadd.f32 %v4521, 1.0
    %v4856 = vadd.f32 %v4561, 1.0
    %v4857 = vadd.f32 %v4601, 1.0
    %v4858 = vadd.f32 %v4641, 1.0
    %v4859 = vadd.f32 %v4681, 1.0
    %v4860 = vadd.f32 %v4721, 1.0
    %v4861 = vadd.f32 %v4761, 1.0
    %v4862 = vmul.f32 %v562, %v4762
    %v4863 = vmul.f32 %v563, %v4763
    %v4864 = vmul.f32 %v564, %v4764
    %v4865 = vmul.f32 %v565, %v4765
    %v4866 = vmul.f32 %v566, %v4766
    %v4867 = vmul.f32 %v567, %v4767
    %v4868 = vmul.f32 %v568, %v4768
    %v4869 = vmul.f32 %v569, %v4769
    %v4870 = vmul.f32 %v570, %v4770
    %v4871 = vmul.f32 %v571, %v4771
    %v4872 = vmul.f32 %v572, %v4772
    %v4873 = vmul.f32 %v573, %v4773
    %v4874 = vmul.f32 %v574, %v4774
    %v4875 = vmul.f32 %v575, %v4775
    %v4876 = vmul.f32 %v576, %v4776
    %v4877 = vmul.f32 %v577, %v4777
    %v4878 = vmul.f32 %v578, %v4778
    %v4879 = vmul.f32 %v579, %v4779
    %v4880 = vmul.f32 %v580, %v4780
    %v4881 = vmul.f32 %v581, %v4781
    %v4882 = vmul.f32 %v582, %v4782
    %v4883 = vmul.f32 %v583, %v4783
    %v4884 = vmul.f32 %v584, %v4784
    %v4885 = vmul.f32 %v585, %v4785
    %v4886 = vmul.f32 %v586, %v4786
    %v4887 = vmul.f32 %v587, %v4787
    %v4888 = vmul.f32 %v588, %v4788
    %v4889 = vmul.f32 %v589, %v4789
    %v4890 = vmul.f32 %v590, %v4790
    %v4891 = vmul.f32 %v591, %v4791
    %v4892 = vmul.f32 %v592, %v4792
    %v4893 = vmul.f32 %v593, %v4793
    %v4894 = vmul.f32 %v594, %v4794
    %v4895 = vmul.f32 %v595, %v4795
    %v4896 = vmul.f32 %v596, %v4796
    %v4897 = vmul.f32 %v597, %v4797
    %v4898 = vmul.f32 %v598, %v4798
    %v4899 = vmul.f32 %v599, %v4799
    %v4900 = vmul.f32 %v600, %v4800
    %v4901 = vmul.f32 %v601, %v4801
    %v4902 = vmul.f32 %v602, %v4802
    %v4903 = vmul.f32 %v603, %v4803
    %v4904 = vmul.f32 %v604, %v4804
    %v4905 = vmul.f32 %v605, %v4805
    %v4906 = vmul.f32 %v606, %v4806
    %v4907 = vmul.f32 %v607, %v4807
    %v4908 = vmul.f32 %v608, %v4808
    %v4909 = vmul.f32 %v609, %v4809
    %v4910 = vmul.f32 %v610, %v4810
    %v4911 = vmul.f32 %v611, %v4811
    %v4912 = vmul.f32 %v612, %v4812
    %v4913 = vmul.f32 %v613, %v4813
    %v4914 = vmul.f32 %v614, %v4814
    %v4915 = vmul.f32 %v615, %v4815
    %v4916 = vmul.f32 %v616, %v4816
    %v4917 = vmul.f32 %v617, %v4817
    %v4918 = vmul.f32 %v618, %v4818
    %v4919 = vmul.f32 %v619, %v4819
    %v4920 = vmul.f32 %v620, %v4820
    %v4921 = vmul.f32 %v621, %v4821
    %v4922 = vmul.f32 %v622, %v4822
    %v4923 = vmul.f32 %v623, %v4823
    %v4924 = vmul.f32 %v624, %v4824
    %v4925 = vmul.f32 %v625, %v4825
    %v4926 = vmul.f32 %v626, %v4826
    %v4927 = vmul.f32 %v627, %v4827
    %v4928 = vmul.f32 %v628, %v4828
    %v4929 = vmul.f32 %v629, %v4829
    %v4930 = vmul.f32 %v630, %v4830
    %v4931 = vmul.f32 %v631, %v4831
    %v4932 = vmul.f32 %v632, %v4832
    %v4933 = vmul.f32 %v633, %v4833
    %v4934 = vmul.f32 %v634, %v4834
    %v4935 = vmul.f32 %v635, %v4835
    %v4936 = vmul.f32 %v636, %v4836
    %v4937 = vmul.f32 %v637, %v4837
    %v4938 = vmul.f32 %v638, %v4838
    %v4939 = vmul.f32 %v639, %v4839
    %v4940 = vmul.f32 %v640, %v4840
    %v4941 = vmul.f32 %v641, %v4841
    %v4942 = vmul.f32 %v642, %v4842
    %v4943 = vmul.f32 %v643, %v4843
    %v4944 = vmul.f32 %v644, %v4844
    %v4945 = vmul.f32 %v645, %v4845
    %v4946 = vmul.f32 %v646, %v4846
    %v4947 = vmul.f32 %v647, %v4847
    %v4948 = vmul.f32 %v648, %v4848
    %v4949 = vmul.f32 %v649, %v4849
    %v4950 = vmul.f32 %v650, %v4850
    %v4951 = vmul.f32 %v651, %v4851
    %v4952 = vmul.f32 %v652, %v4852
    %v4953 = vmul.f32 %v653, %v4853
    %v4954 = vmul.f32 %v654, %v4854
    %v4955 = vmul.f32 %v655, %v4855
    %v4956 = vmul.f32 %v656, %v4856
    %v4957 = vmul.f32 %v657, %v4857
    %v4958 = vmul.f32 %v658, %v4858
    %v4959 = vmul.f32 %v659, %v4859
    %v4960 = vmul.f32 %v660, %v4860
    %v4961 = vmul.f32 %v661, %v4861
    %v4962 = vld [vmem:[#allocation2] sm:$0xff]
    %v4963 = vld [vmem:[#allocation2 + $0x8] sm:$0xff]
    %v4964 = vld [vmem:[#allocation2 + $0x10] sm:$0xff]
    %v4965 = vld [vmem:[#allocation2 + $0x18] sm:$0xff]
    %v4966 = vld [vmem:[#allocation2 + $0x20] sm:$0xff]
    %v4967 = vld [vmem:[#allocation2 + $0x28] sm:$0xff]
    %v4968 = vld [vmem:[#allocation2 + $0x30] sm:$0xff]
    %v4969 = vld [vmem:[#allocation2 + $0x38] sm:$0xff]
    %v4970 = vld [vmem:[#allocation2 + $0x40] sm:$0xff]
    %v4971 = vld [vmem:[#allocation2 + $0x48] sm:$0xff]
    %v4972 = vld [vmem:[#allocation2 + $0x50] sm:$0xff]
    %v4973 = vld [vmem:[#allocation2 + $0x58] sm:$0xff]
    %v4974 = vld [vmem:[#allocation2 + $0x60] sm:$0xff]
    %v4975 = vld [vmem:[#allocation2 + $0x68] sm:$0xff]
    %v4976 = vld [vmem:[#allocation2 + $0x70] sm:$0xff]
    %v4977 = vld [vmem:[#allocation2 + $0x78] sm:$0xff]
    %v4978 = vld [vmem:[#allocation2 + $0x80] sm:$0xff]
    %v4979 = vld [vmem:[#allocation2 + $0x88] sm:$0xff]
    %v4980 = vld [vmem:[#allocation2 + $0x90] sm:$0xff]
    %v4981 = vld [vmem:[#allocation2 + $0x98] sm:$0xff]
    %v4982 = vld [vmem:[#allocation2 + $0xa0] sm:$0xff]
    %v4983 = vld [vmem:[#allocation2 + $0xa8] sm:$0xff]
    %v4984 = vld [vmem:[#allocation2 + $0xb0] sm:$0xff]
    %v4985 = vld [vmem:[#allocation2 + $0xb8] sm:$0xff]
    %v4986 = vld [vmem:[#allocation2 + $0xc0] sm:$0xff]
    %v4987 = vld [vmem:[#allocation2 + $0xc8] sm:$0xff]
    %v4988 = vld [vmem:[#allocation2 + $0xd0] sm:$0xff]
    %v4989 = vld [vmem:[#allocation2 + $0xd8] sm:$0xff]
    %v4990 = vld [vmem:[#allocation2 + $0xe0] sm:$0xff]
    %v4991 = vld [vmem:[#allocation2 + $0xe8] sm:$0xff]
    %v4992 = vld [vmem:[#allocation2 + $0xf0] sm:$0xff]
    %v4993 = vld [vmem:[#allocation2 + $0xf8] sm:$0xff]
    %v4994 = vld [vmem:[#allocation2 + $0x100] sm:$0xff]
    %v4995 = vld [vmem:[#allocation2 + $0x108] sm:$0xff]
    %v4996 = vld [vmem:[#allocation2 + $0x110] sm:$0xff]
    %v4997 = vld [vmem:[#allocation2 + $0x118] sm:$0xff]
    %v4998 = vld [vmem:[#allocation2 + $0x120] sm:$0xff]
    %v4999 = vld [vmem:[#allocation2 + $0x128] sm:$0xff]
    %v5000 = vld [vmem:[#allocation2 + $0x130] sm:$0xff]
    %v5001 = vld [vmem:[#allocation2 + $0x138] sm:$0xff]
    %v5002 = vld [vmem:[#allocation2 + $0x140] sm:$0xff]
    %v5003 = vld [vmem:[#allocation2 + $0x148] sm:$0xff]
    %v5004 = vld [vmem:[#allocation2 + $0x150] sm:$0xff]
    %v5005 = vld [vmem:[#allocation2 + $0x158] sm:$0xff]
    %v5006 = vld [vmem:[#allocation2 + $0x160] sm:$0xff]
    %v5007 = vld [vmem:[#allocation2 + $0x168] sm:$0xff]
    %v5008 = vld [vmem:[#allocation2 + $0x170] sm:$0xff]
    %v5009 = vld [vmem:[#allocation2 + $0x178] sm:$0xff]
    %v5010 = vld [vmem:[#allocation2 + $0x180] sm:$0xff]
    %v5011 = vld [vmem:[#allocation2 + $0x188] sm:$0xff]
    %v5012 = vld [vmem:[#allocation9] sm:$0xff]
    %v5013 = vld [vmem:[#allocation9 + $0x8] sm:$0xff]
    %v5014 = vld [vmem:[#allocation9 + $0x10] sm:$0xff]
    %v5015 = vld [vmem:[#allocation9 + $0x18] sm:$0xff]
    %v5016 = vld [vmem:[#allocation9 + $0x20] sm:$0xff]
    %v5017 = vld [vmem:[#allocation9 + $0x28] sm:$0xff]
    %v5018 = vld [vmem:[#allocation9 + $0x30] sm:$0xff]
    %v5019 = vld [vmem:[#allocation9 + $0x38] sm:$0xff]
    %v5020 = vld [vmem:[#allocation9 + $0x40] sm:$0xff]
    %v5021 = vld [vmem:[#allocation9 + $0x48] sm:$0xff]
    %v5022 = vld [vmem:[#allocation9 + $0x50] sm:$0xff]
    %v5023 = vld [vmem:[#allocation9 + $0x58] sm:$0xff]
    %v5024 = vld [vmem:[#allocation9 + $0x60] sm:$0xff]
    %v5025 = vld [vmem:[#allocation9 + $0x68] sm:$0xff]
    %v5026 = vld [vmem:[#allocation9 + $0x70] sm:$0xff]
    %v5027 = vld [vmem:[#allocation9 + $0x78] sm:$0xff]
    %v5028 = vld [vmem:[#allocation9 + $0x80] sm:$0xff]
    %v5029 = vld [vmem:[#allocation9 + $0x88] sm:$0xff]
    %v5030 = vld [vmem:[#allocation9 + $0x90] sm:$0xff]
    %v5031 = vld [vmem:[#allocation9 + $0x98] sm:$0xff]
    %v5032 = vld [vmem:[#allocation9 + $0xa0] sm:$0xff]
    %v5033 = vld [vmem:[#allocation9 + $0xa8] sm:$0xff]
    %v5034 = vld [vmem:[#allocation9 + $0xb0] sm:$0xff]
    %v5035 = vld [vmem:[#allocation9 + $0xb8] sm:$0xff]
    %v5036 = vld [vmem:[#allocation9 + $0xc0] sm:$0xff]
    %v5037 = vld [vmem:[#allocation9 + $0xc8] sm:$0xff]
    %v5038 = vld [vmem:[#allocation9 + $0xd0] sm:$0xff]
    %v5039 = vld [vmem:[#allocation9 + $0xd8] sm:$0xff]
    %v5040 = vld [vmem:[#allocation9 + $0xe0] sm:$0xff]
    %v5041 = vld [vmem:[#allocation9 + $0xe8] sm:$0xff]
    %v5042 = vld [vmem:[#allocation9 + $0xf0] sm:$0xff]
    %v5043 = vld [vmem:[#allocation9 + $0xf8] sm:$0xff]
    %5044 = vmatpush.msra.mxu0 %v5027
    %5045 = vmatpush.msra.mxu0 %v5026
    %5046 = vmatpush.msra.mxu0 %v5025
    %5047 = vmatpush.msra.mxu0 %v5024
    %5048 = vmatpush.msra.mxu0 %v5023
    %5049 = vmatpush.msra.mxu0 %v5022
    %5050 = vmatpush.msra.mxu0 %v5021
    %5051 = vmatpush.msra.mxu0 %v5020
    %5052 = vmatpush.msra.mxu0 %v5019
    %5053 = vmatpush.msra.mxu0 %v5018
    %5054 = vmatpush.msra.mxu0 %v5017
    %5055 = vmatpush.msra.mxu0 %v5016
    %5056 = vmatpush.msra.mxu0 %v5015
    %5057 = vmatpush.msra.mxu0 %v5014
    %5058 = vmatpush.msra.mxu0 %v5013
    %5059 = vmatpush.msra.mxu0 %v5012
    %5060 = vmatmul.f32.gmra.mxu0 %v4862
    %v5061 = vpop.f32.mrf.mxu0
    %v5062 = vadd.f32 0.0, %v5061
    %5063 = vmatmul.f32.gmra.mxu0 %v4864
    %v5064 = vpop.f32.mrf.mxu0
    %v5065 = vadd.f32 0.0, %v5064
    %5066 = vmatmul.f32.gmra.mxu0 %v4866
    %v5067 = vpop.f32.mrf.mxu0
    %v5068 = vadd.f32 0.0, %v5067
    %5069 = vmatmul.f32.gmra.mxu0 %v4868
    %v5070 = vpop.f32.mrf.mxu0
    %v5071 = vadd.f32 0.0, %v5070
    %5072 = vmatmul.f32.gmra.mxu0 %v4870
    %v5073 = vpop.f32.mrf.mxu0
    %v5074 = vadd.f32 0.0, %v5073
    %5075 = vmatmul.f32.gmra.mxu0 %v4872
    %v5076 = vpop.f32.mrf.mxu0
    %v5077 = vadd.f32 0.0, %v5076
    %5078 = vmatmul.f32.gmra.mxu0 %v4874
    %v5079 = vpop.f32.mrf.mxu0
    %v5080 = vadd.f32 0.0, %v5079
    %5081 = vmatmul.f32.gmra.mxu0 %v4876
    %v5082 = vpop.f32.mrf.mxu0
    %v5083 = vadd.f32 0.0, %v5082
    %5084 = vmatmul.f32.gmra.mxu0 %v4878
    %v5085 = vpop.f32.mrf.mxu0
    %v5086 = vadd.f32 0.0, %v5085
    %5087 = vmatmul.f32.gmra.mxu0 %v4880
    %v5088 = vpop.f32.mrf.mxu0
    %v5089 = vadd.f32 0.0, %v5088
    %5090 = vmatmul.f32.gmra.mxu0 %v4882
    %v5091 = vpop.f32.mrf.mxu0
    %v5092 = vadd.f32 0.0, %v5091
    %5093 = vmatmul.f32.gmra.mxu0 %v4884
    %v5094 = vpop.f32.mrf.mxu0
    %v5095 = vadd.f32 0.0, %v5094
    %5096 = vmatmul.f32.gmra.mxu0 %v4886
    %v5097 = vpop.f32.mrf.mxu0
    %v5098 = vadd.f32 0.0, %v5097
    %5099 = vmatmul.f32.gmra.mxu0 %v4888
    %v5100 = vpop.f32.mrf.mxu0
    %v5101 = vadd.f32 0.0, %v5100
    %5102 = vmatmul.f32.gmra.mxu0 %v4890
    %v5103 = vpop.f32.mrf.mxu0
    %v5104 = vadd.f32 0.0, %v5103
    %5105 = vmatmul.f32.gmra.mxu0 %v4892
    %v5106 = vpop.f32.mrf.mxu0
    %v5107 = vadd.f32 0.0, %v5106
    %5108 = vmatmul.f32.gmra.mxu0 %v4894
    %v5109 = vpop.f32.mrf.mxu0
    %v5110 = vadd.f32 0.0, %v5109
    %5111 = vmatmul.f32.gmra.mxu0 %v4896
    %v5112 = vpop.f32.mrf.mxu0
    %v5113 = vadd.f32 0.0, %v5112
    %5114 = vmatmul.f32.gmra.mxu0 %v4898
    %v5115 = vpop.f32.mrf.mxu0
    %v5116 = vadd.f32 0.0, %v5115
    %5117 = vmatmul.f32.gmra.mxu0 %v4900
    %v5118 = vpop.f32.mrf.mxu0
    %v5119 = vadd.f32 0.0, %v5118
    %5120 = vmatmul.f32.gmra.mxu0 %v4902
    %v5121 = vpop.f32.mrf.mxu0
    %v5122 = vadd.f32 0.0, %v5121
    %5123 = vmatmul.f32.gmra.mxu0 %v4904
    %v5124 = vpop.f32.mrf.mxu0
    %v5125 = vadd.f32 0.0, %v5124
    %5126 = vmatmul.f32.gmra.mxu0 %v4906
    %v5127 = vpop.f32.mrf.mxu0
    %v5128 = vadd.f32 0.0, %v5127
    %5129 = vmatmul.f32.gmra.mxu0 %v4908
    %v5130 = vpop.f32.mrf.mxu0
    %v5131 = vadd.f32 0.0, %v5130
    %5132 = vmatmul.f32.gmra.mxu0 %v4910
    %v5133 = vpop.f32.mrf.mxu0
    %v5134 = vadd.f32 0.0, %v5133
    %5135 = vmatmul.f32.gmra.mxu0 %v4912
    %v5136 = vpop.f32.mrf.mxu0
    %v5137 = vadd.f32 0.0, %v5136
    %5138 = vmatmul.f32.gmra.mxu0 %v4914
    %v5139 = vpop.f32.mrf.mxu0
    %v5140 = vadd.f32 0.0, %v5139
    %5141 = vmatmul.f32.gmra.mxu0 %v4916
    %v5142 = vpop.f32.mrf.mxu0
    %v5143 = vadd.f32 0.0, %v5142
    %5144 = vmatmul.f32.gmra.mxu0 %v4918
    %v5145 = vpop.f32.mrf.mxu0
    %v5146 = vadd.f32 0.0, %v5145
    %5147 = vmatmul.f32.gmra.mxu0 %v4920
    %v5148 = vpop.f32.mrf.mxu0
    %v5149 = vadd.f32 0.0, %v5148
    %5150 = vmatmul.f32.gmra.mxu0 %v4922
    %v5151 = vpop.f32.mrf.mxu0
    %v5152 = vadd.f32 0.0, %v5151
    %5153 = vmatmul.f32.gmra.mxu0 %v4924
    %v5154 = vpop.f32.mrf.mxu0
    %v5155 = vadd.f32 0.0, %v5154
    %5156 = vmatmul.f32.gmra.mxu0 %v4926
    %v5157 = vpop.f32.mrf.mxu0
    %v5158 = vadd.f32 0.0, %v5157
    %5159 = vmatmul.f32.gmra.mxu0 %v4928
    %v5160 = vpop.f32.mrf.mxu0
    %v5161 = vadd.f32 0.0, %v5160
    %5162 = vmatmul.f32.gmra.mxu0 %v4930
    %v5163 = vpop.f32.mrf.mxu0
    %v5164 = vadd.f32 0.0, %v5163
    %5165 = vmatmul.f32.gmra.mxu0 %v4932
    %v5166 = vpop.f32.mrf.mxu0
    %v5167 = vadd.f32 0.0, %v5166
    %5168 = vmatmul.f32.gmra.mxu0 %v4934
    %v5169 = vpop.f32.mrf.mxu0
    %v5170 = vadd.f32 0.0, %v5169
    %5171 = vmatmul.f32.gmra.mxu0 %v4936
    %v5172 = vpop.f32.mrf.mxu0
    %v5173 = vadd.f32 0.0, %v5172
    %5174 = vmatmul.f32.gmra.mxu0 %v4938
    %v5175 = vpop.f32.mrf.mxu0
    %v5176 = vadd.f32 0.0, %v5175
    %5177 = vmatmul.f32.gmra.mxu0 %v4940
    %v5178 = vpop.f32.mrf.mxu0
    %v5179 = vadd.f32 0.0, %v5178
    %5180 = vmatmul.f32.gmra.mxu0 %v4942
    %v5181 = vpop.f32.mrf.mxu0
    %v5182 = vadd.f32 0.0, %v5181
    %5183 = vmatmul.f32.gmra.mxu0 %v4944
    %v5184 = vpop.f32.mrf.mxu0
    %v5185 = vadd.f32 0.0, %v5184
    %5186 = vmatmul.f32.gmra.mxu0 %v4946
    %v5187 = vpop.f32.mrf.mxu0
    %v5188 = vadd.f32 0.0, %v5187
    %5189 = vmatmul.f32.gmra.mxu0 %v4948
    %v5190 = vpop.f32.mrf.mxu0
    %v5191 = vadd.f32 0.0, %v5190
    %5192 = vmatmul.f32.gmra.mxu0 %v4950
    %v5193 = vpop.f32.mrf.mxu0
    %v5194 = vadd.f32 0.0, %v5193
    %5195 = vmatmul.f32.gmra.mxu0 %v4952
    %v5196 = vpop.f32.mrf.mxu0
    %v5197 = vadd.f32 0.0, %v5196
    %5198 = vmatmul.f32.gmra.mxu0 %v4954
    %v5199 = vpop.f32.mrf.mxu0
    %v5200 = vadd.f32 0.0, %v5199
    %5201 = vmatmul.f32.gmra.mxu0 %v4956
    %v5202 = vpop.f32.mrf.mxu0
    %v5203 = vadd.f32 0.0, %v5202
    %5204 = vmatmul.f32.gmra.mxu0 %v4958
    %v5205 = vpop.f32.mrf.mxu0
    %v5206 = vadd.f32 0.0, %v5205
    %5207 = vmatmul.f32.gmra.mxu0 %v4960
    %v5208 = vpop.f32.mrf.mxu0
    %v5209 = vadd.f32 0.0, %v5208
    %5210 = vdwg.mxu0
    %5211 = vmatpush.msra.mxu0 %v5043
    %5212 = vmatpush.msra.mxu0 %v5042
    %5213 = vmatpush.msra.mxu0 %v5041
    %5214 = vmatpush.msra.mxu0 %v5040
    %5215 = vmatpush.msra.mxu0 %v5039
    %5216 = vmatpush.msra.mxu0 %v5038
    %5217 = vmatpush.msra.mxu0 %v5037
    %5218 = vmatpush.msra.mxu0 %v5036
    %5219 = vmatpush.msra.mxu0 %v5035
    %5220 = vmatpush.msra.mxu0 %v5034
    %5221 = vmatpush.msra.mxu0 %v5033
    %5222 = vmatpush.msra.mxu0 %v5032
    %5223 = vmatpush.msra.mxu0 %v5031
    %5224 = vmatpush.msra.mxu0 %v5030
    %5225 = vmatpush.msra.mxu0 %v5029
    %5226 = vmatpush.msra.mxu0 %v5028
    %5227 = vmatmul.f32.gmra.mxu0 %v4863
    %v5228 = vpop.f32.mrf.mxu0
    %v5229 = vadd.f32 %v5062, %v5228
    %5230 = vmatmul.f32.gmra.mxu0 %v4865
    %v5231 = vpop.f32.mrf.mxu0
    %v5232 = vadd.f32 %v5065, %v5231
    %5233 = vmatmul.f32.gmra.mxu0 %v4867
    %v5234 = vpop.f32.mrf.mxu0
    %v5235 = vadd.f32 %v5068, %v5234
    %5236 = vmatmul.f32.gmra.mxu0 %v4869
    %v5237 = vpop.f32.mrf.mxu0
    %v5238 = vadd.f32 %v5071, %v5237
    %5239 = vmatmul.f32.gmra.mxu0 %v4871
    %v5240 = vpop.f32.mrf.mxu0
    %v5241 = vadd.f32 %v5074, %v5240
    %5242 = vmatmul.f32.gmra.mxu0 %v4873
    %v5243 = vpop.f32.mrf.mxu0
    %v5244 = vadd.f32 %v5077, %v5243
    %5245 = vmatmul.f32.gmra.mxu0 %v4875
    %v5246 = vpop.f32.mrf.mxu0
    %v5247 = vadd.f32 %v5080, %v5246
    %5248 = vmatmul.f32.gmra.mxu0 %v4877
    %v5249 = vpop.f32.mrf.mxu0
    %v5250 = vadd.f32 %v5083, %v5249
    %5251 = vmatmul.f32.gmra.mxu0 %v4879
    %v5252 = vpop.f32.mrf.mxu0
    %v5253 = vadd.f32 %v5086, %v5252
    %5254 = vmatmul.f32.gmra.mxu0 %v4881
    %v5255 = vpop.f32.mrf.mxu0
    %v5256 = vadd.f32 %v5089, %v5255
    %5257 = vmatmul.f32.gmra.mxu0 %v4883
    %v5258 = vpop.f32.mrf.mxu0
    %v5259 = vadd.f32 %v5092, %v5258
    %5260 = vmatmul.f32.gmra.mxu0 %v4885
    %v5261 = vpop.f32.mrf.mxu0
    %v5262 = vadd.f32 %v5095, %v5261
    %5263 = vmatmul.f32.gmra.mxu0 %v4887
    %v5264 = vpop.f32.mrf.mxu0
    %v5265 = vadd.f32 %v5098, %v5264
    %5266 = vmatmul.f32.gmra.mxu0 %v4889
    %v5267 = vpop.f32.mrf.mxu0
    %v5268 = vadd.f32 %v5101, %v5267
    %5269 = vmatmul.f32.gmra.mxu0 %v4891
    %v5270 = vpop.f32.mrf.mxu0
    %v5271 = vadd.f32 %v5104, %v5270
    %5272 = vmatmul.f32.gmra.mxu0 %v4893
    %v5273 = vpop.f32.mrf.mxu0
    %v5274 = vadd.f32 %v5107, %v5273
    %5275 = vmatmul.f32.gmra.mxu0 %v4895
    %v5276 = vpop.f32.mrf.mxu0
    %v5277 = vadd.f32 %v5110, %v5276
    %5278 = vmatmul.f32.gmra.mxu0 %v4897
    %v5279 = vpop.f32.mrf.mxu0
    %v5280 = vadd.f32 %v5113, %v5279
    %5281 = vmatmul.f32.gmra.mxu0 %v4899
    %v5282 = vpop.f32.mrf.mxu0
    %v5283 = vadd.f32 %v5116, %v5282
    %5284 = vmatmul.f32.gmra.mxu0 %v4901
    %v5285 = vpop.f32.mrf.mxu0
    %v5286 = vadd.f32 %v5119, %v5285
    %5287 = vmatmul.f32.gmra.mxu0 %v4903
    %v5288 = vpop.f32.mrf.mxu0
    %v5289 = vadd.f32 %v5122, %v5288
    %5290 = vmatmul.f32.gmra.mxu0 %v4905
    %v5291 = vpop.f32.mrf.mxu0
    %v5292 = vadd.f32 %v5125, %v5291
    %5293 = vmatmul.f32.gmra.mxu0 %v4907
    %v5294 = vpop.f32.mrf.mxu0
    %v5295 = vadd.f32 %v5128, %v5294
    %5296 = vmatmul.f32.gmra.mxu0 %v4909
    %v5297 = vpop.f32.mrf.mxu0
    %v5298 = vadd.f32 %v5131, %v5297
    %5299 = vmatmul.f32.gmra.mxu0 %v4911
    %v5300 = vpop.f32.mrf.mxu0
    %v5301 = vadd.f32 %v5134, %v5300
    %5302 = vmatmul.f32.gmra.mxu0 %v4913
    %v5303 = vpop.f32.mrf.mxu0
    %v5304 = vadd.f32 %v5137, %v5303
    %5305 = vmatmul.f32.gmra.mxu0 %v4915
    %v5306 = vpop.f32.mrf.mxu0
    %v5307 = vadd.f32 %v5140, %v5306
    %5308 = vmatmul.f32.gmra.mxu0 %v4917
    %v5309 = vpop.f32.mrf.mxu0
    %v5310 = vadd.f32 %v5143, %v5309
    %5311 = vmatmul.f32.gmra.mxu0 %v4919
    %v5312 = vpop.f32.mrf.mxu0
    %v5313 = vadd.f32 %v5146, %v5312
    %5314 = vmatmul.f32.gmra.mxu0 %v4921
    %v5315 = vpop.f32.mrf.mxu0
    %v5316 = vadd.f32 %v5149, %v5315
    %5317 = vmatmul.f32.gmra.mxu0 %v4923
    %v5318 = vpop.f32.mrf.mxu0
    %v5319 = vadd.f32 %v5152, %v5318
    %5320 = vmatmul.f32.gmra.mxu0 %v4925
    %v5321 = vpop.f32.mrf.mxu0
    %v5322 = vadd.f32 %v5155, %v5321
    %5323 = vmatmul.f32.gmra.mxu0 %v4927
    %v5324 = vpop.f32.mrf.mxu0
    %v5325 = vadd.f32 %v5158, %v5324
    %5326 = vmatmul.f32.gmra.mxu0 %v4929
    %v5327 = vpop.f32.mrf.mxu0
    %v5328 = vadd.f32 %v5161, %v5327
    %5329 = vmatmul.f32.gmra.mxu0 %v4931
    %v5330 = vpop.f32.mrf.mxu0
    %v5331 = vadd.f32 %v5164, %v5330
    %5332 = vmatmul.f32.gmra.mxu0 %v4933
    %v5333 = vpop.f32.mrf.mxu0
    %v5334 = vadd.f32 %v5167, %v5333
    %5335 = vmatmul.f32.gmra.mxu0 %v4935
    %v5336 = vpop.f32.mrf.mxu0
    %v5337 = vadd.f32 %v5170, %v5336
    %5338 = vmatmul.f32.gmra.mxu0 %v4937
    %v5339 = vpop.f32.mrf.mxu0
    %v5340 = vadd.f32 %v5173, %v5339
    %5341 = vmatmul.f32.gmra.mxu0 %v4939
    %v5342 = vpop.f32.mrf.mxu0
    %v5343 = vadd.f32 %v5176, %v5342
    %5344 = vmatmul.f32.gmra.mxu0 %v4941
    %v5345 = vpop.f32.mrf.mxu0
    %v5346 = vadd.f32 %v5179, %v5345
    %5347 = vmatmul.f32.gmra.mxu0 %v4943
    %v5348 = vpop.f32.mrf.mxu0
    %v5349 = vadd.f32 %v5182, %v5348
    %5350 = vmatmul.f32.gmra.mxu0 %v4945
    %v5351 = vpop.f32.mrf.mxu0
    %v5352 = vadd.f32 %v5185, %v5351
    %5353 = vmatmul.f32.gmra.mxu0 %v4947
    %v5354 = vpop.f32.mrf.mxu0
    %v5355 = vadd.f32 %v5188, %v5354
    %5356 = vmatmul.f32.gmra.mxu0 %v4949
    %v5357 = vpop.f32.mrf.mxu0
    %v5358 = vadd.f32 %v5191, %v5357
    %5359 = vmatmul.f32.gmra.mxu0 %v4951
    %v5360 = vpop.f32.mrf.mxu0
    %v5361 = vadd.f32 %v5194, %v5360
    %5362 = vmatmul.f32.gmra.mxu0 %v4953
    %v5363 = vpop.f32.mrf.mxu0
    %v5364 = vadd.f32 %v5197, %v5363
    %5365 = vmatmul.f32.gmra.mxu0 %v4955
    %v5366 = vpop.f32.mrf.mxu0
    %v5367 = vadd.f32 %v5200, %v5366
    %5368 = vmatmul.f32.gmra.mxu0 %v4957
    %v5369 = vpop.f32.mrf.mxu0
    %v5370 = vadd.f32 %v5203, %v5369
    %5371 = vmatmul.f32.gmra.mxu0 %v4959
    %v5372 = vpop.f32.mrf.mxu0
    %v5373 = vadd.f32 %v5206, %v5372
    %5374 = vmatmul.f32.gmra.mxu0 %v4961
    %v5375 = vpop.f32.mrf.mxu0
    %v5376 = vadd.f32 %v5209, %v5375
    %5377 = vdwg.mxu0
    %v5378 = vadd.f32 %v4962, %v5229
    %v5379 = vadd.f32 %v4963, %v5232
    %v5380 = vadd.f32 %v4964, %v5235
    %v5381 = vadd.f32 %v4965, %v5238
    %v5382 = vadd.f32 %v4966, %v5241
    %v5383 = vadd.f32 %v4967, %v5244
    %v5384 = vadd.f32 %v4968, %v5247
    %v5385 = vadd.f32 %v4969, %v5250
    %v5386 = vadd.f32 %v4970, %v5253
    %v5387 = vadd.f32 %v4971, %v5256
    %v5388 = vadd.f32 %v4972, %v5259
    %v5389 = vadd.f32 %v4973, %v5262
    %v5390 = vadd.f32 %v4974, %v5265
    %v5391 = vadd.f32 %v4975, %v5268
    %v5392 = vadd.f32 %v4976, %v5271
    %v5393 = vadd.f32 %v4977, %v5274
    %v5394 = vadd.f32 %v4978, %v5277
    %v5395 = vadd.f32 %v4979, %v5280
    %v5396 = vadd.f32 %v4980, %v5283
    %v5397 = vadd.f32 %v4981, %v5286
    %v5398 = vadd.f32 %v4982, %v5289
    %v5399 = vadd.f32 %v4983, %v5292
    %v5400 = vadd.f32 %v4984, %v5295
    %v5401 = vadd.f32 %v4985, %v5298
    %v5402 = vadd.f32 %v4986, %v5301
    %v5403 = vadd.f32 %v4987, %v5304
    %v5404 = vadd.f32 %v4988, %v5307
    %v5405 = vadd.f32 %v4989, %v5310
    %v5406 = vadd.f32 %v4990, %v5313
    %v5407 = vadd.f32 %v4991, %v5316
    %v5408 = vadd.f32 %v4992, %v5319
    %v5409 = vadd.f32 %v4993, %v5322
    %v5410 = vadd.f32 %v4994, %v5325
    %v5411 = vadd.f32 %v4995, %v5328
    %v5412 = vadd.f32 %v4996, %v5331
    %v5413 = vadd.f32 %v4997, %v5334
    %v5414 = vadd.f32 %v4998, %v5337
    %v5415 = vadd.f32 %v4999, %v5340
    %v5416 = vadd.f32 %v5000, %v5343
    %v5417 = vadd.f32 %v5001, %v5346
    %v5418 = vadd.f32 %v5002, %v5349
    %v5419 = vadd.f32 %v5003, %v5352
    %v5420 = vadd.f32 %v5004, %v5355
    %v5421 = vadd.f32 %v5005, %v5358
    %v5422 = vadd.f32 %v5006, %v5361
    %v5423 = vadd.f32 %v5007, %v5364
    %v5424 = vadd.f32 %v5008, %v5367
    %v5425 = vadd.f32 %v5009, %v5370
    %v5426 = vadd.f32 %v5010, %v5373
    %v5427 = vadd.f32 %v5011, %v5376
    %5428 = vst [vmem:[#allocation2] sm:$0xff] %v5378
    %5429 = vst [vmem:[#allocation2 + $0x8] sm:$0xff] %v5379
    %5430 = vst [vmem:[#allocation2 + $0x10] sm:$0xff] %v5380
    %5431 = vst [vmem:[#allocation2 + $0x18] sm:$0xff] %v5381
    %5432 = vst [vmem:[#allocation2 + $0x20] sm:$0xff] %v5382
    %5433 = vst [vmem:[#allocation2 + $0x28] sm:$0xff] %v5383
    %5434 = vst [vmem:[#allocation2 + $0x30] sm:$0xff] %v5384
    %5435 = vst [vmem:[#allocation2 + $0x38] sm:$0xff] %v5385
    %5436 = vst [vmem:[#allocation2 + $0x40] sm:$0xff] %v5386
    %5437 = vst [vmem:[#allocation2 + $0x48] sm:$0xff] %v5387
    %5438 = vst [vmem:[#allocation2 + $0x50] sm:$0xff] %v5388
    %5439 = vst [vmem:[#allocation2 + $0x58] sm:$0xff] %v5389
    %5440 = vst [vmem:[#allocation2 + $0x60] sm:$0xff] %v5390
    %5441 = vst [vmem:[#allocation2 + $0x68] sm:$0xff] %v5391
    %5442 = vst [vmem:[#allocation2 + $0x70] sm:$0xff] %v5392
    %5443 = vst [vmem:[#allocation2 + $0x78] sm:$0xff] %v5393
    %5444 = vst [vmem:[#allocation2 + $0x80] sm:$0xff] %v5394
    %5445 = vst [vmem:[#allocation2 + $0x88] sm:$0xff] %v5395
    %5446 = vst [vmem:[#allocation2 + $0x90] sm:$0xff] %v5396
    %5447 = vst [vmem:[#allocation2 + $0x98] sm:$0xff] %v5397
    %5448 = vst [vmem:[#allocation2 + $0xa0] sm:$0xff] %v5398
    %5449 = vst [vmem:[#allocation2 + $0xa8] sm:$0xff] %v5399
    %5450 = vst [vmem:[#allocation2 + $0xb0] sm:$0xff] %v5400
    %5451 = vst [vmem:[#allocation2 + $0xb8] sm:$0xff] %v5401
    %5452 = vst [vmem:[#allocation2 + $0xc0] sm:$0xff] %v5402
    %5453 = vst [vmem:[#allocation2 + $0xc8] sm:$0xff] %v5403
    %5454 = vst [vmem:[#allocation2 + $0xd0] sm:$0xff] %v5404
    %5455 = vst [vmem:[#allocation2 + $0xd8] sm:$0xff] %v5405
    %5456 = vst [vmem:[#allocation2 + $0xe0] sm:$0xff] %v5406
    %5457 = vst [vmem:[#allocation2 + $0xe8] sm:$0xff] %v5407
    %5458 = vst [vmem:[#allocation2 + $0xf0] sm:$0xff] %v5408
    %5459 = vst [vmem:[#allocation2 + $0xf8] sm:$0xff] %v5409
    %5460 = vst [vmem:[#allocation2 + $0x100] sm:$0xff] %v5410
    %5461 = vst [vmem:[#allocation2 + $0x108] sm:$0xff] %v5411
    %5462 = vst [vmem:[#allocation2 + $0x110] sm:$0xff] %v5412
    %5463 = vst [vmem:[#allocation2 + $0x118] sm:$0xff] %v5413
    %5464 = vst [vmem:[#allocation2 + $0x120] sm:$0xff] %v5414
    %5465 = vst [vmem:[#allocation2 + $0x128] sm:$0xff] %v5415
    %5466 = vst [vmem:[#allocation2 + $0x130] sm:$0xff] %v5416
    %5467 = vst [vmem:[#allocation2 + $0x138] sm:$0xff] %v5417
    %5468 = vst [vmem:[#allocation2 + $0x140] sm:$0xff] %v5418
    %5469 = vst [vmem:[#allocation2 + $0x148] sm:$0xff] %v5419
    %5470 = vst [vmem:[#allocation2 + $0x150] sm:$0xff] %v5420
    %5471 = vst [vmem:[#allocation2 + $0x158] sm:$0xff] %v5421
    %5472 = vst [vmem:[#allocation2 + $0x160] sm:$0xff] %v5422
    %5473 = vst [vmem:[#allocation2 + $0x168] sm:$0xff] %v5423
    %5474 = vst [vmem:[#allocation2 + $0x170] sm:$0xff] %v5424
    %5475 = vst [vmem:[#allocation2 + $0x178] sm:$0xff] %v5425
    %5476 = vst [vmem:[#allocation2 + $0x180] sm:$0xff] %v5426
    %5477 = vst [vmem:[#allocation2 + $0x188] sm:$0xff] %v5427
    // Predicated region
    $region42: #{tpu_custom_call.1} parent=1 // pred_check
      %p5478 = pneg %p82
    $region43: #{tpu_custom_call.1} parent=1 // pred_check_branch
      %5480 = sbr.rel (%p5478) target = $region45
    $region44: #{tpu_custom_call.1} parent=1 // pred_region
      %v5481 = vld [vmem:[#allocation2] sm:$0xff]
      %v5482 = vld [vmem:[#allocation2 + $0x8] sm:$0xff]
      %v5483 = vld [vmem:[#allocation2 + $0x10] sm:$0xff]
      %v5484 = vld [vmem:[#allocation2 + $0x18] sm:$0xff]
      %v5485 = vld [vmem:[#allocation2 + $0x20] sm:$0xff]
      %v5486 = vld [vmem:[#allocation2 + $0x28] sm:$0xff]
      %v5487 = vld [vmem:[#allocation2 + $0x30] sm:$0xff]
      %v5488 = vld [vmem:[#allocation2 + $0x38] sm:$0xff]
      %v5489 = vld [vmem:[#allocation2 + $0x40] sm:$0xff]
      %v5490 = vld [vmem:[#allocation2 + $0x48] sm:$0xff]
      %v5491 = vld [vmem:[#allocation2 + $0x50] sm:$0xff]
      %v5492 = vld [vmem:[#allocation2 + $0x58] sm:$0xff]
      %v5493 = vld [vmem:[#allocation2 + $0x60] sm:$0xff]
      %v5494 = vld [vmem:[#allocation2 + $0x68] sm:$0xff]
      %v5495 = vld [vmem:[#allocation2 + $0x70] sm:$0xff]
      %v5496 = vld [vmem:[#allocation2 + $0x78] sm:$0xff]
      %v5497 = vld [vmem:[#allocation2 + $0x80] sm:$0xff]
      %v5498 = vld [vmem:[#allocation2 + $0x88] sm:$0xff]
      %v5499 = vld [vmem:[#allocation2 + $0x90] sm:$0xff]
      %v5500 = vld [vmem:[#allocation2 + $0x98] sm:$0xff]
      %v5501 = vld [vmem:[#allocation2 + $0xa0] sm:$0xff]
      %v5502 = vld [vmem:[#allocation2 + $0xa8] sm:$0xff]
      %v5503 = vld [vmem:[#allocation2 + $0xb0] sm:$0xff]
      %v5504 = vld [vmem:[#allocation2 + $0xb8] sm:$0xff]
      %v5505 = vld [vmem:[#allocation2 + $0xc0] sm:$0xff]
      %v5506 = vld [vmem:[#allocation2 + $0xc8] sm:$0xff]
      %v5507 = vld [vmem:[#allocation2 + $0xd0] sm:$0xff]
      %v5508 = vld [vmem:[#allocation2 + $0xd8] sm:$0xff]
      %v5509 = vld [vmem:[#allocation2 + $0xe0] sm:$0xff]
      %v5510 = vld [vmem:[#allocation2 + $0xe8] sm:$0xff]
      %v5511 = vld [vmem:[#allocation2 + $0xf0] sm:$0xff]
      %v5512 = vld [vmem:[#allocation2 + $0xf8] sm:$0xff]
      %v5513 = vld [vmem:[#allocation2 + $0x100] sm:$0xff]
      %v5514 = vld [vmem:[#allocation2 + $0x108] sm:$0xff]
      %v5515 = vld [vmem:[#allocation2 + $0x110] sm:$0xff]
      %v5516 = vld [vmem:[#allocation2 + $0x118] sm:$0xff]
      %v5517 = vld [vmem:[#allocation2 + $0x120] sm:$0xff]
      %v5518 = vld [vmem:[#allocation2 + $0x128] sm:$0xff]
      %v5519 = vld [vmem:[#allocation2 + $0x130] sm:$0xff]
      %v5520 = vld [vmem:[#allocation2 + $0x138] sm:$0xff]
      %v5521 = vld [vmem:[#allocation2 + $0x140] sm:$0xff]
      %v5522 = vld [vmem:[#allocation2 + $0x148] sm:$0xff]
      %v5523 = vld [vmem:[#allocation2 + $0x150] sm:$0xff]
      %v5524 = vld [vmem:[#allocation2 + $0x158] sm:$0xff]
      %v5525 = vld [vmem:[#allocation2 + $0x160] sm:$0xff]
      %v5526 = vld [vmem:[#allocation2 + $0x168] sm:$0xff]
      %v5527 = vld [vmem:[#allocation2 + $0x170] sm:$0xff]
      %v5528 = vld [vmem:[#allocation2 + $0x178] sm:$0xff]
      %v5529 = vld [vmem:[#allocation2 + $0x180] sm:$0xff]
      %v5530 = vld [vmem:[#allocation2 + $0x188] sm:$0xff]
      %5531 = vst [vmem:[#allocation11] sm:$0xff] %v5481
      %5532 = vst [vmem:[#allocation11 + $0x8] sm:$0xff] %v5482
      %5533 = vst [vmem:[#allocation11 + $0x10] sm:$0xff] %v5483
      %5534 = vst [vmem:[#allocation11 + $0x18] sm:$0xff] %v5484
      %5535 = vst [vmem:[#allocation11 + $0x20] sm:$0xff] %v5485
      %5536 = vst [vmem:[#allocation11 + $0x28] sm:$0xff] %v5486
      %5537 = vst [vmem:[#allocation11 + $0x30] sm:$0xff] %v5487
      %5538 = vst [vmem:[#allocation11 + $0x38] sm:$0xff] %v5488
      %5539 = vst [vmem:[#allocation11 + $0x40] sm:$0xff] %v5489
      %5540 = vst [vmem:[#allocation11 + $0x48] sm:$0xff] %v5490
      %5541 = vst [vmem:[#allocation11 + $0x50] sm:$0xff] %v5491
      %5542 = vst [vmem:[#allocation11 + $0x58] sm:$0xff] %v5492
      %5543 = vst [vmem:[#allocation11 + $0x60] sm:$0xff] %v5493
      %5544 = vst [vmem:[#allocation11 + $0x68] sm:$0xff] %v5494
      %5545 = vst [vmem:[#allocation11 + $0x70] sm:$0xff] %v5495
      %5546 = vst [vmem:[#allocation11 + $0x78] sm:$0xff] %v5496
      %5547 = vst [vmem:[#allocation11 + $0x80] sm:$0xff] %v5497
      %5548 = vst [vmem:[#allocation11 + $0x88] sm:$0xff] %v5498
      %5549 = vst [vmem:[#allocation11 + $0x90] sm:$0xff] %v5499
      %5550 = vst [vmem:[#allocation11 + $0x98] sm:$0xff] %v5500
      %5551 = vst [vmem:[#allocation11 + $0xa0] sm:$0xff] %v5501
      %5552 = vst [vmem:[#allocation11 + $0xa8] sm:$0xff] %v5502
      %5553 = vst [vmem:[#allocation11 + $0xb0] sm:$0xff] %v5503
      %5554 = vst [vmem:[#allocation11 + $0xb8] sm:$0xff] %v5504
      %5555 = vst [vmem:[#allocation11 + $0xc0] sm:$0xff] %v5505
      %5556 = vst [vmem:[#allocation11 + $0xc8] sm:$0xff] %v5506
      %5557 = vst [vmem:[#allocation11 + $0xd0] sm:$0xff] %v5507
      %5558 = vst [vmem:[#allocation11 + $0xd8] sm:$0xff] %v5508
      %5559 = vst [vmem:[#allocation11 + $0xe0] sm:$0xff] %v5509
      %5560 = vst [vmem:[#allocation11 + $0xe8] sm:$0xff] %v5510
      %5561 = vst [vmem:[#allocation11 + $0xf0] sm:$0xff] %v5511
      %5562 = vst [vmem:[#allocation11 + $0xf8] sm:$0xff] %v5512
      %5563 = vst [vmem:[#allocation11 + $0x100] sm:$0xff] %v5513
      %5564 = vst [vmem:[#allocation11 + $0x108] sm:$0xff] %v5514
      %5565 = vst [vmem:[#allocation11 + $0x110] sm:$0xff] %v5515
      %5566 = vst [vmem:[#allocation11 + $0x118] sm:$0xff] %v5516
      %5567 = vst [vmem:[#allocation11 + $0x120] sm:$0xff] %v5517
      %5568 = vst [vmem:[#allocation11 + $0x128] sm:$0xff] %v5518
      %5569 = vst [vmem:[#allocation11 + $0x130] sm:$0xff] %v5519
      %5570 = vst [vmem:[#allocation11 + $0x138] sm:$0xff] %v5520
      %5571 = vst [vmem:[#allocation11 + $0x140] sm:$0xff] %v5521
      %5572 = vst [vmem:[#allocation11 + $0x148] sm:$0xff] %v5522
      %5573 = vst [vmem:[#allocation11 + $0x150] sm:$0xff] %v5523
      %5574 = vst [vmem:[#allocation11 + $0x158] sm:$0xff] %v5524
      %5575 = vst [vmem:[#allocation11 + $0x160] sm:$0xff] %v5525
      %5576 = vst [vmem:[#allocation11 + $0x168] sm:$0xff] %v5526
      %5577 = vst [vmem:[#allocation11 + $0x170] sm:$0xff] %v5527
      %5578 = vst [vmem:[#allocation11 + $0x178] sm:$0xff] %v5528
      %5579 = vst [vmem:[#allocation11 + $0x180] sm:$0xff] %v5529
      %5580 = vst [vmem:[#allocation11 + $0x188] sm:$0xff] %v5530
    $region45: #{tpu_custom_call.1} parent=1 // pred_fallthru
      _
    // Predicated region
    $region46: #{tpu_custom_call.1} parent=1 // pred_check
      _
    $region47: #{tpu_custom_call.1} parent=1 // pred_check_branch
      %5582 = sbr.rel (0) target = $region49
    $region48: #{tpu_custom_call.1} parent=1 // pred_region
      %5584 = vsyncadd [#allocation5], 0
      %s5585 = sshll.u32 [#allocation11], 4
      %s5586 = int_to_ptr.vmem [resolvable:$true] %s5585
      %s5587 = sshll.u32 %s5, 4
      %s5588 = int_to_ptr.hbm [resolvable:$true] %s5587
      %5593 = dma.vmem_to_hbm [thread:$0]  %s5586, 6400, %s5588, [#allocation5], 128, 128, 8
    $region49: #{tpu_custom_call.1} parent=1 // pred_fallthru
      _
    // Predicated region
    $region50: #{tpu_custom_call.1} parent=1 // pred_check
      _
    $region51: #{tpu_custom_call.1} parent=1 // pred_check_branch
      %5595 = sbr.rel (0) target = $region53
    $region52: #{tpu_custom_call.1} parent=1 // pred_region
      %5597 = dma.done [#allocation5], 6400
    $region53: #{tpu_custom_call.1} parent=1 // pred_fallthru
      _
    %5598 = vsyncpa [#allocation4], 1
    %5599 = vsyncpa [#allocation7], 1
    %5600 = vsyncpa [#allocation10], 1
    %5601 = vsyncpa [#allocation5], 1

</llo_original>
